<compile_context>
chip_gen: v5e
topology: v5e:2x2
jax: 0.10.0
libtpu: 0.0.40
codegen_flags: <defaults>
</compile_context>

<pallas_src>
import functools
import math

import jax
import jax.numpy as jnp
from jax import lax
from jax.experimental import pallas as pl
from jax.experimental.pallas import tpu as pltpu


def _mpm_head_kernel(x_ref, lab_ref, w1_ref, b1_ref, gamma_ref, beta_ref,
                     w2_ref, b2_ref, pred_ref, loss_ref,
                     *, ln_eps, sl1_beta, inv_p, mxu_dtype):
    # ---- dense: (tile_n, H) @ (H, H) on the MXU, f32 accumulation ----
    x = x_ref[...].astype(mxu_dtype)
    h = jnp.dot(x, w1_ref[...], preferred_element_type=jnp.float32)
    h = h + b1_ref[...]

    # ---- exact (erf-based) GELU, matches torch.nn.functional.gelu ----
    h = 0.5 * h * (1.0 + lax.erf(h * (1.0 / math.sqrt(2.0))))

    # ---- LayerNorm over hidden dim (biased variance, like torch LayerNorm) ----
    mean = jnp.mean(h, axis=-1, keepdims=True)
    var = jnp.mean((h - mean) * (h - mean), axis=-1, keepdims=True)
    h_norm = (h - mean) * lax.rsqrt(var + ln_eps)
    h_norm = h_norm * gamma_ref[...] + beta_ref[...]

    # ---- decoder: (tile_n, H) @ (H, P_pad); padded columns are exactly 0 ----
    pred = jnp.dot(h_norm.astype(mxu_dtype), w2_ref[...],
                   preferred_element_type=jnp.float32) + b2_ref[...]
    pred_ref[...] = pred.astype(pred_ref.dtype)

    # ---- smooth L1 (beta=sl1_beta), mean over the real P lanes ----
    # Padded label & pred lanes are both zero => their smooth-L1 term is zero,
    # so sum over P_pad lanes == sum over the real P lanes; scale by 1/P.
    d = pred - lab_ref[...].astype(jnp.float32)
    ad = jnp.abs(d)
    elem = jnp.where(ad < sl1_beta, 0.5 * d * d / sl1_beta, ad - 0.5 * sl1_beta)
    smth = jnp.sum(elem, axis=-1, keepdims=True) * inv_p        # (tile_n, 1)
    loss_ref[...] = smth.astype(loss_ref.dtype)


def mpm_head_forward(sequence_output, labels, mpm_mask, att_mask, params,
                     *, ln_eps=1e-12, sl1_beta=0.005, tile_n=256,
                     mxu_dtype=jnp.bfloat16):
    B, S, H = sequence_output.shape
    P = labels.shape[-1]
    N = B * S

    # Pad token axis to a tile multiple and the box axis to a 128-lane multiple.
    n_tiles = pl.cdiv(N, tile_n)
    n_pad = n_tiles * tile_n
    p_pad = max(128, pl.cdiv(P, 128) * 128)

    # Activations / labels stay in their native dtype (no host f32 upcast).
    x = sequence_output.reshape(N, H)
    if n_pad > N:
        x = jnp.pad(x, ((0, n_pad - N), (0, 0)))
    lab = labels.reshape(N, P)
    lab = jnp.pad(lab, ((0, n_pad - N), (0, p_pad - P)))

    # Weights: MXU operands in mxu_dtype (bf16 by default), biases/LN in f32.
    w1 = params["dense_w"].astype(mxu_dtype)                       # (H, H)
    b1 = params["dense_b"].reshape(1, H).astype(jnp.float32)
    gamma = params["ln_gamma"].reshape(1, H).astype(jnp.float32)
    beta = params["ln_beta"].reshape(1, H).astype(jnp.float32)
    w2 = jnp.pad(params["dec_w"], ((0, 0), (0, p_pad - P))).astype(mxu_dtype)
    b2 = jnp.pad(params["dec_b"].reshape(1, P).astype(jnp.float32),
                 ((0, 0), (0, p_pad - P)))

    grid = (n_tiles,)
    row = lambda i: (i, 0)     # tiled along token axis
    full = lambda i: (0, 0)    # constant (whole-array) blocks (weights, biases)

    kernel = functools.partial(_mpm_head_kernel, ln_eps=ln_eps,
                               sl1_beta=sl1_beta, inv_p=1.0 / P,
                               mxu_dtype=mxu_dtype)

    out_shapes = (
        jax.ShapeDtypeStruct((n_pad, p_pad), sequence_output.dtype),  # pred (padded)
        jax.ShapeDtypeStruct((n_pad, 1), jnp.float32),                # per-token loss
    )

    in_specs = [
        pl.BlockSpec((tile_n, H), row),      # x
        pl.BlockSpec((tile_n, p_pad), row),  # labels (lane-padded)
        pl.BlockSpec((H, H), full),          # dense W
        pl.BlockSpec((1, H), full),          # dense b
        pl.BlockSpec((1, H), full),          # LN gamma
        pl.BlockSpec((1, H), full),          # LN beta
        pl.BlockSpec((H, p_pad), full),      # decoder W (lane-padded)
        pl.BlockSpec((1, p_pad), full),      # decoder b (lane-padded)
    ]
    out_specs = [
        pl.BlockSpec((tile_n, p_pad), row),
        pl.BlockSpec((tile_n, 1), row),
    ]

    # VMEM budget: double-buffered per-step tiles + (double-buffered) resident
    # weights + f32 intermediate headroom; clamp to [32 MiB, 64 MiB] so it is
    # valid on v7x (64 MiB physical) as well as v5e/v6e (128 MiB).
    w_bytes = jnp.dtype(mxu_dtype).itemsize
    est = 2 * (tile_n * H * x.dtype.itemsize
               + tile_n * p_pad * lab.dtype.itemsize
               + tile_n * p_pad * 4 + tile_n * 4)
    est += 2 * (H * H + H * p_pad) * w_bytes
    est += 2 * (3 * H + p_pad) * 4
    est += 6 * tile_n * max(H, p_pad) * 4
    vmem_limit = min(max(int(est) + (8 << 20), 32 << 20), 64 << 20)

    pred_pad, smth_pad = pl.pallas_call(
        kernel,
        out_shape=out_shapes,
        grid_spec=pltpu.PrefetchScalarGridSpec(
            num_scalar_prefetch=0,
            grid=grid,
            in_specs=in_specs,
            out_specs=out_specs,
        ),
        compiler_params=pltpu.CompilerParams(
            # No cross-step carried state -> grid axis is parallel
            # (megacore-shardable on v7x).
            dimension_semantics=("parallel",),
            vmem_limit_bytes=vmem_limit,
        ),
    )(x, lab, w1, b1, gamma, beta, w2, b2)

    # ---- wrapper-side glue: slice off padding, masked reductions ----
    pred = pred_pad[:N, :P].reshape(B, S, P)
    smth = smth_pad[:N, 0].reshape(B, S)

    mpm = mpm_mask.astype(jnp.float32)
    att = att_mask.astype(jnp.float32)
    rest = (1.0 - mpm) * att

    masked_loss = (smth * mpm).sum() / jnp.maximum(mpm.sum(), 1.0)
    nomasked_loss = (smth * rest).sum() / jnp.maximum(rest.sum(), 1.0)
    mpm_loss = (masked_loss + nomasked_loss) / 2.0

    return {
        "loss": mpm_loss,
        "masked_loss": masked_loss,
        "nomasked_loss": nomasked_loss,
        "pred": pred,
    }


def init_params(key, hidden_size, mpm_box_num):
    k1, k2, k3, k4 = jax.random.split(key, 4)
    bound1 = 1.0 / math.sqrt(hidden_size)
    return {
        # stored as (in, out) so the kernel computes x @ W directly
        "dense_w": jax.random.uniform(k1, (hidden_size, hidden_size),
                                      jnp.float32, -bound1, bound1),
        "dense_b": jax.random.uniform(k2, (hidden_size,),
                                      jnp.float32, -bound1, bound1),
        "ln_gamma": jnp.ones((hidden_size,), jnp.float32),
        "ln_beta": jnp.zeros((hidden_size,), jnp.float32),
        "dec_w": jax.random.uniform(k3, (hidden_size, mpm_box_num),
                                    jnp.float32, -bound1, bound1),
        "dec_b": jax.random.uniform(k4, (mpm_box_num,),
                                    jnp.float32, -bound1, bound1),
    }


if __name__ == "__main__":
    B, S, H, P = 2, 8, 32, 4   # batch, seq, hidden_size, mpm_box_num

    key = jax.random.PRNGKey(0)
    k_seq, k_lab, k_mpm, k_att, k_par = jax.random.split(key, 5)

    sequence_output = jax.random.normal(k_seq, (B, S, H), jnp.float32)
    labels = jax.random.uniform(k_lab, (B, S, P), jnp.float32)
    mpm_mask = (jax.random.uniform(k_mpm, (B, S)) < 0.3).astype(jnp.float32)
    att_mask = (jax.random.uniform(k_att, (B, S)) < 0.9).astype(jnp.float32)

    params = init_params(k_par, H, P)

    # Plain-JAX reference of the same math (exact f32 path).
    def ref(seq, lab, mpm, att, p):
        h = jnp.dot(seq, p["dense_w"], precision=lax.Precision.HIGHEST,
                    preferred_element_type=jnp.float32) + p["dense_b"]
        h = 0.5 * h * (1.0 + lax.erf(h / jnp.sqrt(2.0)))
        mean = h.mean(-1, keepdims=True)
        var = ((h - mean) ** 2).mean(-1, keepdims=True)
        h = (h - mean) * lax.rsqrt(var + 1e-12) * p["ln_gamma"] + p["ln_beta"]
        pred = jnp.dot(h, p["dec_w"], precision=lax.Precision.HIGHEST,
                       preferred_element_type=jnp.float32) + p["dec_b"]
        d = pred - lab
        ad = jnp.abs(d)
        beta = 0.005
        elem = jnp.where(ad < beta, 0.5 * d * d / beta, ad - 0.5 * beta)
        smth = elem.mean(-1)
        rest = (1.0 - mpm) * att
        ml = (smth * mpm).sum() / jnp.maximum(mpm.sum(), 1.0)
        nl = (smth * rest).sum() / jnp.maximum(rest.sum(), 1.0)
        return {"loss": (ml + nl) / 2, "masked_loss": ml,
                "nomasked_loss": nl, "pred": pred}

    r = ref(sequence_output, labels, mpm_mask, att_mask, params)

    # 1) f32 MXU path: tight check against the exact f32 reference.
    out32 = mpm_head_forward(sequence_output, labels, mpm_mask, att_mask,
                             params, mxu_dtype=jnp.float32)
    jax.block_until_ready(out32)
    assert jnp.allclose(out32["pred"], r["pred"], atol=1e-4, rtol=1e-4)
    assert jnp.allclose(out32["loss"], r["loss"], atol=1e-5, rtol=1e-4)
    assert jnp.allclose(out32["masked_loss"], r["masked_loss"], atol=1e-5, rtol=1e-4)
    assert jnp.allclose(out32["nomasked_loss"], r["nomasked_loss"], atol=1e-5, rtol=1e-4)

    # 2) default bf16 MXU path (fast lane on v5e/v6e/v7x): loose check,
    #    f32 accumulation keeps the loss statistics stable.
    out16 = mpm_head_forward(sequence_output, labels, mpm_mask, att_mask, params)
    jax.block_until_ready(out16)
    assert jnp.allclose(out16["pred"], r["pred"], atol=3e-2, rtol=3e-2)
    assert jnp.allclose(out16["loss"], r["loss"], atol=2e-2, rtol=2e-2)
    assert jnp.allclose(out16["masked_loss"], r["masked_loss"], atol=2e-2, rtol=2e-2)
    assert jnp.allclose(out16["nomasked_loss"], r["nomasked_loss"], atol=2e-2, rtol=2e-2)

    print("KERNEL_OK")
</pallas_src>

<mosaic_0001>
module attributes {stable_mosaic.version = 11 : i64} {
  func.func @_mpm_head_kernel(%arg0: i32, %arg1: memref<256x32xf32, #tpu.memory_space<vmem>>, %arg2: memref<256x128xf32, #tpu.memory_space<vmem>>, %arg3: memref<32x32xf32, #tpu.memory_space<vmem>>, %arg4: memref<1x32xf32, #tpu.memory_space<vmem>>, %arg5: memref<1x32xf32, #tpu.memory_space<vmem>>, %arg6: memref<1x32xf32, #tpu.memory_space<vmem>>, %arg7: memref<32x128xf32, #tpu.memory_space<vmem>>, %arg8: memref<1x128xf32, #tpu.memory_space<vmem>>, %arg9: memref<256x128xf32, #tpu.memory_space<vmem>>, %arg10: memref<256x1xf32, #tpu.memory_space<vmem>>) attributes {dimension_semantics = [#tpu.dimension_semantics<parallel>], iteration_bounds = array<i64: 1>, scalar_prefetch = 0 : i64, scratch_operands = 0 : i64, tpu.core_type = #tpu.core_type<tc>, window_params = [{transform_indices = @transform_0, window_bounds = array<i64: 256, 32>}, {transform_indices = @transform_1, window_bounds = array<i64: 256, 128>}, {pipeline_mode = #tpu.pipeline_mode<synchronous>, transform_indices = @transform_2, window_bounds = array<i64: 32, 32>}, {pipeline_mode = #tpu.pipeline_mode<synchronous>, transform_indices = @transform_3, window_bounds = array<i64: 1, 32>}, {pipeline_mode = #tpu.pipeline_mode<synchronous>, transform_indices = @transform_4, window_bounds = array<i64: 1, 32>}, {pipeline_mode = #tpu.pipeline_mode<synchronous>, transform_indices = @transform_5, window_bounds = array<i64: 1, 32>}, {pipeline_mode = #tpu.pipeline_mode<synchronous>, transform_indices = @transform_6, window_bounds = array<i64: 32, 128>}, {pipeline_mode = #tpu.pipeline_mode<synchronous>, transform_indices = @transform_7, window_bounds = array<i64: 1, 128>}, {transform_indices = @transform_8, window_bounds = array<i64: 256, 128>}, {transform_indices = @transform_9, window_bounds = array<i64: 256, 1>}]} {
    %c0 = arith.constant 0 : index
    %c0_0 = arith.constant 0 : index
    %0 = vector.load %arg1[%c0, %c0_0] : memref<256x32xf32, #tpu.memory_space<vmem>>, vector<256x32xf32>
    %c0_1 = arith.constant 0 : index
    %c0_2 = arith.constant 0 : index
    %1 = vector.load %arg3[%c0_1, %c0_2] : memref<32x32xf32, #tpu.memory_space<vmem>>, vector<32x32xf32>
    %cst = arith.constant dense<0.000000e+00> : vector<256x32xf32>
    %2 = tpu.matmul %0, %1, %cst {dimension_numbers = #tpu.dot_dimension_numbers<[1], [0], [0], [1], [0, 0, 1, 1], [], []>} : vector<256x32xf32>, vector<32x32xf32>, vector<256x32xf32> -> vector<256x32xf32>
    %c0_3 = arith.constant 0 : index
    %c0_4 = arith.constant 0 : index
    %3 = vector.load %arg4[%c0_3, %c0_4] : memref<1x32xf32, #tpu.memory_space<vmem>>, vector<1x32xf32>
    %4 = vector.broadcast %3 : vector<1x32xf32> to vector<256x32xf32>
    %5 = arith.addf %2, %4 : vector<256x32xf32>
    %cst_5 = arith.constant 5.000000e-01 : f32
    %6 = vector.broadcast %cst_5 : f32 to vector<256x32xf32>
    %7 = arith.mulf %6, %5 : vector<256x32xf32>
    %cst_6 = arith.constant 0.707106769 : f32
    %8 = vector.broadcast %cst_6 : f32 to vector<256x32xf32>
    %9 = arith.mulf %5, %8 : vector<256x32xf32>
    %10 = math.erf %9 : vector<256x32xf32>
    %cst_7 = arith.constant 1.000000e+00 : f32
    %11 = vector.broadcast %cst_7 : f32 to vector<256x32xf32>
    %12 = arith.addf %11, %10 : vector<256x32xf32>
    %13 = arith.mulf %7, %12 : vector<256x32xf32>
    %cst_8 = arith.constant dense<0.000000e+00> : vector<256xf32>
    %14 = vector.multi_reduction <add>, %13, %cst_8 [1] : vector<256x32xf32> to vector<256xf32>
    %15 = vector.shape_cast %14 : vector<256xf32> to vector<256x1xf32>
    %cst_9 = arith.constant 3.200000e+01 : f32
    %16 = vector.broadcast %cst_9 : f32 to vector<256x1xf32>
    %17 = arith.divf %15, %16 : vector<256x1xf32>
    %18 = vector.broadcast %17 : vector<256x1xf32> to vector<256x32xf32>
    %19 = arith.subf %13, %18 : vector<256x32xf32>
    %20 = vector.broadcast %17 : vector<256x1xf32> to vector<256x32xf32>
    %21 = arith.subf %13, %20 : vector<256x32xf32>
    %22 = arith.mulf %19, %21 : vector<256x32xf32>
    %cst_10 = arith.constant dense<0.000000e+00> : vector<256xf32>
    %23 = vector.multi_reduction <add>, %22, %cst_10 [1] : vector<256x32xf32> to vector<256xf32>
    %24 = vector.shape_cast %23 : vector<256xf32> to vector<256x1xf32>
    %cst_11 = arith.constant 3.200000e+01 : f32
    %25 = vector.broadcast %cst_11 : f32 to vector<256x1xf32>
    %26 = arith.divf %24, %25 : vector<256x1xf32>
    %27 = vector.broadcast %17 : vector<256x1xf32> to vector<256x32xf32>
    %28 = arith.subf %13, %27 : vector<256x32xf32>
    %cst_12 = arith.constant 9.99999996E-13 : f32
    %29 = vector.broadcast %cst_12 : f32 to vector<256x1xf32>
    %30 = arith.addf %26, %29 : vector<256x1xf32>
    %31 = math.rsqrt %30 : vector<256x1xf32>
    %32 = vector.broadcast %31 : vector<256x1xf32> to vector<256x32xf32>
    %33 = arith.mulf %28, %32 : vector<256x32xf32>
    %c0_13 = arith.constant 0 : index
    %c0_14 = arith.constant 0 : index
    %34 = vector.load %arg5[%c0_13, %c0_14] : memref<1x32xf32, #tpu.memory_space<vmem>>, vector<1x32xf32>
    %35 = vector.broadcast %34 : vector<1x32xf32> to vector<256x32xf32>
    %36 = arith.mulf %33, %35 : vector<256x32xf32>
    %c0_15 = arith.constant 0 : index
    %c0_16 = arith.constant 0 : index
    %37 = vector.load %arg6[%c0_15, %c0_16] : memref<1x32xf32, #tpu.memory_space<vmem>>, vector<1x32xf32>
    %38 = vector.broadcast %37 : vector<1x32xf32> to vector<256x32xf32>
    %39 = arith.addf %36, %38 : vector<256x32xf32>
    %c0_17 = arith.constant 0 : index
    %c0_18 = arith.constant 0 : index
    %40 = vector.load %arg7[%c0_17, %c0_18] : memref<32x128xf32, #tpu.memory_space<vmem>>, vector<32x128xf32>
    %cst_19 = arith.constant dense<0.000000e+00> : vector<256x128xf32>
    %41 = tpu.matmul %39, %40, %cst_19 {dimension_numbers = #tpu.dot_dimension_numbers<[1], [0], [0], [1], [0, 0, 1, 1], [], []>} : vector<256x32xf32>, vector<32x128xf32>, vector<256x128xf32> -> vector<256x128xf32>
    %c0_20 = arith.constant 0 : index
    %c0_21 = arith.constant 0 : index
    %42 = vector.load %arg8[%c0_20, %c0_21] : memref<1x128xf32, #tpu.memory_space<vmem>>, vector<1x128xf32>
    %43 = vector.broadcast %42 : vector<1x128xf32> to vector<256x128xf32>
    %44 = arith.addf %41, %43 : vector<256x128xf32>
    %c0_22 = arith.constant 0 : index
    %c0_23 = arith.constant 0 : index
    %45 = vector.load %arg9[%c0_22, %c0_23] : memref<256x128xf32, #tpu.memory_space<vmem>>, vector<256x128xf32>
    tpu.vector_store %arg9[%c0_22, %c0_23], %44 {strides = array<i32>} : memref<256x128xf32, #tpu.memory_space<vmem>>, vector<256x128xf32>,
    %c0_24 = arith.constant 0 : index
    %c0_25 = arith.constant 0 : index
    %46 = vector.load %arg2[%c0_24, %c0_25] : memref<256x128xf32, #tpu.memory_space<vmem>>, vector<256x128xf32>
    %47 = arith.subf %44, %46 : vector<256x128xf32>
    %48 = math.absf %47 : vector<256x128xf32>
    %cst_26 = arith.constant 5.000000e-03 : f32
    %49 = vector.broadcast %cst_26 : f32 to vector<256x128xf32>
    %50 = arith.cmpf olt, %48, %49 : vector<256x128xf32>
    %cst_27 = arith.constant 5.000000e-01 : f32
    %51 = vector.broadcast %cst_27 : f32 to vector<256x128xf32>
    %52 = arith.mulf %51, %47 : vector<256x128xf32>
    %53 = arith.mulf %52, %47 : vector<256x128xf32>
    %cst_28 = arith.constant 5.000000e-03 : f32
    %54 = vector.broadcast %cst_28 : f32 to vector<256x128xf32>
    %55 = arith.divf %53, %54 : vector<256x128xf32>
    %cst_29 = arith.constant 2.500000e-03 : f32
    %56 = vector.broadcast %cst_29 : f32 to vector<256x128xf32>
    %57 = arith.subf %48, %56 : vector<256x128xf32>
    %58 = arith.select %50, %55, %57 : vector<256x128xi1>, vector<256x128xf32>
    %cst_30 = arith.constant dense<0.000000e+00> : vector<256xf32>
    %59 = vector.multi_reduction <add>, %58, %cst_30 [1] : vector<256x128xf32> to vector<256xf32>
    %60 = vector.shape_cast %59 : vector<256xf32> to vector<256x1xf32>
    %cst_31 = arith.constant 2.500000e-01 : f32
    %61 = vector.broadcast %cst_31 : f32 to vector<256x1xf32>
    %62 = arith.mulf %60, %61 : vector<256x1xf32>
    %c0_32 = arith.constant 0 : index
    %c0_33 = arith.constant 0 : index
    %63 = vector.load %arg10[%c0_32, %c0_33] : memref<256x1xf32, #tpu.memory_space<vmem>>, vector<256x1xf32>
    tpu.vector_store %arg10[%c0_32, %c0_33], %62 {strides = array<i32>} : memref<256x1xf32, #tpu.memory_space<vmem>>, vector<256x1xf32>,
    return
  }
  func.func @transform_0(%arg0: i32) -> (i32, i32) {
    %c0_i32 = arith.constant 0 : i32
    %c0_i32_0 = arith.constant 0 : i32
    return %arg0, %c0_i32 : i32, i32
  }
  func.func @transform_1(%arg0: i32) -> (i32, i32) {
    %c0_i32 = arith.constant 0 : i32
    %c0_i32_0 = arith.constant 0 : i32
    return %arg0, %c0_i32 : i32, i32
  }
  func.func @transform_2(%arg0: i32) -> (i32, i32) {
    %c0_i32 = arith.constant 0 : i32
    %c0_i32_0 = arith.constant 0 : i32
    %c0_i32_1 = arith.constant 0 : i32
    return %c0_i32, %c0_i32_0 : i32, i32
  }
  func.func @transform_3(%arg0: i32) -> (i32, i32) {
    %c0_i32 = arith.constant 0 : i32
    %c0_i32_0 = arith.constant 0 : i32
    %c0_i32_1 = arith.constant 0 : i32
    return %c0_i32, %c0_i32_0 : i32, i32
  }
  func.func @transform_4(%arg0: i32) -> (i32, i32) {
    %c0_i32 = arith.constant 0 : i32
    %c0_i32_0 = arith.constant 0 : i32
    %c0_i32_1 = arith.constant 0 : i32
    return %c0_i32, %c0_i32_0 : i32, i32
  }
  func.func @transform_5(%arg0: i32) -> (i32, i32) {
    %c0_i32 = arith.constant 0 : i32
    %c0_i32_0 = arith.constant 0 : i32
    %c0_i32_1 = arith.constant 0 : i32
    return %c0_i32, %c0_i32_0 : i32, i32
  }
  func.func @transform_6(%arg0: i32) -> (i32, i32) {
    %c0_i32 = arith.constant 0 : i32
    %c0_i32_0 = arith.constant 0 : i32
    %c0_i32_1 = arith.constant 0 : i32
    return %c0_i32, %c0_i32_0 : i32, i32
  }
  func.func @transform_7(%arg0: i32) -> (i32, i32) {
    %c0_i32 = arith.constant 0 : i32
    %c0_i32_0 = arith.constant 0 : i32
    %c0_i32_1 = arith.constant 0 : i32
    return %c0_i32, %c0_i32_0 : i32, i32
  }
  func.func @transform_8(%arg0: i32) -> (i32, i32) {
    %c0_i32 = arith.constant 0 : i32
    %c0_i32_0 = arith.constant 0 : i32
    return %arg0, %c0_i32 : i32, i32
  }
  func.func @transform_9(%arg0: i32) -> (i32, i32) {
    %c0_i32 = arith.constant 0 : i32
    %c0_i32_0 = arith.constant 0 : i32
    return %arg0, %c0_i32 : i32, i32
  }
}

</mosaic_0001>

<llo_original>
// kernel: tpu_custom_call.1
$region0: #{tpu_custom_call.1}
  #allocation0 [shape = 'u32[]', space=smem, size = 0x4, offset = 0x4, fixed_abs, tag = 'smem constant byte address 0x4 - core index']
  #allocation1 [shape = 'u32[72,128]{1,0:T(1,128)}', space=vmem, size = 0x9000, scoped, tag = 'internal scratch']
  %s0 = inlined_call_operand.vmem [shape: f32[256,32], index: 0, kind: input, shape index: {}]
  %s1 = inlined_call_operand.vmem [shape: f32[256,128], index: 1, kind: input, shape index: {}]
  %s2 = inlined_call_operand.vmem [shape: f32[32,32], index: 2, kind: input, shape index: {}]
  %s3 = inlined_call_operand.hbm [shape: f32[1,32], index: 3, kind: input, shape index: {}]
  %s4 = inlined_call_operand.vmem [shape: f32[1,32], index: 4, kind: input, shape index: {}]
  %s5 = inlined_call_operand.vmem [shape: f32[1,32], index: 5, kind: input, shape index: {}]
  %s6 = inlined_call_operand.vmem [shape: f32[32,128], index: 6, kind: input, shape index: {}]
  %s7 = inlined_call_operand.vmem [shape: f32[1,128], index: 7, kind: input, shape index: {}]
  %s8 = inlined_call_operand.hbm [shape: f32[256,128], index: 8, kind: output, shape index: {0}]
  %s9 = inlined_call_operand.vmem [shape: f32[256,1], index: 9, kind: output, shape index: {1}]
  %10 = xla_tuple %s8, %s9
  %s11 = sld [smem:[#allocation0]]
  $region54: #{tpu_custom_call.1} parent=0
    _
  %s13 = ssub.s32 1, %s11
  %s14 = scalar_select 0, %s13, %s11
  $region1: #{tpu_custom_call.1} parent=0
    #allocation2 [shape = 'u8[512]{0}', space=vmem, size = 0x400, scoped, tag = 'input window, operand 3, single buffered']
    #allocation3 [shape = 's32[1]{0}', space=sflag, size = 0x4, scoped, tag = 'scoped memory for tpu_custom_call.1']
    #allocation4 [shape = 's32[1]{0}', space=sflag, size = 0x4, scoped, tag = 'scoped memory for tpu_custom_call.1']
    #allocation5 [shape = 'u8[131072]{0}', space=vmem, size = 0x20000, scoped, tag = 'output window, operand 0, single buffered']
    %15 = vsyncpa [#allocation3], 0
    %16 = vsyncpa [#allocation4], 0
    // Predicated region
    $region2: #{tpu_custom_call.1} parent=1 // pred_check
      _
    $region3: #{tpu_custom_call.1} parent=1 // pred_check_branch
      %18 = sbr.rel (0) target = $region5
    $region4: #{tpu_custom_call.1} parent=1 // pred_region
      _
    $region5: #{tpu_custom_call.1} parent=1 // pred_fallthru
      _
    // Predicated region
    $region6: #{tpu_custom_call.1} parent=1 // pred_check
      _
    $region7: #{tpu_custom_call.1} parent=1 // pred_check_branch
      %20 = sbr.rel (0) target = $region9
    $region8: #{tpu_custom_call.1} parent=1 // pred_region
      _
    $region9: #{tpu_custom_call.1} parent=1 // pred_fallthru
      _
    // Predicated region
    $region10: #{tpu_custom_call.1} parent=1 // pred_check
      _
    $region11: #{tpu_custom_call.1} parent=1 // pred_check_branch
      %22 = sbr.rel (0) target = $region13
    $region12: #{tpu_custom_call.1} parent=1 // pred_region
      _
    $region13: #{tpu_custom_call.1} parent=1 // pred_fallthru
      _
    // Predicated region
    $region14: #{tpu_custom_call.1} parent=1 // pred_check
      _
    $region15: #{tpu_custom_call.1} parent=1 // pred_check_branch
      %24 = sbr.rel (0) target = $region17
    $region16: #{tpu_custom_call.1} parent=1 // pred_region
      %26 = vsyncadd [#allocation3], 0
      %s28 = sshll.u32 %s3, 4
      %s29 = int_to_ptr.hbm [resolvable:$true] %s28
      %s30 = sshll.u32 [#allocation2], 4
      %s31 = int_to_ptr.vmem [resolvable:$true] %s30
      %33 = dma.hbm_to_vmem [thread:$0]  %s29, 16, %s31, [#allocation3]
    $region17: #{tpu_custom_call.1} parent=1 // pred_fallthru
      _
    // Predicated region
    $region18: #{tpu_custom_call.1} parent=1 // pred_check
      _
    $region19: #{tpu_custom_call.1} parent=1 // pred_check_branch
      %35 = sbr.rel (0) target = $region21
    $region20: #{tpu_custom_call.1} parent=1 // pred_region
      _
    $region21: #{tpu_custom_call.1} parent=1 // pred_fallthru
      _
    // Predicated region
    $region22: #{tpu_custom_call.1} parent=1 // pred_check
      _
    $region23: #{tpu_custom_call.1} parent=1 // pred_check_branch
      %37 = sbr.rel (0) target = $region25
    $region24: #{tpu_custom_call.1} parent=1 // pred_region
      _
    $region25: #{tpu_custom_call.1} parent=1 // pred_fallthru
      _
    // Predicated region
    $region26: #{tpu_custom_call.1} parent=1 // pred_check
      _
    $region27: #{tpu_custom_call.1} parent=1 // pred_check_branch
      %39 = sbr.rel (0) target = $region29
    $region28: #{tpu_custom_call.1} parent=1 // pred_region
      _
    $region29: #{tpu_custom_call.1} parent=1 // pred_fallthru
      _
    // Predicated region
    $region30: #{tpu_custom_call.1} parent=1 // pred_check
      _
    $region31: #{tpu_custom_call.1} parent=1 // pred_check_branch
      %41 = sbr.rel (0) target = $region33
    $region32: #{tpu_custom_call.1} parent=1 // pred_region
      _
    $region33: #{tpu_custom_call.1} parent=1 // pred_fallthru
      _
    // Predicated region
    $region34: #{tpu_custom_call.1} parent=1 // pred_check
      _
    $region35: #{tpu_custom_call.1} parent=1 // pred_check_branch
      %43 = sbr.rel (0) target = $region37
    $region36: #{tpu_custom_call.1} parent=1 // pred_region
      %45 = dma.done [#allocation3], 16
    $region37: #{tpu_custom_call.1} parent=1 // pred_fallthru
      _
    %v46 = vld [vmem:[%s0] sm:$0xff]
    %v47 = vld [vmem:[%s0 + $0x8] sm:$0xff]
    %v48 = vld [vmem:[%s0 + $0x10] sm:$0xff]
    %v49 = vld [vmem:[%s0 + $0x18] sm:$0xff]
    %v50 = vld [vmem:[%s0 + $0x20] sm:$0xff]
    %v51 = vld [vmem:[%s0 + $0x28] sm:$0xff]
    %v52 = vld [vmem:[%s0 + $0x30] sm:$0xff]
    %v53 = vld [vmem:[%s0 + $0x38] sm:$0xff]
    %v54 = vld [vmem:[%s0 + $0x40] sm:$0xff]
    %v55 = vld [vmem:[%s0 + $0x48] sm:$0xff]
    %v56 = vld [vmem:[%s0 + $0x50] sm:$0xff]
    %v57 = vld [vmem:[%s0 + $0x58] sm:$0xff]
    %v58 = vld [vmem:[%s0 + $0x60] sm:$0xff]
    %v59 = vld [vmem:[%s0 + $0x68] sm:$0xff]
    %v60 = vld [vmem:[%s0 + $0x70] sm:$0xff]
    %v61 = vld [vmem:[%s0 + $0x78] sm:$0xff]
    %v62 = vld [vmem:[%s0 + $0x80] sm:$0xff]
    %v63 = vld [vmem:[%s0 + $0x88] sm:$0xff]
    %v64 = vld [vmem:[%s0 + $0x90] sm:$0xff]
    %v65 = vld [vmem:[%s0 + $0x98] sm:$0xff]
    %v66 = vld [vmem:[%s0 + $0xa0] sm:$0xff]
    %v67 = vld [vmem:[%s0 + $0xa8] sm:$0xff]
    %v68 = vld [vmem:[%s0 + $0xb0] sm:$0xff]
    %v69 = vld [vmem:[%s0 + $0xb8] sm:$0xff]
    %v70 = vld [vmem:[%s0 + $0xc0] sm:$0xff]
    %v71 = vld [vmem:[%s0 + $0xc8] sm:$0xff]
    %v72 = vld [vmem:[%s0 + $0xd0] sm:$0xff]
    %v73 = vld [vmem:[%s0 + $0xd8] sm:$0xff]
    %v74 = vld [vmem:[%s0 + $0xe0] sm:$0xff]
    %v75 = vld [vmem:[%s0 + $0xe8] sm:$0xff]
    %v76 = vld [vmem:[%s0 + $0xf0] sm:$0xff]
    %v77 = vld [vmem:[%s0 + $0xf8] sm:$0xff]
    %v78 = vld [vmem:[%s2] sm:$0xff]
    %v79 = vld [vmem:[%s2 + $0x8] sm:$0xff]
    %v80 = vld [vmem:[%s2 + $0x10] sm:$0xff]
    %v81 = vld [vmem:[%s2 + $0x18] sm:$0xff]
    %v82 = vld [vmem:[#allocation2] sm:$0x1]
    %v84 = vperm.slane %v82, 0
    %vm86 = vcmask 261120
    %v88 = vsel %vm86, %v46, 0
    %v91 = vsel %vm86, %v47, 0
    %v94 = vsel %vm86, %v48, 0
    %v97 = vsel %vm86, %v49, 0
    %v100 = vsel %vm86, %v50, 0
    %v103 = vsel %vm86, %v51, 0
    %v106 = vsel %vm86, %v52, 0
    %v109 = vsel %vm86, %v53, 0
    %v112 = vsel %vm86, %v54, 0
    %v115 = vsel %vm86, %v55, 0
    %v118 = vsel %vm86, %v56, 0
    %v121 = vsel %vm86, %v57, 0
    %v124 = vsel %vm86, %v58, 0
    %v127 = vsel %vm86, %v59, 0
    %v130 = vsel %vm86, %v60, 0
    %v133 = vsel %vm86, %v61, 0
    %v136 = vsel %vm86, %v62, 0
    %v139 = vsel %vm86, %v63, 0
    %v142 = vsel %vm86, %v64, 0
    %v145 = vsel %vm86, %v65, 0
    %v148 = vsel %vm86, %v66, 0
    %v151 = vsel %vm86, %v67, 0
    %v154 = vsel %vm86, %v68, 0
    %v157 = vsel %vm86, %v69, 0
    %v160 = vsel %vm86, %v70, 0
    %v163 = vsel %vm86, %v71, 0
    %v166 = vsel %vm86, %v72, 0
    %v169 = vsel %vm86, %v73, 0
    %v172 = vsel %vm86, %v74, 0
    %v175 = vsel %vm86, %v75, 0
    %v178 = vsel %vm86, %v76, 0
    %v181 = vsel %vm86, %v77, 0
    %183 = vmatpush.msra.mxu0 0.0
    %184 = vmatpush.msra.mxu0 0.0
    %185 = vmatpush.msra.mxu0 0.0
    %186 = vmatpush.msra.mxu0 0.0
    %187 = vmatpush.msra.mxu0 0.0
    %188 = vmatpush.msra.mxu0 0.0
    %189 = vmatpush.msra.mxu0 0.0
    %190 = vmatpush.msra.mxu0 0.0
    %191 = vmatpush.msra.mxu0 0.0
    %192 = vmatpush.msra.mxu0 0.0
    %193 = vmatpush.msra.mxu0 0.0
    %194 = vmatpush.msra.mxu0 0.0
    %195 = vmatpush.msra.mxu0 %v81
    %196 = vmatpush.msra.mxu0 %v80
    %197 = vmatpush.msra.mxu0 %v79
    %198 = vmatpush.msra.mxu0 %v78
    %199 = vmatmul.f32.gmra.mxu0 %v88
    %v200 = vpop.f32.mrf.mxu0
    %v201 = vadd.f32 %v84, %v200
    %202 = vmatmul.f32.gmra.mxu0 %v91
    %v203 = vpop.f32.mrf.mxu0
    %v204 = vadd.f32 %v84, %v203
    %205 = vmatmul.f32.gmra.mxu0 %v94
    %v206 = vpop.f32.mrf.mxu0
    %v207 = vadd.f32 %v84, %v206
    %208 = vmatmul.f32.gmra.mxu0 %v97
    %v209 = vpop.f32.mrf.mxu0
    %v210 = vadd.f32 %v84, %v209
    %211 = vmatmul.f32.gmra.mxu0 %v100
    %v212 = vpop.f32.mrf.mxu0
    %v213 = vadd.f32 %v84, %v212
    %214 = vmatmul.f32.gmra.mxu0 %v103
    %v215 = vpop.f32.mrf.mxu0
    %v216 = vadd.f32 %v84, %v215
    %217 = vmatmul.f32.gmra.mxu0 %v106
    %v218 = vpop.f32.mrf.mxu0
    %v219 = vadd.f32 %v84, %v218
    %220 = vmatmul.f32.gmra.mxu0 %v109
    %v221 = vpop.f32.mrf.mxu0
    %v222 = vadd.f32 %v84, %v221
    %223 = vmatmul.f32.gmra.mxu0 %v112
    %v224 = vpop.f32.mrf.mxu0
    %v225 = vadd.f32 %v84, %v224
    %226 = vmatmul.f32.gmra.mxu0 %v115
    %v227 = vpop.f32.mrf.mxu0
    %v228 = vadd.f32 %v84, %v227
    %229 = vmatmul.f32.gmra.mxu0 %v118
    %v230 = vpop.f32.mrf.mxu0
    %v231 = vadd.f32 %v84, %v230
    %232 = vmatmul.f32.gmra.mxu0 %v121
    %v233 = vpop.f32.mrf.mxu0
    %v234 = vadd.f32 %v84, %v233
    %235 = vmatmul.f32.gmra.mxu0 %v124
    %v236 = vpop.f32.mrf.mxu0
    %v237 = vadd.f32 %v84, %v236
    %238 = vmatmul.f32.gmra.mxu0 %v127
    %v239 = vpop.f32.mrf.mxu0
    %v240 = vadd.f32 %v84, %v239
    %241 = vmatmul.f32.gmra.mxu0 %v130
    %v242 = vpop.f32.mrf.mxu0
    %v243 = vadd.f32 %v84, %v242
    %244 = vmatmul.f32.gmra.mxu0 %v133
    %v245 = vpop.f32.mrf.mxu0
    %v246 = vadd.f32 %v84, %v245
    %247 = vmatmul.f32.gmra.mxu0 %v136
    %v248 = vpop.f32.mrf.mxu0
    %v249 = vadd.f32 %v84, %v248
    %250 = vmatmul.f32.gmra.mxu0 %v139
    %v251 = vpop.f32.mrf.mxu0
    %v252 = vadd.f32 %v84, %v251
    %253 = vmatmul.f32.gmra.mxu0 %v142
    %v254 = vpop.f32.mrf.mxu0
    %v255 = vadd.f32 %v84, %v254
    %256 = vmatmul.f32.gmra.mxu0 %v145
    %v257 = vpop.f32.mrf.mxu0
    %v258 = vadd.f32 %v84, %v257
    %259 = vmatmul.f32.gmra.mxu0 %v148
    %v260 = vpop.f32.mrf.mxu0
    %v261 = vadd.f32 %v84, %v260
    %262 = vmatmul.f32.gmra.mxu0 %v151
    %v263 = vpop.f32.mrf.mxu0
    %v264 = vadd.f32 %v84, %v263
    %265 = vmatmul.f32.gmra.mxu0 %v154
    %v266 = vpop.f32.mrf.mxu0
    %v267 = vadd.f32 %v84, %v266
    %268 = vmatmul.f32.gmra.mxu0 %v157
    %v269 = vpop.f32.mrf.mxu0
    %v270 = vadd.f32 %v84, %v269
    %271 = vmatmul.f32.gmra.mxu0 %v160
    %v272 = vpop.f32.mrf.mxu0
    %v273 = vadd.f32 %v84, %v272
    %274 = vmatmul.f32.gmra.mxu0 %v163
    %v275 = vpop.f32.mrf.mxu0
    %v276 = vadd.f32 %v84, %v275
    %277 = vmatmul.f32.gmra.mxu0 %v166
    %v278 = vpop.f32.mrf.mxu0
    %v279 = vadd.f32 %v84, %v278
    %280 = vmatmul.f32.gmra.mxu0 %v169
    %v281 = vpop.f32.mrf.mxu0
    %v282 = vadd.f32 %v84, %v281
    %283 = vmatmul.f32.gmra.mxu0 %v172
    %v284 = vpop.f32.mrf.mxu0
    %v285 = vadd.f32 %v84, %v284
    %286 = vmatmul.f32.gmra.mxu0 %v175
    %v287 = vpop.f32.mrf.mxu0
    %v288 = vadd.f32 %v84, %v287
    %289 = vmatmul.f32.gmra.mxu0 %v178
    %v290 = vpop.f32.mrf.mxu0
    %v291 = vadd.f32 %v84, %v290
    %292 = vmatmul.f32.gmra.mxu0 %v181
    %v293 = vpop.f32.mrf.mxu0
    %v294 = vadd.f32 %v84, %v293
    %295 = vdwg.mxu0
    %v296 = vmul.f32 %v201, 0.5
    %v297 = vmul.f32 %v204, 0.5
    %v298 = vmul.f32 %v207, 0.5
    %v299 = vmul.f32 %v210, 0.5
    %v300 = vmul.f32 %v213, 0.5
    %v301 = vmul.f32 %v216, 0.5
    %v302 = vmul.f32 %v219, 0.5
    %v303 = vmul.f32 %v222, 0.5
    %v304 = vmul.f32 %v225, 0.5
    %v305 = vmul.f32 %v228, 0.5
    %v306 = vmul.f32 %v231, 0.5
    %v307 = vmul.f32 %v234, 0.5
    %v308 = vmul.f32 %v237, 0.5
    %v309 = vmul.f32 %v240, 0.5
    %v310 = vmul.f32 %v243, 0.5
    %v311 = vmul.f32 %v246, 0.5
    %v312 = vmul.f32 %v249, 0.5
    %v313 = vmul.f32 %v252, 0.5
    %v314 = vmul.f32 %v255, 0.5
    %v315 = vmul.f32 %v258, 0.5
    %v316 = vmul.f32 %v261, 0.5
    %v317 = vmul.f32 %v264, 0.5
    %v318 = vmul.f32 %v267, 0.5
    %v319 = vmul.f32 %v270, 0.5
    %v320 = vmul.f32 %v273, 0.5
    %v321 = vmul.f32 %v276, 0.5
    %v322 = vmul.f32 %v279, 0.5
    %v323 = vmul.f32 %v282, 0.5
    %v324 = vmul.f32 %v285, 0.5
    %v325 = vmul.f32 %v288, 0.5
    %v326 = vmul.f32 %v291, 0.5
    %v327 = vmul.f32 %v294, 0.5
    %v328 = vmul.f32 %v201, 0.70710677
    %v329 = vmul.f32 %v204, 0.70710677
    %v330 = vmul.f32 %v207, 0.70710677
    %v331 = vmul.f32 %v210, 0.70710677
    %v332 = vmul.f32 %v213, 0.70710677
    %v333 = vmul.f32 %v216, 0.70710677
    %v334 = vmul.f32 %v219, 0.70710677
    %v335 = vmul.f32 %v222, 0.70710677
    %v336 = vmul.f32 %v225, 0.70710677
    %v337 = vmul.f32 %v228, 0.70710677
    %v338 = vmul.f32 %v231, 0.70710677
    %v339 = vmul.f32 %v234, 0.70710677
    %v340 = vmul.f32 %v237, 0.70710677
    %v341 = vmul.f32 %v240, 0.70710677
    %v342 = vmul.f32 %v243, 0.70710677
    %v343 = vmul.f32 %v246, 0.70710677
    %v344 = vmul.f32 %v249, 0.70710677
    %v345 = vmul.f32 %v252, 0.70710677
    %v346 = vmul.f32 %v255, 0.70710677
    %v347 = vmul.f32 %v258, 0.70710677
    %v348 = vmul.f32 %v261, 0.70710677
    %v349 = vmul.f32 %v264, 0.70710677
    %v350 = vmul.f32 %v267, 0.70710677
    %v351 = vmul.f32 %v270, 0.70710677
    %v352 = vmul.f32 %v273, 0.70710677
    %v353 = vmul.f32 %v276, 0.70710677
    %v354 = vmul.f32 %v279, 0.70710677
    %v355 = vmul.f32 %v282, 0.70710677
    %v356 = vmul.f32 %v285, 0.70710677
    %v357 = vmul.f32 %v288, 0.70710677
    %v358 = vmul.f32 %v291, 0.70710677
    %v359 = vmul.f32 %v294, 0.70710677
    %v360 = vmul.f32 %v328, %v328
    %v361 = vmin.f32 16.0, %v360
    %v362 = vmul.f32 %v361, 2.1237322e-06
    %v363 = vadd.f32 %v362, 0.00028619796
    %v364 = vmul.f32 %v361, %v363
    %v365 = vadd.f32 %v364, 0.0036580483
    %v366 = vmul.f32 %v361, %v365
    %v367 = vadd.f32 %v366, 0.05243302
    %v368 = vmul.f32 %v361, %v367
    %v369 = vadd.f32 %v368, 0.18741608
    %v370 = vmul.f32 %v361, %v369
    %v371 = vadd.f32 %v370, 1.1283791
    %v372 = vmul.f32 %v328, %v371
    %v373 = vmul.f32 %v361, 3.8918573e-05
    %v374 = vadd.f32 %v373, 0.001143296
    %v375 = vmul.f32 %v361, %v374
    %v376 = vadd.f32 %v375, 0.014752088
    %v377 = vmul.f32 %v361, %v376
    %v378 = vadd.f32 %v377, 0.112945676
    %v379 = vmul.f32 %v361, %v378
    %v380 = vadd.f32 %v379, 0.4994258
    %v381 = vmul.f32 %v361, %v380
    %v382 = vadd.f32 %v381, 1.0
    %v383 = vrcp.pop %v382
    %v384 = vmul.f32 %v382, %v383
    %v385 = vsub.f32 1.0, %v384
    %v386 = vmul.f32 %v383, %v385
    %v387 = vadd.f32 %v383, %v386
    %vm388 = vweird.f32 %v382
    %vm389 = vweird.f32 %v383
    %vm390 = vmor %vm388, %vm389
    %v391 = vsel %vm390, %v383, %v387
    %v392 = vand.u32 2147483647, %v382
    %vm393 = vcmp.eq.f32.partialorder %v392, 8.507059e+37
    %v394 = vand.u32 %v382, 2147483648
    %v395 = vor.u32 1.1754944e-38, %v394
    %v396 = vsel %vm393, %v395, %v391
    %v397 = vmul.f32 %v372, %v396
    %v398 = vmin.f32 %v397, 1.0
    %v399 = vmax.f32 %v398, -1.0
    %v400 = vmul.f32 %v329, %v329
    %v401 = vmin.f32 16.0, %v400
    %v402 = vmul.f32 %v401, 2.1237322e-06
    %v403 = vadd.f32 %v402, 0.00028619796
    %v404 = vmul.f32 %v401, %v403
    %v405 = vadd.f32 %v404, 0.0036580483
    %v406 = vmul.f32 %v401, %v405
    %v407 = vadd.f32 %v406, 0.05243302
    %v408 = vmul.f32 %v401, %v407
    %v409 = vadd.f32 %v408, 0.18741608
    %v410 = vmul.f32 %v401, %v409
    %v411 = vadd.f32 %v410, 1.1283791
    %v412 = vmul.f32 %v329, %v411
    %v413 = vmul.f32 %v401, 3.8918573e-05
    %v414 = vadd.f32 %v413, 0.001143296
    %v415 = vmul.f32 %v401, %v414
    %v416 = vadd.f32 %v415, 0.014752088
    %v417 = vmul.f32 %v401, %v416
    %v418 = vadd.f32 %v417, 0.112945676
    %v419 = vmul.f32 %v401, %v418
    %v420 = vadd.f32 %v419, 0.4994258
    %v421 = vmul.f32 %v401, %v420
    %v422 = vadd.f32 %v421, 1.0
    %v423 = vrcp.pop %v422
    %v424 = vmul.f32 %v422, %v423
    %v425 = vsub.f32 1.0, %v424
    %v426 = vmul.f32 %v423, %v425
    %v427 = vadd.f32 %v423, %v426
    %vm428 = vweird.f32 %v422
    %vm429 = vweird.f32 %v423
    %vm430 = vmor %vm428, %vm429
    %v431 = vsel %vm430, %v423, %v427
    %v432 = vand.u32 2147483647, %v422
    %vm433 = vcmp.eq.f32.partialorder %v432, 8.507059e+37
    %v434 = vand.u32 %v422, 2147483648
    %v435 = vor.u32 1.1754944e-38, %v434
    %v436 = vsel %vm433, %v435, %v431
    %v437 = vmul.f32 %v412, %v436
    %v438 = vmin.f32 %v437, 1.0
    %v439 = vmax.f32 %v438, -1.0
    %v440 = vmul.f32 %v330, %v330
    %v441 = vmin.f32 16.0, %v440
    %v442 = vmul.f32 %v441, 2.1237322e-06
    %v443 = vadd.f32 %v442, 0.00028619796
    %v444 = vmul.f32 %v441, %v443
    %v445 = vadd.f32 %v444, 0.0036580483
    %v446 = vmul.f32 %v441, %v445
    %v447 = vadd.f32 %v446, 0.05243302
    %v448 = vmul.f32 %v441, %v447
    %v449 = vadd.f32 %v448, 0.18741608
    %v450 = vmul.f32 %v441, %v449
    %v451 = vadd.f32 %v450, 1.1283791
    %v452 = vmul.f32 %v330, %v451
    %v453 = vmul.f32 %v441, 3.8918573e-05
    %v454 = vadd.f32 %v453, 0.001143296
    %v455 = vmul.f32 %v441, %v454
    %v456 = vadd.f32 %v455, 0.014752088
    %v457 = vmul.f32 %v441, %v456
    %v458 = vadd.f32 %v457, 0.112945676
    %v459 = vmul.f32 %v441, %v458
    %v460 = vadd.f32 %v459, 0.4994258
    %v461 = vmul.f32 %v441, %v460
    %v462 = vadd.f32 %v461, 1.0
    %v463 = vrcp.pop %v462
    %v464 = vmul.f32 %v462, %v463
    %v465 = vsub.f32 1.0, %v464
    %v466 = vmul.f32 %v463, %v465
    %v467 = vadd.f32 %v463, %v466
    %vm468 = vweird.f32 %v462
    %vm469 = vweird.f32 %v463
    %vm470 = vmor %vm468, %vm469
    %v471 = vsel %vm470, %v463, %v467
    %v472 = vand.u32 2147483647, %v462
    %vm473 = vcmp.eq.f32.partialorder %v472, 8.507059e+37
    %v474 = vand.u32 %v462, 2147483648
    %v475 = vor.u32 1.1754944e-38, %v474
    %v476 = vsel %vm473, %v475, %v471
    %v477 = vmul.f32 %v452, %v476
    %v478 = vmin.f32 %v477, 1.0
    %v479 = vmax.f32 %v478, -1.0
    %v480 = vmul.f32 %v331, %v331
    %v481 = vmin.f32 16.0, %v480
    %v482 = vmul.f32 %v481, 2.1237322e-06
    %v483 = vadd.f32 %v482, 0.00028619796
    %v484 = vmul.f32 %v481, %v483
    %v485 = vadd.f32 %v484, 0.0036580483
    %v486 = vmul.f32 %v481, %v485
    %v487 = vadd.f32 %v486, 0.05243302
    %v488 = vmul.f32 %v481, %v487
    %v489 = vadd.f32 %v488, 0.18741608
    %v490 = vmul.f32 %v481, %v489
    %v491 = vadd.f32 %v490, 1.1283791
    %v492 = vmul.f32 %v331, %v491
    %v493 = vmul.f32 %v481, 3.8918573e-05
    %v494 = vadd.f32 %v493, 0.001143296
    %v495 = vmul.f32 %v481, %v494
    %v496 = vadd.f32 %v495, 0.014752088
    %v497 = vmul.f32 %v481, %v496
    %v498 = vadd.f32 %v497, 0.112945676
    %v499 = vmul.f32 %v481, %v498
    %v500 = vadd.f32 %v499, 0.4994258
    %v501 = vmul.f32 %v481, %v500
    %v502 = vadd.f32 %v501, 1.0
    %v503 = vrcp.pop %v502
    %v504 = vmul.f32 %v502, %v503
    %v505 = vsub.f32 1.0, %v504
    %v506 = vmul.f32 %v503, %v505
    %v507 = vadd.f32 %v503, %v506
    %vm508 = vweird.f32 %v502
    %vm509 = vweird.f32 %v503
    %vm510 = vmor %vm508, %vm509
    %v511 = vsel %vm510, %v503, %v507
    %v512 = vand.u32 2147483647, %v502
    %vm513 = vcmp.eq.f32.partialorder %v512, 8.507059e+37
    %v514 = vand.u32 %v502, 2147483648
    %v515 = vor.u32 1.1754944e-38, %v514
    %v516 = vsel %vm513, %v515, %v511
    %v517 = vmul.f32 %v492, %v516
    %v518 = vmin.f32 %v517, 1.0
    %v519 = vmax.f32 %v518, -1.0
    %v520 = vmul.f32 %v332, %v332
    %v521 = vmin.f32 16.0, %v520
    %v522 = vmul.f32 %v521, 2.1237322e-06
    %v523 = vadd.f32 %v522, 0.00028619796
    %v524 = vmul.f32 %v521, %v523
    %v525 = vadd.f32 %v524, 0.0036580483
    %v526 = vmul.f32 %v521, %v525
    %v527 = vadd.f32 %v526, 0.05243302
    %v528 = vmul.f32 %v521, %v527
    %v529 = vadd.f32 %v528, 0.18741608
    %v530 = vmul.f32 %v521, %v529
    %v531 = vadd.f32 %v530, 1.1283791
    %v532 = vmul.f32 %v332, %v531
    %v533 = vmul.f32 %v521, 3.8918573e-05
    %v534 = vadd.f32 %v533, 0.001143296
    %v535 = vmul.f32 %v521, %v534
    %v536 = vadd.f32 %v535, 0.014752088
    %v537 = vmul.f32 %v521, %v536
    %v538 = vadd.f32 %v537, 0.112945676
    %v539 = vmul.f32 %v521, %v538
    %v540 = vadd.f32 %v539, 0.4994258
    %v541 = vmul.f32 %v521, %v540
    %v542 = vadd.f32 %v541, 1.0
    %v543 = vrcp.pop %v542
    %v544 = vmul.f32 %v542, %v543
    %v545 = vsub.f32 1.0, %v544
    %v546 = vmul.f32 %v543, %v545
    %v547 = vadd.f32 %v543, %v546
    %vm548 = vweird.f32 %v542
    %vm549 = vweird.f32 %v543
    %vm550 = vmor %vm548, %vm549
    %v551 = vsel %vm550, %v543, %v547
    %v552 = vand.u32 2147483647, %v542
    %vm553 = vcmp.eq.f32.partialorder %v552, 8.507059e+37
    %v554 = vand.u32 %v542, 2147483648
    %v555 = vor.u32 1.1754944e-38, %v554
    %v556 = vsel %vm553, %v555, %v551
    %v557 = vmul.f32 %v532, %v556
    %v558 = vmin.f32 %v557, 1.0
    %v559 = vmax.f32 %v558, -1.0
    %v560 = vmul.f32 %v333, %v333
    %v561 = vmin.f32 16.0, %v560
    %v562 = vmul.f32 %v561, 2.1237322e-06
    %v563 = vadd.f32 %v562, 0.00028619796
    %v564 = vmul.f32 %v561, %v563
    %v565 = vadd.f32 %v564, 0.0036580483
    %v566 = vmul.f32 %v561, %v565
    %v567 = vadd.f32 %v566, 0.05243302
    %v568 = vmul.f32 %v561, %v567
    %v569 = vadd.f32 %v568, 0.18741608
    %v570 = vmul.f32 %v561, %v569
    %v571 = vadd.f32 %v570, 1.1283791
    %v572 = vmul.f32 %v333, %v571
    %v573 = vmul.f32 %v561, 3.8918573e-05
    %v574 = vadd.f32 %v573, 0.001143296
    %v575 = vmul.f32 %v561, %v574
    %v576 = vadd.f32 %v575, 0.014752088
    %v577 = vmul.f32 %v561, %v576
    %v578 = vadd.f32 %v577, 0.112945676
    %v579 = vmul.f32 %v561, %v578
    %v580 = vadd.f32 %v579, 0.4994258
    %v581 = vmul.f32 %v561, %v580
    %v582 = vadd.f32 %v581, 1.0
    %v583 = vrcp.pop %v582
    %v584 = vmul.f32 %v582, %v583
    %v585 = vsub.f32 1.0, %v584
    %v586 = vmul.f32 %v583, %v585
    %v587 = vadd.f32 %v583, %v586
    %vm588 = vweird.f32 %v582
    %vm589 = vweird.f32 %v583
    %vm590 = vmor %vm588, %vm589
    %v591 = vsel %vm590, %v583, %v587
    %v592 = vand.u32 2147483647, %v582
    %vm593 = vcmp.eq.f32.partialorder %v592, 8.507059e+37
    %v594 = vand.u32 %v582, 2147483648
    %v595 = vor.u32 1.1754944e-38, %v594
    %v596 = vsel %vm593, %v595, %v591
    %v597 = vmul.f32 %v572, %v596
    %v598 = vmin.f32 %v597, 1.0
    %v599 = vmax.f32 %v598, -1.0
    %v600 = vmul.f32 %v334, %v334
    %v601 = vmin.f32 16.0, %v600
    %v602 = vmul.f32 %v601, 2.1237322e-06
    %v603 = vadd.f32 %v602, 0.00028619796
    %v604 = vmul.f32 %v601, %v603
    %v605 = vadd.f32 %v604, 0.0036580483
    %v606 = vmul.f32 %v601, %v605
    %v607 = vadd.f32 %v606, 0.05243302
    %v608 = vmul.f32 %v601, %v607
    %v609 = vadd.f32 %v608, 0.18741608
    %v610 = vmul.f32 %v601, %v609
    %v611 = vadd.f32 %v610, 1.1283791
    %v612 = vmul.f32 %v334, %v611
    %v613 = vmul.f32 %v601, 3.8918573e-05
    %v614 = vadd.f32 %v613, 0.001143296
    %v615 = vmul.f32 %v601, %v614
    %v616 = vadd.f32 %v615, 0.014752088
    %v617 = vmul.f32 %v601, %v616
    %v618 = vadd.f32 %v617, 0.112945676
    %v619 = vmul.f32 %v601, %v618
    %v620 = vadd.f32 %v619, 0.4994258
    %v621 = vmul.f32 %v601, %v620
    %v622 = vadd.f32 %v621, 1.0
    %v623 = vrcp.pop %v622
    %v624 = vmul.f32 %v622, %v623
    %v625 = vsub.f32 1.0, %v624
    %v626 = vmul.f32 %v623, %v625
    %v627 = vadd.f32 %v623, %v626
    %vm628 = vweird.f32 %v622
    %vm629 = vweird.f32 %v623
    %vm630 = vmor %vm628, %vm629
    %v631 = vsel %vm630, %v623, %v627
    %v632 = vand.u32 2147483647, %v622
    %vm633 = vcmp.eq.f32.partialorder %v632, 8.507059e+37
    %v634 = vand.u32 %v622, 2147483648
    %v635 = vor.u32 1.1754944e-38, %v634
    %v636 = vsel %vm633, %v635, %v631
    %v637 = vmul.f32 %v612, %v636
    %v638 = vmin.f32 %v637, 1.0
    %v639 = vmax.f32 %v638, -1.0
    %v640 = vmul.f32 %v335, %v335
    %v641 = vmin.f32 16.0, %v640
    %v642 = vmul.f32 %v641, 2.1237322e-06
    %v643 = vadd.f32 %v642, 0.00028619796
    %v644 = vmul.f32 %v641, %v643
    %v645 = vadd.f32 %v644, 0.0036580483
    %v646 = vmul.f32 %v641, %v645
    %v647 = vadd.f32 %v646, 0.05243302
    %v648 = vmul.f32 %v641, %v647
    %v649 = vadd.f32 %v648, 0.18741608
    %v650 = vmul.f32 %v641, %v649
    %v651 = vadd.f32 %v650, 1.1283791
    %v652 = vmul.f32 %v335, %v651
    %v653 = vmul.f32 %v641, 3.8918573e-05
    %v654 = vadd.f32 %v653, 0.001143296
    %v655 = vmul.f32 %v641, %v654
    %v656 = vadd.f32 %v655, 0.014752088
    %v657 = vmul.f32 %v641, %v656
    %v658 = vadd.f32 %v657, 0.112945676
    %v659 = vmul.f32 %v641, %v658
    %v660 = vadd.f32 %v659, 0.4994258
    %v661 = vmul.f32 %v641, %v660
    %v662 = vadd.f32 %v661, 1.0
    %v663 = vrcp.pop %v662
    %v664 = vmul.f32 %v662, %v663
    %v665 = vsub.f32 1.0, %v664
    %v666 = vmul.f32 %v663, %v665
    %v667 = vadd.f32 %v663, %v666
    %vm668 = vweird.f32 %v662
    %vm669 = vweird.f32 %v663
    %vm670 = vmor %vm668, %vm669
    %v671 = vsel %vm670, %v663, %v667
    %v672 = vand.u32 2147483647, %v662
    %vm673 = vcmp.eq.f32.partialorder %v672, 8.507059e+37
    %v674 = vand.u32 %v662, 2147483648
    %v675 = vor.u32 1.1754944e-38, %v674
    %v676 = vsel %vm673, %v675, %v671
    %v677 = vmul.f32 %v652, %v676
    %v678 = vmin.f32 %v677, 1.0
    %v679 = vmax.f32 %v678, -1.0
    %v680 = vmul.f32 %v336, %v336
    %v681 = vmin.f32 16.0, %v680
    %v682 = vmul.f32 %v681, 2.1237322e-06
    %v683 = vadd.f32 %v682, 0.00028619796
    %v684 = vmul.f32 %v681, %v683
    %v685 = vadd.f32 %v684, 0.0036580483
    %v686 = vmul.f32 %v681, %v685
    %v687 = vadd.f32 %v686, 0.05243302
    %v688 = vmul.f32 %v681, %v687
    %v689 = vadd.f32 %v688, 0.18741608
    %v690 = vmul.f32 %v681, %v689
    %v691 = vadd.f32 %v690, 1.1283791
    %v692 = vmul.f32 %v336, %v691
    %v693 = vmul.f32 %v681, 3.8918573e-05
    %v694 = vadd.f32 %v693, 0.001143296
    %v695 = vmul.f32 %v681, %v694
    %v696 = vadd.f32 %v695, 0.014752088
    %v697 = vmul.f32 %v681, %v696
    %v698 = vadd.f32 %v697, 0.112945676
    %v699 = vmul.f32 %v681, %v698
    %v700 = vadd.f32 %v699, 0.4994258
    %v701 = vmul.f32 %v681, %v700
    %v702 = vadd.f32 %v701, 1.0
    %v703 = vrcp.pop %v702
    %v704 = vmul.f32 %v702, %v703
    %v705 = vsub.f32 1.0, %v704
    %v706 = vmul.f32 %v703, %v705
    %v707 = vadd.f32 %v703, %v706
    %vm708 = vweird.f32 %v702
    %vm709 = vweird.f32 %v703
    %vm710 = vmor %vm708, %vm709
    %v711 = vsel %vm710, %v703, %v707
    %v712 = vand.u32 2147483647, %v702
    %vm713 = vcmp.eq.f32.partialorder %v712, 8.507059e+37
    %v714 = vand.u32 %v702, 2147483648
    %v715 = vor.u32 1.1754944e-38, %v714
    %v716 = vsel %vm713, %v715, %v711
    %v717 = vmul.f32 %v692, %v716
    %v718 = vmin.f32 %v717, 1.0
    %v719 = vmax.f32 %v718, -1.0
    %v720 = vmul.f32 %v337, %v337
    %v721 = vmin.f32 16.0, %v720
    %v722 = vmul.f32 %v721, 2.1237322e-06
    %v723 = vadd.f32 %v722, 0.00028619796
    %v724 = vmul.f32 %v721, %v723
    %v725 = vadd.f32 %v724, 0.0036580483
    %v726 = vmul.f32 %v721, %v725
    %v727 = vadd.f32 %v726, 0.05243302
    %v728 = vmul.f32 %v721, %v727
    %v729 = vadd.f32 %v728, 0.18741608
    %v730 = vmul.f32 %v721, %v729
    %v731 = vadd.f32 %v730, 1.1283791
    %v732 = vmul.f32 %v337, %v731
    %v733 = vmul.f32 %v721, 3.8918573e-05
    %v734 = vadd.f32 %v733, 0.001143296
    %v735 = vmul.f32 %v721, %v734
    %v736 = vadd.f32 %v735, 0.014752088
    %v737 = vmul.f32 %v721, %v736
    %v738 = vadd.f32 %v737, 0.112945676
    %v739 = vmul.f32 %v721, %v738
    %v740 = vadd.f32 %v739, 0.4994258
    %v741 = vmul.f32 %v721, %v740
    %v742 = vadd.f32 %v741, 1.0
    %v743 = vrcp.pop %v742
    %v744 = vmul.f32 %v742, %v743
    %v745 = vsub.f32 1.0, %v744
    %v746 = vmul.f32 %v743, %v745
    %v747 = vadd.f32 %v743, %v746
    %vm748 = vweird.f32 %v742
    %vm749 = vweird.f32 %v743
    %vm750 = vmor %vm748, %vm749
    %v751 = vsel %vm750, %v743, %v747
    %v752 = vand.u32 2147483647, %v742
    %vm753 = vcmp.eq.f32.partialorder %v752, 8.507059e+37
    %v754 = vand.u32 %v742, 2147483648
    %v755 = vor.u32 1.1754944e-38, %v754
    %v756 = vsel %vm753, %v755, %v751
    %v757 = vmul.f32 %v732, %v756
    %v758 = vmin.f32 %v757, 1.0
    %v759 = vmax.f32 %v758, -1.0
    %v760 = vmul.f32 %v338, %v338
    %v761 = vmin.f32 16.0, %v760
    %v762 = vmul.f32 %v761, 2.1237322e-06
    %v763 = vadd.f32 %v762, 0.00028619796
    %v764 = vmul.f32 %v761, %v763
    %v765 = vadd.f32 %v764, 0.0036580483
    %v766 = vmul.f32 %v761, %v765
    %v767 = vadd.f32 %v766, 0.05243302
    %v768 = vmul.f32 %v761, %v767
    %v769 = vadd.f32 %v768, 0.18741608
    %v770 = vmul.f32 %v761, %v769
    %v771 = vadd.f32 %v770, 1.1283791
    %v772 = vmul.f32 %v338, %v771
    %v773 = vmul.f32 %v761, 3.8918573e-05
    %v774 = vadd.f32 %v773, 0.001143296
    %v775 = vmul.f32 %v761, %v774
    %v776 = vadd.f32 %v775, 0.014752088
    %v777 = vmul.f32 %v761, %v776
    %v778 = vadd.f32 %v777, 0.112945676
    %v779 = vmul.f32 %v761, %v778
    %v780 = vadd.f32 %v779, 0.4994258
    %v781 = vmul.f32 %v761, %v780
    %v782 = vadd.f32 %v781, 1.0
    %v783 = vrcp.pop %v782
    %v784 = vmul.f32 %v782, %v783
    %v785 = vsub.f32 1.0, %v784
    %v786 = vmul.f32 %v783, %v785
    %v787 = vadd.f32 %v783, %v786
    %vm788 = vweird.f32 %v782
    %vm789 = vweird.f32 %v783
    %vm790 = vmor %vm788, %vm789
    %v791 = vsel %vm790, %v783, %v787
    %v792 = vand.u32 2147483647, %v782
    %vm793 = vcmp.eq.f32.partialorder %v792, 8.507059e+37
    %v794 = vand.u32 %v782, 2147483648
    %v795 = vor.u32 1.1754944e-38, %v794
    %v796 = vsel %vm793, %v795, %v791
    %v797 = vmul.f32 %v772, %v796
    %v798 = vmin.f32 %v797, 1.0
    %v799 = vmax.f32 %v798, -1.0
    %v800 = vmul.f32 %v339, %v339
    %v801 = vmin.f32 16.0, %v800
    %v802 = vmul.f32 %v801, 2.1237322e-06
    %v803 = vadd.f32 %v802, 0.00028619796
    %v804 = vmul.f32 %v801, %v803
    %v805 = vadd.f32 %v804, 0.0036580483
    %v806 = vmul.f32 %v801, %v805
    %v807 = vadd.f32 %v806, 0.05243302
    %v808 = vmul.f32 %v801, %v807
    %v809 = vadd.f32 %v808, 0.18741608
    %v810 = vmul.f32 %v801, %v809
    %v811 = vadd.f32 %v810, 1.1283791
    %v812 = vmul.f32 %v339, %v811
    %v813 = vmul.f32 %v801, 3.8918573e-05
    %v814 = vadd.f32 %v813, 0.001143296
    %v815 = vmul.f32 %v801, %v814
    %v816 = vadd.f32 %v815, 0.014752088
    %v817 = vmul.f32 %v801, %v816
    %v818 = vadd.f32 %v817, 0.112945676
    %v819 = vmul.f32 %v801, %v818
    %v820 = vadd.f32 %v819, 0.4994258
    %v821 = vmul.f32 %v801, %v820
    %v822 = vadd.f32 %v821, 1.0
    %v823 = vrcp.pop %v822
    %v824 = vmul.f32 %v822, %v823
    %v825 = vsub.f32 1.0, %v824
    %v826 = vmul.f32 %v823, %v825
    %v827 = vadd.f32 %v823, %v826
    %vm828 = vweird.f32 %v822
    %vm829 = vweird.f32 %v823
    %vm830 = vmor %vm828, %vm829
    %v831 = vsel %vm830, %v823, %v827
    %v832 = vand.u32 2147483647, %v822
    %vm833 = vcmp.eq.f32.partialorder %v832, 8.507059e+37
    %v834 = vand.u32 %v822, 2147483648
    %v835 = vor.u32 1.1754944e-38, %v834
    %v836 = vsel %vm833, %v835, %v831
    %v837 = vmul.f32 %v812, %v836
    %v838 = vmin.f32 %v837, 1.0
    %v839 = vmax.f32 %v838, -1.0
    %v840 = vmul.f32 %v340, %v340
    %v841 = vmin.f32 16.0, %v840
    %v842 = vmul.f32 %v841, 2.1237322e-06
    %v843 = vadd.f32 %v842, 0.00028619796
    %v844 = vmul.f32 %v841, %v843
    %v845 = vadd.f32 %v844, 0.0036580483
    %v846 = vmul.f32 %v841, %v845
    %v847 = vadd.f32 %v846, 0.05243302
    %v848 = vmul.f32 %v841, %v847
    %v849 = vadd.f32 %v848, 0.18741608
    %v850 = vmul.f32 %v841, %v849
    %v851 = vadd.f32 %v850, 1.1283791
    %v852 = vmul.f32 %v340, %v851
    %v853 = vmul.f32 %v841, 3.8918573e-05
    %v854 = vadd.f32 %v853, 0.001143296
    %v855 = vmul.f32 %v841, %v854
    %v856 = vadd.f32 %v855, 0.014752088
    %v857 = vmul.f32 %v841, %v856
    %v858 = vadd.f32 %v857, 0.112945676
    %v859 = vmul.f32 %v841, %v858
    %v860 = vadd.f32 %v859, 0.4994258
    %v861 = vmul.f32 %v841, %v860
    %v862 = vadd.f32 %v861, 1.0
    %v863 = vrcp.pop %v862
    %v864 = vmul.f32 %v862, %v863
    %v865 = vsub.f32 1.0, %v864
    %v866 = vmul.f32 %v863, %v865
    %v867 = vadd.f32 %v863, %v866
    %vm868 = vweird.f32 %v862
    %vm869 = vweird.f32 %v863
    %vm870 = vmor %vm868, %vm869
    %v871 = vsel %vm870, %v863, %v867
    %v872 = vand.u32 2147483647, %v862
    %vm873 = vcmp.eq.f32.partialorder %v872, 8.507059e+37
    %v874 = vand.u32 %v862, 2147483648
    %v875 = vor.u32 1.1754944e-38, %v874
    %v876 = vsel %vm873, %v875, %v871
    %v877 = vmul.f32 %v852, %v876
    %v878 = vmin.f32 %v877, 1.0
    %v879 = vmax.f32 %v878, -1.0
    %v880 = vmul.f32 %v341, %v341
    %v881 = vmin.f32 16.0, %v880
    %v882 = vmul.f32 %v881, 2.1237322e-06
    %v883 = vadd.f32 %v882, 0.00028619796
    %v884 = vmul.f32 %v881, %v883
    %v885 = vadd.f32 %v884, 0.0036580483
    %v886 = vmul.f32 %v881, %v885
    %v887 = vadd.f32 %v886, 0.05243302
    %v888 = vmul.f32 %v881, %v887
    %v889 = vadd.f32 %v888, 0.18741608
    %v890 = vmul.f32 %v881, %v889
    %v891 = vadd.f32 %v890, 1.1283791
    %v892 = vmul.f32 %v341, %v891
    %v893 = vmul.f32 %v881, 3.8918573e-05
    %v894 = vadd.f32 %v893, 0.001143296
    %v895 = vmul.f32 %v881, %v894
    %v896 = vadd.f32 %v895, 0.014752088
    %v897 = vmul.f32 %v881, %v896
    %v898 = vadd.f32 %v897, 0.112945676
    %v899 = vmul.f32 %v881, %v898
    %v900 = vadd.f32 %v899, 0.4994258
    %v901 = vmul.f32 %v881, %v900
    %v902 = vadd.f32 %v901, 1.0
    %v903 = vrcp.pop %v902
    %v904 = vmul.f32 %v902, %v903
    %v905 = vsub.f32 1.0, %v904
    %v906 = vmul.f32 %v903, %v905
    %v907 = vadd.f32 %v903, %v906
    %vm908 = vweird.f32 %v902
    %vm909 = vweird.f32 %v903
    %vm910 = vmor %vm908, %vm909
    %v911 = vsel %vm910, %v903, %v907
    %v912 = vand.u32 2147483647, %v902
    %vm913 = vcmp.eq.f32.partialorder %v912, 8.507059e+37
    %v914 = vand.u32 %v902, 2147483648
    %v915 = vor.u32 1.1754944e-38, %v914
    %v916 = vsel %vm913, %v915, %v911
    %v917 = vmul.f32 %v892, %v916
    %v918 = vmin.f32 %v917, 1.0
    %v919 = vmax.f32 %v918, -1.0
    %v920 = vmul.f32 %v342, %v342
    %v921 = vmin.f32 16.0, %v920
    %v922 = vmul.f32 %v921, 2.1237322e-06
    %v923 = vadd.f32 %v922, 0.00028619796
    %v924 = vmul.f32 %v921, %v923
    %v925 = vadd.f32 %v924, 0.0036580483
    %v926 = vmul.f32 %v921, %v925
    %v927 = vadd.f32 %v926, 0.05243302
    %v928 = vmul.f32 %v921, %v927
    %v929 = vadd.f32 %v928, 0.18741608
    %v930 = vmul.f32 %v921, %v929
    %v931 = vadd.f32 %v930, 1.1283791
    %v932 = vmul.f32 %v342, %v931
    %v933 = vmul.f32 %v921, 3.8918573e-05
    %v934 = vadd.f32 %v933, 0.001143296
    %v935 = vmul.f32 %v921, %v934
    %v936 = vadd.f32 %v935, 0.014752088
    %v937 = vmul.f32 %v921, %v936
    %v938 = vadd.f32 %v937, 0.112945676
    %v939 = vmul.f32 %v921, %v938
    %v940 = vadd.f32 %v939, 0.4994258
    %v941 = vmul.f32 %v921, %v940
    %v942 = vadd.f32 %v941, 1.0
    %v943 = vrcp.pop %v942
    %v944 = vmul.f32 %v942, %v943
    %v945 = vsub.f32 1.0, %v944
    %v946 = vmul.f32 %v943, %v945
    %v947 = vadd.f32 %v943, %v946
    %vm948 = vweird.f32 %v942
    %vm949 = vweird.f32 %v943
    %vm950 = vmor %vm948, %vm949
    %v951 = vsel %vm950, %v943, %v947
    %v952 = vand.u32 2147483647, %v942
    %vm953 = vcmp.eq.f32.partialorder %v952, 8.507059e+37
    %v954 = vand.u32 %v942, 2147483648
    %v955 = vor.u32 1.1754944e-38, %v954
    %v956 = vsel %vm953, %v955, %v951
    %v957 = vmul.f32 %v932, %v956
    %v958 = vmin.f32 %v957, 1.0
    %v959 = vmax.f32 %v958, -1.0
    %v960 = vmul.f32 %v343, %v343
    %v961 = vmin.f32 16.0, %v960
    %v962 = vmul.f32 %v961, 2.1237322e-06
    %v963 = vadd.f32 %v962, 0.00028619796
    %v964 = vmul.f32 %v961, %v963
    %v965 = vadd.f32 %v964, 0.0036580483
    %v966 = vmul.f32 %v961, %v965
    %v967 = vadd.f32 %v966, 0.05243302
    %v968 = vmul.f32 %v961, %v967
    %v969 = vadd.f32 %v968, 0.18741608
    %v970 = vmul.f32 %v961, %v969
    %v971 = vadd.f32 %v970, 1.1283791
    %v972 = vmul.f32 %v343, %v971
    %v973 = vmul.f32 %v961, 3.8918573e-05
    %v974 = vadd.f32 %v973, 0.001143296
    %v975 = vmul.f32 %v961, %v974
    %v976 = vadd.f32 %v975, 0.014752088
    %v977 = vmul.f32 %v961, %v976
    %v978 = vadd.f32 %v977, 0.112945676
    %v979 = vmul.f32 %v961, %v978
    %v980 = vadd.f32 %v979, 0.4994258
    %v981 = vmul.f32 %v961, %v980
    %v982 = vadd.f32 %v981, 1.0
    %v983 = vrcp.pop %v982
    %v984 = vmul.f32 %v982, %v983
    %v985 = vsub.f32 1.0, %v984
    %v986 = vmul.f32 %v983, %v985
    %v987 = vadd.f32 %v983, %v986
    %vm988 = vweird.f32 %v982
    %vm989 = vweird.f32 %v983
    %vm990 = vmor %vm988, %vm989
    %v991 = vsel %vm990, %v983, %v987
    %v992 = vand.u32 2147483647, %v982
    %vm993 = vcmp.eq.f32.partialorder %v992, 8.507059e+37
    %v994 = vand.u32 %v982, 2147483648
    %v995 = vor.u32 1.1754944e-38, %v994
    %v996 = vsel %vm993, %v995, %v991
    %v997 = vmul.f32 %v972, %v996
    %v998 = vmin.f32 %v997, 1.0
    %v999 = vmax.f32 %v998, -1.0
    %v1000 = vmul.f32 %v344, %v344
    %v1001 = vmin.f32 16.0, %v1000
    %v1002 = vmul.f32 %v1001, 2.1237322e-06
    %v1003 = vadd.f32 %v1002, 0.00028619796
    %v1004 = vmul.f32 %v1001, %v1003
    %v1005 = vadd.f32 %v1004, 0.0036580483
    %v1006 = vmul.f32 %v1001, %v1005
    %v1007 = vadd.f32 %v1006, 0.05243302
    %v1008 = vmul.f32 %v1001, %v1007
    %v1009 = vadd.f32 %v1008, 0.18741608
    %v1010 = vmul.f32 %v1001, %v1009
    %v1011 = vadd.f32 %v1010, 1.1283791
    %v1012 = vmul.f32 %v344, %v1011
    %v1013 = vmul.f32 %v1001, 3.8918573e-05
    %v1014 = vadd.f32 %v1013, 0.001143296
    %v1015 = vmul.f32 %v1001, %v1014
    %v1016 = vadd.f32 %v1015, 0.014752088
    %v1017 = vmul.f32 %v1001, %v1016
    %v1018 = vadd.f32 %v1017, 0.112945676
    %v1019 = vmul.f32 %v1001, %v1018
    %v1020 = vadd.f32 %v1019, 0.4994258
    %v1021 = vmul.f32 %v1001, %v1020
    %v1022 = vadd.f32 %v1021, 1.0
    %v1023 = vrcp.pop %v1022
    %v1024 = vmul.f32 %v1022, %v1023
    %v1025 = vsub.f32 1.0, %v1024
    %v1026 = vmul.f32 %v1023, %v1025
    %v1027 = vadd.f32 %v1023, %v1026
    %vm1028 = vweird.f32 %v1022
    %vm1029 = vweird.f32 %v1023
    %vm1030 = vmor %vm1028, %vm1029
    %v1031 = vsel %vm1030, %v1023, %v1027
    %v1032 = vand.u32 2147483647, %v1022
    %vm1033 = vcmp.eq.f32.partialorder %v1032, 8.507059e+37
    %v1034 = vand.u32 %v1022, 2147483648
    %v1035 = vor.u32 1.1754944e-38, %v1034
    %v1036 = vsel %vm1033, %v1035, %v1031
    %v1037 = vmul.f32 %v1012, %v1036
    %v1038 = vmin.f32 %v1037, 1.0
    %v1039 = vmax.f32 %v1038, -1.0
    %v1040 = vmul.f32 %v345, %v345
    %v1041 = vmin.f32 16.0, %v1040
    %v1042 = vmul.f32 %v1041, 2.1237322e-06
    %v1043 = vadd.f32 %v1042, 0.00028619796
    %v1044 = vmul.f32 %v1041, %v1043
    %v1045 = vadd.f32 %v1044, 0.0036580483
    %v1046 = vmul.f32 %v1041, %v1045
    %v1047 = vadd.f32 %v1046, 0.05243302
    %v1048 = vmul.f32 %v1041, %v1047
    %v1049 = vadd.f32 %v1048, 0.18741608
    %v1050 = vmul.f32 %v1041, %v1049
    %v1051 = vadd.f32 %v1050, 1.1283791
    %v1052 = vmul.f32 %v345, %v1051
    %v1053 = vmul.f32 %v1041, 3.8918573e-05
    %v1054 = vadd.f32 %v1053, 0.001143296
    %v1055 = vmul.f32 %v1041, %v1054
    %v1056 = vadd.f32 %v1055, 0.014752088
    %v1057 = vmul.f32 %v1041, %v1056
    %v1058 = vadd.f32 %v1057, 0.112945676
    %v1059 = vmul.f32 %v1041, %v1058
    %v1060 = vadd.f32 %v1059, 0.4994258
    %v1061 = vmul.f32 %v1041, %v1060
    %v1062 = vadd.f32 %v1061, 1.0
    %v1063 = vrcp.pop %v1062
    %v1064 = vmul.f32 %v1062, %v1063
    %v1065 = vsub.f32 1.0, %v1064
    %v1066 = vmul.f32 %v1063, %v1065
    %v1067 = vadd.f32 %v1063, %v1066
    %vm1068 = vweird.f32 %v1062
    %vm1069 = vweird.f32 %v1063
    %vm1070 = vmor %vm1068, %vm1069
    %v1071 = vsel %vm1070, %v1063, %v1067
    %v1072 = vand.u32 2147483647, %v1062
    %vm1073 = vcmp.eq.f32.partialorder %v1072, 8.507059e+37
    %v1074 = vand.u32 %v1062, 2147483648
    %v1075 = vor.u32 1.1754944e-38, %v1074
    %v1076 = vsel %vm1073, %v1075, %v1071
    %v1077 = vmul.f32 %v1052, %v1076
    %v1078 = vmin.f32 %v1077, 1.0
    %v1079 = vmax.f32 %v1078, -1.0
    %v1080 = vmul.f32 %v346, %v346
    %v1081 = vmin.f32 16.0, %v1080
    %v1082 = vmul.f32 %v1081, 2.1237322e-06
    %v1083 = vadd.f32 %v1082, 0.00028619796
    %v1084 = vmul.f32 %v1081, %v1083
    %v1085 = vadd.f32 %v1084, 0.0036580483
    %v1086 = vmul.f32 %v1081, %v1085
    %v1087 = vadd.f32 %v1086, 0.05243302
    %v1088 = vmul.f32 %v1081, %v1087
    %v1089 = vadd.f32 %v1088, 0.18741608
    %v1090 = vmul.f32 %v1081, %v1089
    %v1091 = vadd.f32 %v1090, 1.1283791
    %v1092 = vmul.f32 %v346, %v1091
    %v1093 = vmul.f32 %v1081, 3.8918573e-05
    %v1094 = vadd.f32 %v1093, 0.001143296
    %v1095 = vmul.f32 %v1081, %v1094
    %v1096 = vadd.f32 %v1095, 0.014752088
    %v1097 = vmul.f32 %v1081, %v1096
    %v1098 = vadd.f32 %v1097, 0.112945676
    %v1099 = vmul.f32 %v1081, %v1098
    %v1100 = vadd.f32 %v1099, 0.4994258
    %v1101 = vmul.f32 %v1081, %v1100
    %v1102 = vadd.f32 %v1101, 1.0
    %v1103 = vrcp.pop %v1102
    %v1104 = vmul.f32 %v1102, %v1103
    %v1105 = vsub.f32 1.0, %v1104
    %v1106 = vmul.f32 %v1103, %v1105
    %v1107 = vadd.f32 %v1103, %v1106
    %vm1108 = vweird.f32 %v1102
    %vm1109 = vweird.f32 %v1103
    %vm1110 = vmor %vm1108, %vm1109
    %v1111 = vsel %vm1110, %v1103, %v1107
    %v1112 = vand.u32 2147483647, %v1102
    %vm1113 = vcmp.eq.f32.partialorder %v1112, 8.507059e+37
    %v1114 = vand.u32 %v1102, 2147483648
    %v1115 = vor.u32 1.1754944e-38, %v1114
    %v1116 = vsel %vm1113, %v1115, %v1111
    %v1117 = vmul.f32 %v1092, %v1116
    %v1118 = vmin.f32 %v1117, 1.0
    %v1119 = vmax.f32 %v1118, -1.0
    %v1120 = vmul.f32 %v347, %v347
    %v1121 = vmin.f32 16.0, %v1120
    %v1122 = vmul.f32 %v1121, 2.1237322e-06
    %v1123 = vadd.f32 %v1122, 0.00028619796
    %v1124 = vmul.f32 %v1121, %v1123
    %v1125 = vadd.f32 %v1124, 0.0036580483
    %v1126 = vmul.f32 %v1121, %v1125
    %v1127 = vadd.f32 %v1126, 0.05243302
    %v1128 = vmul.f32 %v1121, %v1127
    %v1129 = vadd.f32 %v1128, 0.18741608
    %v1130 = vmul.f32 %v1121, %v1129
    %v1131 = vadd.f32 %v1130, 1.1283791
    %v1132 = vmul.f32 %v347, %v1131
    %v1133 = vmul.f32 %v1121, 3.8918573e-05
    %v1134 = vadd.f32 %v1133, 0.001143296
    %v1135 = vmul.f32 %v1121, %v1134
    %v1136 = vadd.f32 %v1135, 0.014752088
    %v1137 = vmul.f32 %v1121, %v1136
    %v1138 = vadd.f32 %v1137, 0.112945676
    %v1139 = vmul.f32 %v1121, %v1138
    %v1140 = vadd.f32 %v1139, 0.4994258
    %v1141 = vmul.f32 %v1121, %v1140
    %v1142 = vadd.f32 %v1141, 1.0
    %v1143 = vrcp.pop %v1142
    %v1144 = vmul.f32 %v1142, %v1143
    %v1145 = vsub.f32 1.0, %v1144
    %v1146 = vmul.f32 %v1143, %v1145
    %v1147 = vadd.f32 %v1143, %v1146
    %vm1148 = vweird.f32 %v1142
    %vm1149 = vweird.f32 %v1143
    %vm1150 = vmor %vm1148, %vm1149
    %v1151 = vsel %vm1150, %v1143, %v1147
    %v1152 = vand.u32 2147483647, %v1142
    %vm1153 = vcmp.eq.f32.partialorder %v1152, 8.507059e+37
    %v1154 = vand.u32 %v1142, 2147483648
    %v1155 = vor.u32 1.1754944e-38, %v1154
    %v1156 = vsel %vm1153, %v1155, %v1151
    %v1157 = vmul.f32 %v1132, %v1156
    %v1158 = vmin.f32 %v1157, 1.0
    %v1159 = vmax.f32 %v1158, -1.0
    %v1160 = vmul.f32 %v348, %v348
    %v1161 = vmin.f32 16.0, %v1160
    %v1162 = vmul.f32 %v1161, 2.1237322e-06
    %v1163 = vadd.f32 %v1162, 0.00028619796
    %v1164 = vmul.f32 %v1161, %v1163
    %v1165 = vadd.f32 %v1164, 0.0036580483
    %v1166 = vmul.f32 %v1161, %v1165
    %v1167 = vadd.f32 %v1166, 0.05243302
    %v1168 = vmul.f32 %v1161, %v1167
    %v1169 = vadd.f32 %v1168, 0.18741608
    %v1170 = vmul.f32 %v1161, %v1169
    %v1171 = vadd.f32 %v1170, 1.1283791
    %v1172 = vmul.f32 %v348, %v1171
    %v1173 = vmul.f32 %v1161, 3.8918573e-05
    %v1174 = vadd.f32 %v1173, 0.001143296
    %v1175 = vmul.f32 %v1161, %v1174
    %v1176 = vadd.f32 %v1175, 0.014752088
    %v1177 = vmul.f32 %v1161, %v1176
    %v1178 = vadd.f32 %v1177, 0.112945676
    %v1179 = vmul.f32 %v1161, %v1178
    %v1180 = vadd.f32 %v1179, 0.4994258
    %v1181 = vmul.f32 %v1161, %v1180
    %v1182 = vadd.f32 %v1181, 1.0
    %v1183 = vrcp.pop %v1182
    %v1184 = vmul.f32 %v1182, %v1183
    %v1185 = vsub.f32 1.0, %v1184
    %v1186 = vmul.f32 %v1183, %v1185
    %v1187 = vadd.f32 %v1183, %v1186
    %vm1188 = vweird.f32 %v1182
    %vm1189 = vweird.f32 %v1183
    %vm1190 = vmor %vm1188, %vm1189
    %v1191 = vsel %vm1190, %v1183, %v1187
    %v1192 = vand.u32 2147483647, %v1182
    %vm1193 = vcmp.eq.f32.partialorder %v1192, 8.507059e+37
    %v1194 = vand.u32 %v1182, 2147483648
    %v1195 = vor.u32 1.1754944e-38, %v1194
    %v1196 = vsel %vm1193, %v1195, %v1191
    %v1197 = vmul.f32 %v1172, %v1196
    %v1198 = vmin.f32 %v1197, 1.0
    %v1199 = vmax.f32 %v1198, -1.0
    %v1200 = vmul.f32 %v349, %v349
    %v1201 = vmin.f32 16.0, %v1200
    %v1202 = vmul.f32 %v1201, 2.1237322e-06
    %v1203 = vadd.f32 %v1202, 0.00028619796
    %v1204 = vmul.f32 %v1201, %v1203
    %v1205 = vadd.f32 %v1204, 0.0036580483
    %v1206 = vmul.f32 %v1201, %v1205
    %v1207 = vadd.f32 %v1206, 0.05243302
    %v1208 = vmul.f32 %v1201, %v1207
    %v1209 = vadd.f32 %v1208, 0.18741608
    %v1210 = vmul.f32 %v1201, %v1209
    %v1211 = vadd.f32 %v1210, 1.1283791
    %v1212 = vmul.f32 %v349, %v1211
    %v1213 = vmul.f32 %v1201, 3.8918573e-05
    %v1214 = vadd.f32 %v1213, 0.001143296
    %v1215 = vmul.f32 %v1201, %v1214
    %v1216 = vadd.f32 %v1215, 0.014752088
    %v1217 = vmul.f32 %v1201, %v1216
    %v1218 = vadd.f32 %v1217, 0.112945676
    %v1219 = vmul.f32 %v1201, %v1218
    %v1220 = vadd.f32 %v1219, 0.4994258
    %v1221 = vmul.f32 %v1201, %v1220
    %v1222 = vadd.f32 %v1221, 1.0
    %v1223 = vrcp.pop %v1222
    %v1224 = vmul.f32 %v1222, %v1223
    %v1225 = vsub.f32 1.0, %v1224
    %v1226 = vmul.f32 %v1223, %v1225
    %v1227 = vadd.f32 %v1223, %v1226
    %vm1228 = vweird.f32 %v1222
    %vm1229 = vweird.f32 %v1223
    %vm1230 = vmor %vm1228, %vm1229
    %v1231 = vsel %vm1230, %v1223, %v1227
    %v1232 = vand.u32 2147483647, %v1222
    %vm1233 = vcmp.eq.f32.partialorder %v1232, 8.507059e+37
    %v1234 = vand.u32 %v1222, 2147483648
    %v1235 = vor.u32 1.1754944e-38, %v1234
    %v1236 = vsel %vm1233, %v1235, %v1231
    %v1237 = vmul.f32 %v1212, %v1236
    %v1238 = vmin.f32 %v1237, 1.0
    %v1239 = vmax.f32 %v1238, -1.0
    %v1240 = vmul.f32 %v350, %v350
    %v1241 = vmin.f32 16.0, %v1240
    %v1242 = vmul.f32 %v1241, 2.1237322e-06
    %v1243 = vadd.f32 %v1242, 0.00028619796
    %v1244 = vmul.f32 %v1241, %v1243
    %v1245 = vadd.f32 %v1244, 0.0036580483
    %v1246 = vmul.f32 %v1241, %v1245
    %v1247 = vadd.f32 %v1246, 0.05243302
    %v1248 = vmul.f32 %v1241, %v1247
    %v1249 = vadd.f32 %v1248, 0.18741608
    %v1250 = vmul.f32 %v1241, %v1249
    %v1251 = vadd.f32 %v1250, 1.1283791
    %v1252 = vmul.f32 %v350, %v1251
    %v1253 = vmul.f32 %v1241, 3.8918573e-05
    %v1254 = vadd.f32 %v1253, 0.001143296
    %v1255 = vmul.f32 %v1241, %v1254
    %v1256 = vadd.f32 %v1255, 0.014752088
    %v1257 = vmul.f32 %v1241, %v1256
    %v1258 = vadd.f32 %v1257, 0.112945676
    %v1259 = vmul.f32 %v1241, %v1258
    %v1260 = vadd.f32 %v1259, 0.4994258
    %v1261 = vmul.f32 %v1241, %v1260
    %v1262 = vadd.f32 %v1261, 1.0
    %v1263 = vrcp.pop %v1262
    %v1264 = vmul.f32 %v1262, %v1263
    %v1265 = vsub.f32 1.0, %v1264
    %v1266 = vmul.f32 %v1263, %v1265
    %v1267 = vadd.f32 %v1263, %v1266
    %vm1268 = vweird.f32 %v1262
    %vm1269 = vweird.f32 %v1263
    %vm1270 = vmor %vm1268, %vm1269
    %v1271 = vsel %vm1270, %v1263, %v1267
    %v1272 = vand.u32 2147483647, %v1262
    %vm1273 = vcmp.eq.f32.partialorder %v1272, 8.507059e+37
    %v1274 = vand.u32 %v1262, 2147483648
    %v1275 = vor.u32 1.1754944e-38, %v1274
    %v1276 = vsel %vm1273, %v1275, %v1271
    %v1277 = vmul.f32 %v1252, %v1276
    %v1278 = vmin.f32 %v1277, 1.0
    %v1279 = vmax.f32 %v1278, -1.0
    %v1280 = vmul.f32 %v351, %v351
    %v1281 = vmin.f32 16.0, %v1280
    %v1282 = vmul.f32 %v1281, 2.1237322e-06
    %v1283 = vadd.f32 %v1282, 0.00028619796
    %v1284 = vmul.f32 %v1281, %v1283
    %v1285 = vadd.f32 %v1284, 0.0036580483
    %v1286 = vmul.f32 %v1281, %v1285
    %v1287 = vadd.f32 %v1286, 0.05243302
    %v1288 = vmul.f32 %v1281, %v1287
    %v1289 = vadd.f32 %v1288, 0.18741608
    %v1290 = vmul.f32 %v1281, %v1289
    %v1291 = vadd.f32 %v1290, 1.1283791
    %v1292 = vmul.f32 %v351, %v1291
    %v1293 = vmul.f32 %v1281, 3.8918573e-05
    %v1294 = vadd.f32 %v1293, 0.001143296
    %v1295 = vmul.f32 %v1281, %v1294
    %v1296 = vadd.f32 %v1295, 0.014752088
    %v1297 = vmul.f32 %v1281, %v1296
    %v1298 = vadd.f32 %v1297, 0.112945676
    %v1299 = vmul.f32 %v1281, %v1298
    %v1300 = vadd.f32 %v1299, 0.4994258
    %v1301 = vmul.f32 %v1281, %v1300
    %v1302 = vadd.f32 %v1301, 1.0
    %v1303 = vrcp.pop %v1302
    %v1304 = vmul.f32 %v1302, %v1303
    %v1305 = vsub.f32 1.0, %v1304
    %v1306 = vmul.f32 %v1303, %v1305
    %v1307 = vadd.f32 %v1303, %v1306
    %vm1308 = vweird.f32 %v1302
    %vm1309 = vweird.f32 %v1303
    %vm1310 = vmor %vm1308, %vm1309
    %v1311 = vsel %vm1310, %v1303, %v1307
    %v1312 = vand.u32 2147483647, %v1302
    %vm1313 = vcmp.eq.f32.partialorder %v1312, 8.507059e+37
    %v1314 = vand.u32 %v1302, 2147483648
    %v1315 = vor.u32 1.1754944e-38, %v1314
    %v1316 = vsel %vm1313, %v1315, %v1311
    %v1317 = vmul.f32 %v1292, %v1316
    %v1318 = vmin.f32 %v1317, 1.0
    %v1319 = vmax.f32 %v1318, -1.0
    %v1320 = vmul.f32 %v352, %v352
    %v1321 = vmin.f32 16.0, %v1320
    %v1322 = vmul.f32 %v1321, 2.1237322e-06
    %v1323 = vadd.f32 %v1322, 0.00028619796
    %v1324 = vmul.f32 %v1321, %v1323
    %v1325 = vadd.f32 %v1324, 0.0036580483
    %v1326 = vmul.f32 %v1321, %v1325
    %v1327 = vadd.f32 %v1326, 0.05243302
    %v1328 = vmul.f32 %v1321, %v1327
    %v1329 = vadd.f32 %v1328, 0.18741608
    %v1330 = vmul.f32 %v1321, %v1329
    %v1331 = vadd.f32 %v1330, 1.1283791
    %v1332 = vmul.f32 %v352, %v1331
    %v1333 = vmul.f32 %v1321, 3.8918573e-05
    %v1334 = vadd.f32 %v1333, 0.001143296
    %v1335 = vmul.f32 %v1321, %v1334
    %v1336 = vadd.f32 %v1335, 0.014752088
    %v1337 = vmul.f32 %v1321, %v1336
    %v1338 = vadd.f32 %v1337, 0.112945676
    %v1339 = vmul.f32 %v1321, %v1338
    %v1340 = vadd.f32 %v1339, 0.4994258
    %v1341 = vmul.f32 %v1321, %v1340
    %v1342 = vadd.f32 %v1341, 1.0
    %v1343 = vrcp.pop %v1342
    %v1344 = vmul.f32 %v1342, %v1343
    %v1345 = vsub.f32 1.0, %v1344
    %v1346 = vmul.f32 %v1343, %v1345
    %v1347 = vadd.f32 %v1343, %v1346
    %vm1348 = vweird.f32 %v1342
    %vm1349 = vweird.f32 %v1343
    %vm1350 = vmor %vm1348, %vm1349
    %v1351 = vsel %vm1350, %v1343, %v1347
    %v1352 = vand.u32 2147483647, %v1342
    %vm1353 = vcmp.eq.f32.partialorder %v1352, 8.507059e+37
    %v1354 = vand.u32 %v1342, 2147483648
    %v1355 = vor.u32 1.1754944e-38, %v1354
    %v1356 = vsel %vm1353, %v1355, %v1351
    %v1357 = vmul.f32 %v1332, %v1356
    %v1358 = vmin.f32 %v1357, 1.0
    %v1359 = vmax.f32 %v1358, -1.0
    %v1360 = vmul.f32 %v353, %v353
    %v1361 = vmin.f32 16.0, %v1360
    %v1362 = vmul.f32 %v1361, 2.1237322e-06
    %v1363 = vadd.f32 %v1362, 0.00028619796
    %v1364 = vmul.f32 %v1361, %v1363
    %v1365 = vadd.f32 %v1364, 0.0036580483
    %v1366 = vmul.f32 %v1361, %v1365
    %v1367 = vadd.f32 %v1366, 0.05243302
    %v1368 = vmul.f32 %v1361, %v1367
    %v1369 = vadd.f32 %v1368, 0.18741608
    %v1370 = vmul.f32 %v1361, %v1369
    %v1371 = vadd.f32 %v1370, 1.1283791
    %v1372 = vmul.f32 %v353, %v1371
    %v1373 = vmul.f32 %v1361, 3.8918573e-05
    %v1374 = vadd.f32 %v1373, 0.001143296
    %v1375 = vmul.f32 %v1361, %v1374
    %v1376 = vadd.f32 %v1375, 0.014752088
    %v1377 = vmul.f32 %v1361, %v1376
    %v1378 = vadd.f32 %v1377, 0.112945676
    %v1379 = vmul.f32 %v1361, %v1378
    %v1380 = vadd.f32 %v1379, 0.4994258
    %v1381 = vmul.f32 %v1361, %v1380
    %v1382 = vadd.f32 %v1381, 1.0
    %v1383 = vrcp.pop %v1382
    %v1384 = vmul.f32 %v1382, %v1383
    %v1385 = vsub.f32 1.0, %v1384
    %v1386 = vmul.f32 %v1383, %v1385
    %v1387 = vadd.f32 %v1383, %v1386
    %vm1388 = vweird.f32 %v1382
    %vm1389 = vweird.f32 %v1383
    %vm1390 = vmor %vm1388, %vm1389
    %v1391 = vsel %vm1390, %v1383, %v1387
    %v1392 = vand.u32 2147483647, %v1382
    %vm1393 = vcmp.eq.f32.partialorder %v1392, 8.507059e+37
    %v1394 = vand.u32 %v1382, 2147483648
    %v1395 = vor.u32 1.1754944e-38, %v1394
    %v1396 = vsel %vm1393, %v1395, %v1391
    %v1397 = vmul.f32 %v1372, %v1396
    %v1398 = vmin.f32 %v1397, 1.0
    %v1399 = vmax.f32 %v1398, -1.0
    %v1400 = vmul.f32 %v354, %v354
    %v1401 = vmin.f32 16.0, %v1400
    %v1402 = vmul.f32 %v1401, 2.1237322e-06
    %v1403 = vadd.f32 %v1402, 0.00028619796
    %v1404 = vmul.f32 %v1401, %v1403
    %v1405 = vadd.f32 %v1404, 0.0036580483
    %v1406 = vmul.f32 %v1401, %v1405
    %v1407 = vadd.f32 %v1406, 0.05243302
    %v1408 = vmul.f32 %v1401, %v1407
    %v1409 = vadd.f32 %v1408, 0.18741608
    %v1410 = vmul.f32 %v1401, %v1409
    %v1411 = vadd.f32 %v1410, 1.1283791
    %v1412 = vmul.f32 %v354, %v1411
    %v1413 = vmul.f32 %v1401, 3.8918573e-05
    %v1414 = vadd.f32 %v1413, 0.001143296
    %v1415 = vmul.f32 %v1401, %v1414
    %v1416 = vadd.f32 %v1415, 0.014752088
    %v1417 = vmul.f32 %v1401, %v1416
    %v1418 = vadd.f32 %v1417, 0.112945676
    %v1419 = vmul.f32 %v1401, %v1418
    %v1420 = vadd.f32 %v1419, 0.4994258
    %v1421 = vmul.f32 %v1401, %v1420
    %v1422 = vadd.f32 %v1421, 1.0
    %v1423 = vrcp.pop %v1422
    %v1424 = vmul.f32 %v1422, %v1423
    %v1425 = vsub.f32 1.0, %v1424
    %v1426 = vmul.f32 %v1423, %v1425
    %v1427 = vadd.f32 %v1423, %v1426
    %vm1428 = vweird.f32 %v1422
    %vm1429 = vweird.f32 %v1423
    %vm1430 = vmor %vm1428, %vm1429
    %v1431 = vsel %vm1430, %v1423, %v1427
    %v1432 = vand.u32 2147483647, %v1422
    %vm1433 = vcmp.eq.f32.partialorder %v1432, 8.507059e+37
    %v1434 = vand.u32 %v1422, 2147483648
    %v1435 = vor.u32 1.1754944e-38, %v1434
    %v1436 = vsel %vm1433, %v1435, %v1431
    %v1437 = vmul.f32 %v1412, %v1436
    %v1438 = vmin.f32 %v1437, 1.0
    %v1439 = vmax.f32 %v1438, -1.0
    %v1440 = vmul.f32 %v355, %v355
    %v1441 = vmin.f32 16.0, %v1440
    %v1442 = vmul.f32 %v1441, 2.1237322e-06
    %v1443 = vadd.f32 %v1442, 0.00028619796
    %v1444 = vmul.f32 %v1441, %v1443
    %v1445 = vadd.f32 %v1444, 0.0036580483
    %v1446 = vmul.f32 %v1441, %v1445
    %v1447 = vadd.f32 %v1446, 0.05243302
    %v1448 = vmul.f32 %v1441, %v1447
    %v1449 = vadd.f32 %v1448, 0.18741608
    %v1450 = vmul.f32 %v1441, %v1449
    %v1451 = vadd.f32 %v1450, 1.1283791
    %v1452 = vmul.f32 %v355, %v1451
    %v1453 = vmul.f32 %v1441, 3.8918573e-05
    %v1454 = vadd.f32 %v1453, 0.001143296
    %v1455 = vmul.f32 %v1441, %v1454
    %v1456 = vadd.f32 %v1455, 0.014752088
    %v1457 = vmul.f32 %v1441, %v1456
    %v1458 = vadd.f32 %v1457, 0.112945676
    %v1459 = vmul.f32 %v1441, %v1458
    %v1460 = vadd.f32 %v1459, 0.4994258
    %v1461 = vmul.f32 %v1441, %v1460
    %v1462 = vadd.f32 %v1461, 1.0
    %v1463 = vrcp.pop %v1462
    %v1464 = vmul.f32 %v1462, %v1463
    %v1465 = vsub.f32 1.0, %v1464
    %v1466 = vmul.f32 %v1463, %v1465
    %v1467 = vadd.f32 %v1463, %v1466
    %vm1468 = vweird.f32 %v1462
    %vm1469 = vweird.f32 %v1463
    %vm1470 = vmor %vm1468, %vm1469
    %v1471 = vsel %vm1470, %v1463, %v1467
    %v1472 = vand.u32 2147483647, %v1462
    %vm1473 = vcmp.eq.f32.partialorder %v1472, 8.507059e+37
    %v1474 = vand.u32 %v1462, 2147483648
    %v1475 = vor.u32 1.1754944e-38, %v1474
    %v1476 = vsel %vm1473, %v1475, %v1471
    %v1477 = vmul.f32 %v1452, %v1476
    %v1478 = vmin.f32 %v1477, 1.0
    %v1479 = vmax.f32 %v1478, -1.0
    %v1480 = vmul.f32 %v356, %v356
    %v1481 = vmin.f32 16.0, %v1480
    %v1482 = vmul.f32 %v1481, 2.1237322e-06
    %v1483 = vadd.f32 %v1482, 0.00028619796
    %v1484 = vmul.f32 %v1481, %v1483
    %v1485 = vadd.f32 %v1484, 0.0036580483
    %v1486 = vmul.f32 %v1481, %v1485
    %v1487 = vadd.f32 %v1486, 0.05243302
    %v1488 = vmul.f32 %v1481, %v1487
    %v1489 = vadd.f32 %v1488, 0.18741608
    %v1490 = vmul.f32 %v1481, %v1489
    %v1491 = vadd.f32 %v1490, 1.1283791
    %v1492 = vmul.f32 %v356, %v1491
    %v1493 = vmul.f32 %v1481, 3.8918573e-05
    %v1494 = vadd.f32 %v1493, 0.001143296
    %v1495 = vmul.f32 %v1481, %v1494
    %v1496 = vadd.f32 %v1495, 0.014752088
    %v1497 = vmul.f32 %v1481, %v1496
    %v1498 = vadd.f32 %v1497, 0.112945676
    %v1499 = vmul.f32 %v1481, %v1498
    %v1500 = vadd.f32 %v1499, 0.4994258
    %v1501 = vmul.f32 %v1481, %v1500
    %v1502 = vadd.f32 %v1501, 1.0
    %v1503 = vrcp.pop %v1502
    %v1504 = vmul.f32 %v1502, %v1503
    %v1505 = vsub.f32 1.0, %v1504
    %v1506 = vmul.f32 %v1503, %v1505
    %v1507 = vadd.f32 %v1503, %v1506
    %vm1508 = vweird.f32 %v1502
    %vm1509 = vweird.f32 %v1503
    %vm1510 = vmor %vm1508, %vm1509
    %v1511 = vsel %vm1510, %v1503, %v1507
    %v1512 = vand.u32 2147483647, %v1502
    %vm1513 = vcmp.eq.f32.partialorder %v1512, 8.507059e+37
    %v1514 = vand.u32 %v1502, 2147483648
    %v1515 = vor.u32 1.1754944e-38, %v1514
    %v1516 = vsel %vm1513, %v1515, %v1511
    %v1517 = vmul.f32 %v1492, %v1516
    %v1518 = vmin.f32 %v1517, 1.0
    %v1519 = vmax.f32 %v1518, -1.0
    %v1520 = vmul.f32 %v357, %v357
    %v1521 = vmin.f32 16.0, %v1520
    %v1522 = vmul.f32 %v1521, 2.1237322e-06
    %v1523 = vadd.f32 %v1522, 0.00028619796
    %v1524 = vmul.f32 %v1521, %v1523
    %v1525 = vadd.f32 %v1524, 0.0036580483
    %v1526 = vmul.f32 %v1521, %v1525
    %v1527 = vadd.f32 %v1526, 0.05243302
    %v1528 = vmul.f32 %v1521, %v1527
    %v1529 = vadd.f32 %v1528, 0.18741608
    %v1530 = vmul.f32 %v1521, %v1529
    %v1531 = vadd.f32 %v1530, 1.1283791
    %v1532 = vmul.f32 %v357, %v1531
    %v1533 = vmul.f32 %v1521, 3.8918573e-05
    %v1534 = vadd.f32 %v1533, 0.001143296
    %v1535 = vmul.f32 %v1521, %v1534
    %v1536 = vadd.f32 %v1535, 0.014752088
    %v1537 = vmul.f32 %v1521, %v1536
    %v1538 = vadd.f32 %v1537, 0.112945676
    %v1539 = vmul.f32 %v1521, %v1538
    %v1540 = vadd.f32 %v1539, 0.4994258
    %v1541 = vmul.f32 %v1521, %v1540
    %v1542 = vadd.f32 %v1541, 1.0
    %v1543 = vrcp.pop %v1542
    %v1544 = vmul.f32 %v1542, %v1543
    %v1545 = vsub.f32 1.0, %v1544
    %v1546 = vmul.f32 %v1543, %v1545
    %v1547 = vadd.f32 %v1543, %v1546
    %vm1548 = vweird.f32 %v1542
    %vm1549 = vweird.f32 %v1543
    %vm1550 = vmor %vm1548, %vm1549
    %v1551 = vsel %vm1550, %v1543, %v1547
    %v1552 = vand.u32 2147483647, %v1542
    %vm1553 = vcmp.eq.f32.partialorder %v1552, 8.507059e+37
    %v1554 = vand.u32 %v1542, 2147483648
    %v1555 = vor.u32 1.1754944e-38, %v1554
    %v1556 = vsel %vm1553, %v1555, %v1551
    %v1557 = vmul.f32 %v1532, %v1556
    %v1558 = vmin.f32 %v1557, 1.0
    %v1559 = vmax.f32 %v1558, -1.0
    %v1560 = vmul.f32 %v358, %v358
    %v1561 = vmin.f32 16.0, %v1560
    %v1562 = vmul.f32 %v1561, 2.1237322e-06
    %v1563 = vadd.f32 %v1562, 0.00028619796
    %v1564 = vmul.f32 %v1561, %v1563
    %v1565 = vadd.f32 %v1564, 0.0036580483
    %v1566 = vmul.f32 %v1561, %v1565
    %v1567 = vadd.f32 %v1566, 0.05243302
    %v1568 = vmul.f32 %v1561, %v1567
    %v1569 = vadd.f32 %v1568, 0.18741608
    %v1570 = vmul.f32 %v1561, %v1569
    %v1571 = vadd.f32 %v1570, 1.1283791
    %v1572 = vmul.f32 %v358, %v1571
    %v1573 = vmul.f32 %v1561, 3.8918573e-05
    %v1574 = vadd.f32 %v1573, 0.001143296
    %v1575 = vmul.f32 %v1561, %v1574
    %v1576 = vadd.f32 %v1575, 0.014752088
    %v1577 = vmul.f32 %v1561, %v1576
    %v1578 = vadd.f32 %v1577, 0.112945676
    %v1579 = vmul.f32 %v1561, %v1578
    %v1580 = vadd.f32 %v1579, 0.4994258
    %v1581 = vmul.f32 %v1561, %v1580
    %v1582 = vadd.f32 %v1581, 1.0
    %v1583 = vrcp.pop %v1582
    %v1584 = vmul.f32 %v1582, %v1583
    %v1585 = vsub.f32 1.0, %v1584
    %v1586 = vmul.f32 %v1583, %v1585
    %v1587 = vadd.f32 %v1583, %v1586
    %vm1588 = vweird.f32 %v1582
    %vm1589 = vweird.f32 %v1583
    %vm1590 = vmor %vm1588, %vm1589
    %v1591 = vsel %vm1590, %v1583, %v1587
    %v1592 = vand.u32 2147483647, %v1582
    %vm1593 = vcmp.eq.f32.partialorder %v1592, 8.507059e+37
    %v1594 = vand.u32 %v1582, 2147483648
    %v1595 = vor.u32 1.1754944e-38, %v1594
    %v1596 = vsel %vm1593, %v1595, %v1591
    %v1597 = vmul.f32 %v1572, %v1596
    %v1598 = vmin.f32 %v1597, 1.0
    %v1599 = vmax.f32 %v1598, -1.0
    %v1600 = vmul.f32 %v359, %v359
    %v1601 = vmin.f32 16.0, %v1600
    %v1602 = vmul.f32 %v1601, 2.1237322e-06
    %v1603 = vadd.f32 %v1602, 0.00028619796
    %v1604 = vmul.f32 %v1601, %v1603
    %v1605 = vadd.f32 %v1604, 0.0036580483
    %v1606 = vmul.f32 %v1601, %v1605
    %v1607 = vadd.f32 %v1606, 0.05243302
    %v1608 = vmul.f32 %v1601, %v1607
    %v1609 = vadd.f32 %v1608, 0.18741608
    %v1610 = vmul.f32 %v1601, %v1609
    %v1611 = vadd.f32 %v1610, 1.1283791
    %v1612 = vmul.f32 %v359, %v1611
    %v1613 = vmul.f32 %v1601, 3.8918573e-05
    %v1614 = vadd.f32 %v1613, 0.001143296
    %v1615 = vmul.f32 %v1601, %v1614
    %v1616 = vadd.f32 %v1615, 0.014752088
    %v1617 = vmul.f32 %v1601, %v1616
    %v1618 = vadd.f32 %v1617, 0.112945676
    %v1619 = vmul.f32 %v1601, %v1618
    %v1620 = vadd.f32 %v1619, 0.4994258
    %v1621 = vmul.f32 %v1601, %v1620
    %v1622 = vadd.f32 %v1621, 1.0
    %v1623 = vrcp.pop %v1622
    %v1624 = vmul.f32 %v1622, %v1623
    %v1625 = vsub.f32 1.0, %v1624
    %v1626 = vmul.f32 %v1623, %v1625
    %v1627 = vadd.f32 %v1623, %v1626
    %vm1628 = vweird.f32 %v1622
    %vm1629 = vweird.f32 %v1623
    %vm1630 = vmor %vm1628, %vm1629
    %v1631 = vsel %vm1630, %v1623, %v1627
    %v1632 = vand.u32 2147483647, %v1622
    %vm1633 = vcmp.eq.f32.partialorder %v1632, 8.507059e+37
    %v1634 = vand.u32 %v1622, 2147483648
    %v1635 = vor.u32 1.1754944e-38, %v1634
    %v1636 = vsel %vm1633, %v1635, %v1631
    %v1637 = vmul.f32 %v1612, %v1636
    %v1638 = vmin.f32 %v1637, 1.0
    %v1639 = vmax.f32 %v1638, -1.0
    %v1640 = vadd.f32 %v399, 1.0
    %v1641 = vadd.f32 %v439, 1.0
    %v1642 = vadd.f32 %v479, 1.0
    %v1643 = vadd.f32 %v519, 1.0
    %v1644 = vadd.f32 %v559, 1.0
    %v1645 = vadd.f32 %v599, 1.0
    %v1646 = vadd.f32 %v639, 1.0
    %v1647 = vadd.f32 %v679, 1.0
    %v1648 = vadd.f32 %v719, 1.0
    %v1649 = vadd.f32 %v759, 1.0
    %v1650 = vadd.f32 %v799, 1.0
    %v1651 = vadd.f32 %v839, 1.0
    %v1652 = vadd.f32 %v879, 1.0
    %v1653 = vadd.f32 %v919, 1.0
    %v1654 = vadd.f32 %v959, 1.0
    %v1655 = vadd.f32 %v999, 1.0
    %v1656 = vadd.f32 %v1039, 1.0
    %v1657 = vadd.f32 %v1079, 1.0
    %v1658 = vadd.f32 %v1119, 1.0
    %v1659 = vadd.f32 %v1159, 1.0
    %v1660 = vadd.f32 %v1199, 1.0
    %v1661 = vadd.f32 %v1239, 1.0
    %v1662 = vadd.f32 %v1279, 1.0
    %v1663 = vadd.f32 %v1319, 1.0
    %v1664 = vadd.f32 %v1359, 1.0
    %v1665 = vadd.f32 %v1399, 1.0
    %v1666 = vadd.f32 %v1439, 1.0
    %v1667 = vadd.f32 %v1479, 1.0
    %v1668 = vadd.f32 %v1519, 1.0
    %v1669 = vadd.f32 %v1559, 1.0
    %v1670 = vadd.f32 %v1599, 1.0
    %v1671 = vadd.f32 %v1639, 1.0
    %v1672 = vmul.f32 %v296, %v1640
    %v1673 = vmul.f32 %v297, %v1641
    %v1674 = vmul.f32 %v298, %v1642
    %v1675 = vmul.f32 %v299, %v1643
    %v1676 = vmul.f32 %v300, %v1644
    %v1677 = vmul.f32 %v301, %v1645
    %v1678 = vmul.f32 %v302, %v1646
    %v1679 = vmul.f32 %v303, %v1647
    %v1680 = vmul.f32 %v304, %v1648
    %v1681 = vmul.f32 %v305, %v1649
    %v1682 = vmul.f32 %v306, %v1650
    %v1683 = vmul.f32 %v307, %v1651
    %v1684 = vmul.f32 %v308, %v1652
    %v1685 = vmul.f32 %v309, %v1653
    %v1686 = vmul.f32 %v310, %v1654
    %v1687 = vmul.f32 %v311, %v1655
    %v1688 = vmul.f32 %v312, %v1656
    %v1689 = vmul.f32 %v313, %v1657
    %v1690 = vmul.f32 %v314, %v1658
    %v1691 = vmul.f32 %v315, %v1659
    %v1692 = vmul.f32 %v316, %v1660
    %v1693 = vmul.f32 %v317, %v1661
    %v1694 = vmul.f32 %v318, %v1662
    %v1695 = vmul.f32 %v319, %v1663
    %v1696 = vmul.f32 %v320, %v1664
    %v1697 = vmul.f32 %v321, %v1665
    %v1698 = vmul.f32 %v322, %v1666
    %v1699 = vmul.f32 %v323, %v1667
    %v1700 = vmul.f32 %v324, %v1668
    %v1701 = vmul.f32 %v325, %v1669
    %v1702 = vmul.f32 %v326, %v1670
    %v1703 = vmul.f32 %v327, %v1671
    %v1704 = vsel %vm86, %v1672, 0.0
    %1705 = vadd.xlane.f32.xlu0 %v1704
    %v1706 = vpop.xlane.xlu0 %1705
    %v1707 = vsel %vm86, %v1673, 0.0
    %1708 = vadd.xlane.f32.xlu0 %v1707
    %v1709 = vpop.xlane.xlu0 %1708
    %v1710 = vsel %vm86, %v1674, 0.0
    %1711 = vadd.xlane.f32.xlu0 %v1710
    %v1712 = vpop.xlane.xlu0 %1711
    %v1713 = vsel %vm86, %v1675, 0.0
    %1714 = vadd.xlane.f32.xlu0 %v1713
    %v1715 = vpop.xlane.xlu0 %1714
    %v1716 = vsel %vm86, %v1676, 0.0
    %1717 = vadd.xlane.f32.xlu0 %v1716
    %v1718 = vpop.xlane.xlu0 %1717
    %v1719 = vsel %vm86, %v1677, 0.0
    %1720 = vadd.xlane.f32.xlu0 %v1719
    %v1721 = vpop.xlane.xlu0 %1720
    %v1722 = vsel %vm86, %v1678, 0.0
    %1723 = vadd.xlane.f32.xlu0 %v1722
    %v1724 = vpop.xlane.xlu0 %1723
    %v1725 = vsel %vm86, %v1679, 0.0
    %1726 = vadd.xlane.f32.xlu0 %v1725
    %v1727 = vpop.xlane.xlu0 %1726
    %v1728 = vsel %vm86, %v1680, 0.0
    %1729 = vadd.xlane.f32.xlu0 %v1728
    %v1730 = vpop.xlane.xlu0 %1729
    %v1731 = vsel %vm86, %v1681, 0.0
    %1732 = vadd.xlane.f32.xlu0 %v1731
    %v1733 = vpop.xlane.xlu0 %1732
    %v1734 = vsel %vm86, %v1682, 0.0
    %1735 = vadd.xlane.f32.xlu0 %v1734
    %v1736 = vpop.xlane.xlu0 %1735
    %v1737 = vsel %vm86, %v1683, 0.0
    %1738 = vadd.xlane.f32.xlu0 %v1737
    %v1739 = vpop.xlane.xlu0 %1738
    %v1740 = vsel %vm86, %v1684, 0.0
    %1741 = vadd.xlane.f32.xlu0 %v1740
    %v1742 = vpop.xlane.xlu0 %1741
    %v1743 = vsel %vm86, %v1685, 0.0
    %1744 = vadd.xlane.f32.xlu0 %v1743
    %v1745 = vpop.xlane.xlu0 %1744
    %v1746 = vsel %vm86, %v1686, 0.0
    %1747 = vadd.xlane.f32.xlu0 %v1746
    %v1748 = vpop.xlane.xlu0 %1747
    %v1749 = vsel %vm86, %v1687, 0.0
    %1750 = vadd.xlane.f32.xlu0 %v1749
    %v1751 = vpop.xlane.xlu0 %1750
    %v1752 = vsel %vm86, %v1688, 0.0
    %1753 = vadd.xlane.f32.xlu0 %v1752
    %v1754 = vpop.xlane.xlu0 %1753
    %v1755 = vsel %vm86, %v1689, 0.0
    %1756 = vadd.xlane.f32.xlu0 %v1755
    %v1757 = vpop.xlane.xlu0 %1756
    %v1758 = vsel %vm86, %v1690, 0.0
    %1759 = vadd.xlane.f32.xlu0 %v1758
    %v1760 = vpop.xlane.xlu0 %1759
    %v1761 = vsel %vm86, %v1691, 0.0
    %1762 = vadd.xlane.f32.xlu0 %v1761
    %v1763 = vpop.xlane.xlu0 %1762
    %v1764 = vsel %vm86, %v1692, 0.0
    %1765 = vadd.xlane.f32.xlu0 %v1764
    %v1766 = vpop.xlane.xlu0 %1765
    %v1767 = vsel %vm86, %v1693, 0.0
    %1768 = vadd.xlane.f32.xlu0 %v1767
    %v1769 = vpop.xlane.xlu0 %1768
    %v1770 = vsel %vm86, %v1694, 0.0
    %1771 = vadd.xlane.f32.xlu0 %v1770
    %v1772 = vpop.xlane.xlu0 %1771
    %v1773 = vsel %vm86, %v1695, 0.0
    %1774 = vadd.xlane.f32.xlu0 %v1773
    %v1775 = vpop.xlane.xlu0 %1774
    %v1776 = vsel %vm86, %v1696, 0.0
    %1777 = vadd.xlane.f32.xlu0 %v1776
    %v1778 = vpop.xlane.xlu0 %1777
    %v1779 = vsel %vm86, %v1697, 0.0
    %1780 = vadd.xlane.f32.xlu0 %v1779
    %v1781 = vpop.xlane.xlu0 %1780
    %v1782 = vsel %vm86, %v1698, 0.0
    %1783 = vadd.xlane.f32.xlu0 %v1782
    %v1784 = vpop.xlane.xlu0 %1783
    %v1785 = vsel %vm86, %v1699, 0.0
    %1786 = vadd.xlane.f32.xlu0 %v1785
    %v1787 = vpop.xlane.xlu0 %1786
    %v1788 = vsel %vm86, %v1700, 0.0
    %1789 = vadd.xlane.f32.xlu0 %v1788
    %v1790 = vpop.xlane.xlu0 %1789
    %v1791 = vsel %vm86, %v1701, 0.0
    %1792 = vadd.xlane.f32.xlu0 %v1791
    %v1793 = vpop.xlane.xlu0 %1792
    %v1794 = vsel %vm86, %v1702, 0.0
    %1795 = vadd.xlane.f32.xlu0 %v1794
    %v1796 = vpop.xlane.xlu0 %1795
    %v1797 = vsel %vm86, %v1703, 0.0
    %1798 = vadd.xlane.f32.xlu0 %v1797
    %v1799 = vpop.xlane.xlu0 %1798
    %v1800 = vrcp.pop 32.0
    %v1801 = vmul.f32 32.0, %v1800
    %v1802 = vsub.f32 1.0, %v1801
    %v1803 = vmul.f32 %v1800, %v1802
    %v1804 = vadd.f32 %v1800, %v1803
    %vm1805 = vweird.f32 %v1800
    %v1806 = vsel %vm1805, %v1800, %v1804
    %v1807 = vmul.f32 %v1706, %v1806
    %v1808 = vmul.f32 %v1709, %v1806
    %v1809 = vmul.f32 %v1712, %v1806
    %v1810 = vmul.f32 %v1715, %v1806
    %v1811 = vmul.f32 %v1718, %v1806
    %v1812 = vmul.f32 %v1721, %v1806
    %v1813 = vmul.f32 %v1724, %v1806
    %v1814 = vmul.f32 %v1727, %v1806
    %v1815 = vmul.f32 %v1730, %v1806
    %v1816 = vmul.f32 %v1733, %v1806
    %v1817 = vmul.f32 %v1736, %v1806
    %v1818 = vmul.f32 %v1739, %v1806
    %v1819 = vmul.f32 %v1742, %v1806
    %v1820 = vmul.f32 %v1745, %v1806
    %v1821 = vmul.f32 %v1748, %v1806
    %v1822 = vmul.f32 %v1751, %v1806
    %v1823 = vmul.f32 %v1754, %v1806
    %v1824 = vmul.f32 %v1757, %v1806
    %v1825 = vmul.f32 %v1760, %v1806
    %v1826 = vmul.f32 %v1763, %v1806
    %v1827 = vmul.f32 %v1766, %v1806
    %v1828 = vmul.f32 %v1769, %v1806
    %v1829 = vmul.f32 %v1772, %v1806
    %v1830 = vmul.f32 %v1775, %v1806
    %v1831 = vmul.f32 %v1778, %v1806
    %v1832 = vmul.f32 %v1781, %v1806
    %v1833 = vmul.f32 %v1784, %v1806
    %v1834 = vmul.f32 %v1787, %v1806
    %v1835 = vmul.f32 %v1790, %v1806
    %v1836 = vmul.f32 %v1793, %v1806
    %v1837 = vmul.f32 %v1796, %v1806
    %v1838 = vmul.f32 %v1799, %v1806
    %v1839 = vsub.f32 %v1672, %v1807
    %v1840 = vsub.f32 %v1673, %v1808
    %v1841 = vsub.f32 %v1674, %v1809
    %v1842 = vsub.f32 %v1675, %v1810
    %v1843 = vsub.f32 %v1676, %v1811
    %v1844 = vsub.f32 %v1677, %v1812
    %v1845 = vsub.f32 %v1678, %v1813
    %v1846 = vsub.f32 %v1679, %v1814
    %v1847 = vsub.f32 %v1680, %v1815
    %v1848 = vsub.f32 %v1681, %v1816
    %v1849 = vsub.f32 %v1682, %v1817
    %v1850 = vsub.f32 %v1683, %v1818
    %v1851 = vsub.f32 %v1684, %v1819
    %v1852 = vsub.f32 %v1685, %v1820
    %v1853 = vsub.f32 %v1686, %v1821
    %v1854 = vsub.f32 %v1687, %v1822
    %v1855 = vsub.f32 %v1688, %v1823
    %v1856 = vsub.f32 %v1689, %v1824
    %v1857 = vsub.f32 %v1690, %v1825
    %v1858 = vsub.f32 %v1691, %v1826
    %v1859 = vsub.f32 %v1692, %v1827
    %v1860 = vsub.f32 %v1693, %v1828
    %v1861 = vsub.f32 %v1694, %v1829
    %v1862 = vsub.f32 %v1695, %v1830
    %v1863 = vsub.f32 %v1696, %v1831
    %v1864 = vsub.f32 %v1697, %v1832
    %v1865 = vsub.f32 %v1698, %v1833
    %v1866 = vsub.f32 %v1699, %v1834
    %v1867 = vsub.f32 %v1700, %v1835
    %v1868 = vsub.f32 %v1701, %v1836
    %v1869 = vsub.f32 %v1702, %v1837
    %v1870 = vsub.f32 %v1703, %v1838
    %v1871 = vmul.f32 %v1839, %v1839
    %v1872 = vmul.f32 %v1840, %v1840
    %v1873 = vmul.f32 %v1841, %v1841
    %v1874 = vmul.f32 %v1842, %v1842
    %v1875 = vmul.f32 %v1843, %v1843
    %v1876 = vmul.f32 %v1844, %v1844
    %v1877 = vmul.f32 %v1845, %v1845
    %v1878 = vmul.f32 %v1846, %v1846
    %v1879 = vmul.f32 %v1847, %v1847
    %v1880 = vmul.f32 %v1848, %v1848
    %v1881 = vmul.f32 %v1849, %v1849
    %v1882 = vmul.f32 %v1850, %v1850
    %v1883 = vmul.f32 %v1851, %v1851
    %v1884 = vmul.f32 %v1852, %v1852
    %v1885 = vmul.f32 %v1853, %v1853
    %v1886 = vmul.f32 %v1854, %v1854
    %v1887 = vmul.f32 %v1855, %v1855
    %v1888 = vmul.f32 %v1856, %v1856
    %v1889 = vmul.f32 %v1857, %v1857
    %v1890 = vmul.f32 %v1858, %v1858
    %v1891 = vmul.f32 %v1859, %v1859
    %v1892 = vmul.f32 %v1860, %v1860
    %v1893 = vmul.f32 %v1861, %v1861
    %v1894 = vmul.f32 %v1862, %v1862
    %v1895 = vmul.f32 %v1863, %v1863
    %v1896 = vmul.f32 %v1864, %v1864
    %v1897 = vmul.f32 %v1865, %v1865
    %v1898 = vmul.f32 %v1866, %v1866
    %v1899 = vmul.f32 %v1867, %v1867
    %v1900 = vmul.f32 %v1868, %v1868
    %v1901 = vmul.f32 %v1869, %v1869
    %v1902 = vmul.f32 %v1870, %v1870
    %v1903 = vsel %vm86, %v1871, 0.0
    %1904 = vadd.xlane.f32.xlu0 %v1903
    %v1905 = vpop.xlane.xlu0 %1904
    %v1906 = vsel %vm86, %v1872, 0.0
    %1907 = vadd.xlane.f32.xlu0 %v1906
    %v1908 = vpop.xlane.xlu0 %1907
    %v1909 = vsel %vm86, %v1873, 0.0
    %1910 = vadd.xlane.f32.xlu0 %v1909
    %v1911 = vpop.xlane.xlu0 %1910
    %v1912 = vsel %vm86, %v1874, 0.0
    %1913 = vadd.xlane.f32.xlu0 %v1912
    %v1914 = vpop.xlane.xlu0 %1913
    %v1915 = vsel %vm86, %v1875, 0.0
    %1916 = vadd.xlane.f32.xlu0 %v1915
    %v1917 = vpop.xlane.xlu0 %1916
    %v1918 = vsel %vm86, %v1876, 0.0
    %1919 = vadd.xlane.f32.xlu0 %v1918
    %v1920 = vpop.xlane.xlu0 %1919
    %v1921 = vsel %vm86, %v1877, 0.0
    %1922 = vadd.xlane.f32.xlu0 %v1921
    %v1923 = vpop.xlane.xlu0 %1922
    %v1924 = vsel %vm86, %v1878, 0.0
    %1925 = vadd.xlane.f32.xlu0 %v1924
    %v1926 = vpop.xlane.xlu0 %1925
    %v1927 = vsel %vm86, %v1879, 0.0
    %1928 = vadd.xlane.f32.xlu0 %v1927
    %v1929 = vpop.xlane.xlu0 %1928
    %v1930 = vsel %vm86, %v1880, 0.0
    %1931 = vadd.xlane.f32.xlu0 %v1930
    %v1932 = vpop.xlane.xlu0 %1931
    %v1933 = vsel %vm86, %v1881, 0.0
    %1934 = vadd.xlane.f32.xlu0 %v1933
    %v1935 = vpop.xlane.xlu0 %1934
    %v1936 = vsel %vm86, %v1882, 0.0
    %1937 = vadd.xlane.f32.xlu0 %v1936
    %v1938 = vpop.xlane.xlu0 %1937
    %v1939 = vsel %vm86, %v1883, 0.0
    %1940 = vadd.xlane.f32.xlu0 %v1939
    %v1941 = vpop.xlane.xlu0 %1940
    %v1942 = vsel %vm86, %v1884, 0.0
    %1943 = vadd.xlane.f32.xlu0 %v1942
    %v1944 = vpop.xlane.xlu0 %1943
    %v1945 = vsel %vm86, %v1885, 0.0
    %1946 = vadd.xlane.f32.xlu0 %v1945
    %v1947 = vpop.xlane.xlu0 %1946
    %v1948 = vsel %vm86, %v1886, 0.0
    %1949 = vadd.xlane.f32.xlu0 %v1948
    %v1950 = vpop.xlane.xlu0 %1949
    %v1951 = vsel %vm86, %v1887, 0.0
    %1952 = vadd.xlane.f32.xlu0 %v1951
    %v1953 = vpop.xlane.xlu0 %1952
    %v1954 = vsel %vm86, %v1888, 0.0
    %1955 = vadd.xlane.f32.xlu0 %v1954
    %v1956 = vpop.xlane.xlu0 %1955
    %v1957 = vsel %vm86, %v1889, 0.0
    %1958 = vadd.xlane.f32.xlu0 %v1957
    %v1959 = vpop.xlane.xlu0 %1958
    %v1960 = vsel %vm86, %v1890, 0.0
    %1961 = vadd.xlane.f32.xlu0 %v1960
    %v1962 = vpop.xlane.xlu0 %1961
    %v1963 = vsel %vm86, %v1891, 0.0
    %1964 = vadd.xlane.f32.xlu0 %v1963
    %v1965 = vpop.xlane.xlu0 %1964
    %v1966 = vsel %vm86, %v1892, 0.0
    %1967 = vadd.xlane.f32.xlu0 %v1966
    %v1968 = vpop.xlane.xlu0 %1967
    %v1969 = vsel %vm86, %v1893, 0.0
    %1970 = vadd.xlane.f32.xlu0 %v1969
    %v1971 = vpop.xlane.xlu0 %1970
    %v1972 = vsel %vm86, %v1894, 0.0
    %1973 = vadd.xlane.f32.xlu0 %v1972
    %v1974 = vpop.xlane.xlu0 %1973
    %v1975 = vsel %vm86, %v1895, 0.0
    %1976 = vadd.xlane.f32.xlu0 %v1975
    %v1977 = vpop.xlane.xlu0 %1976
    %v1978 = vsel %vm86, %v1896, 0.0
    %1979 = vadd.xlane.f32.xlu0 %v1978
    %v1980 = vpop.xlane.xlu0 %1979
    %v1981 = vsel %vm86, %v1897, 0.0
    %1982 = vadd.xlane.f32.xlu0 %v1981
    %v1983 = vpop.xlane.xlu0 %1982
    %v1984 = vsel %vm86, %v1898, 0.0
    %1985 = vadd.xlane.f32.xlu0 %v1984
    %v1986 = vpop.xlane.xlu0 %1985
    %v1987 = vsel %vm86, %v1899, 0.0
    %1988 = vadd.xlane.f32.xlu0 %v1987
    %v1989 = vpop.xlane.xlu0 %1988
    %v1990 = vsel %vm86, %v1900, 0.0
    %1991 = vadd.xlane.f32.xlu0 %v1990
    %v1992 = vpop.xlane.xlu0 %1991
    %v1993 = vsel %vm86, %v1901, 0.0
    %1994 = vadd.xlane.f32.xlu0 %v1993
    %v1995 = vpop.xlane.xlu0 %1994
    %v1996 = vsel %vm86, %v1902, 0.0
    %1997 = vadd.xlane.f32.xlu0 %v1996
    %v1998 = vpop.xlane.xlu0 %1997
    %v1999 = vmul.f32 %v1905, %v1806
    %v2000 = vmul.f32 %v1908, %v1806
    %v2001 = vmul.f32 %v1911, %v1806
    %v2002 = vmul.f32 %v1914, %v1806
    %v2003 = vmul.f32 %v1917, %v1806
    %v2004 = vmul.f32 %v1920, %v1806
    %v2005 = vmul.f32 %v1923, %v1806
    %v2006 = vmul.f32 %v1926, %v1806
    %v2007 = vmul.f32 %v1929, %v1806
    %v2008 = vmul.f32 %v1932, %v1806
    %v2009 = vmul.f32 %v1935, %v1806
    %v2010 = vmul.f32 %v1938, %v1806
    %v2011 = vmul.f32 %v1941, %v1806
    %v2012 = vmul.f32 %v1944, %v1806
    %v2013 = vmul.f32 %v1947, %v1806
    %v2014 = vmul.f32 %v1950, %v1806
    %v2015 = vmul.f32 %v1953, %v1806
    %v2016 = vmul.f32 %v1956, %v1806
    %v2017 = vmul.f32 %v1959, %v1806
    %v2018 = vmul.f32 %v1962, %v1806
    %v2019 = vmul.f32 %v1965, %v1806
    %v2020 = vmul.f32 %v1968, %v1806
    %v2021 = vmul.f32 %v1971, %v1806
    %v2022 = vmul.f32 %v1974, %v1806
    %v2023 = vmul.f32 %v1977, %v1806
    %v2024 = vmul.f32 %v1980, %v1806
    %v2025 = vmul.f32 %v1983, %v1806
    %v2026 = vmul.f32 %v1986, %v1806
    %v2027 = vmul.f32 %v1989, %v1806
    %v2028 = vmul.f32 %v1992, %v1806
    %v2029 = vmul.f32 %v1995, %v1806
    %v2030 = vmul.f32 %v1998, %v1806
    %v2031 = vadd.f32 %v1999, 1e-12
    %v2032 = vadd.f32 %v2000, 1e-12
    %v2033 = vadd.f32 %v2001, 1e-12
    %v2034 = vadd.f32 %v2002, 1e-12
    %v2035 = vadd.f32 %v2003, 1e-12
    %v2036 = vadd.f32 %v2004, 1e-12
    %v2037 = vadd.f32 %v2005, 1e-12
    %v2038 = vadd.f32 %v2006, 1e-12
    %v2039 = vadd.f32 %v2007, 1e-12
    %v2040 = vadd.f32 %v2008, 1e-12
    %v2041 = vadd.f32 %v2009, 1e-12
    %v2042 = vadd.f32 %v2010, 1e-12
    %v2043 = vadd.f32 %v2011, 1e-12
    %v2044 = vadd.f32 %v2012, 1e-12
    %v2045 = vadd.f32 %v2013, 1e-12
    %v2046 = vadd.f32 %v2014, 1e-12
    %v2047 = vadd.f32 %v2015, 1e-12
    %v2048 = vadd.f32 %v2016, 1e-12
    %v2049 = vadd.f32 %v2017, 1e-12
    %v2050 = vadd.f32 %v2018, 1e-12
    %v2051 = vadd.f32 %v2019, 1e-12
    %v2052 = vadd.f32 %v2020, 1e-12
    %v2053 = vadd.f32 %v2021, 1e-12
    %v2054 = vadd.f32 %v2022, 1e-12
    %v2055 = vadd.f32 %v2023, 1e-12
    %v2056 = vadd.f32 %v2024, 1e-12
    %v2057 = vadd.f32 %v2025, 1e-12
    %v2058 = vadd.f32 %v2026, 1e-12
    %v2059 = vadd.f32 %v2027, 1e-12
    %v2060 = vadd.f32 %v2028, 1e-12
    %v2061 = vadd.f32 %v2029, 1e-12
    %v2062 = vadd.f32 %v2030, 1e-12
    %v2063 = vrsqrt.pop %v2031
    %v2064 = vmul.f32 %v2063, %v2031
    %v2065 = vmul.f32 %v2064, %v2063
    %v2066 = vmul.f32 0.5, %v2065
    %v2067 = vsub.f32 1.5, %v2066
    %v2068 = vmul.f32 %v2063, %v2067
    %vm2069 = vweird.f32 %v2031
    %vm2070 = vweird.f32 %v2063
    %vm2071 = vmor %vm2069, %vm2070
    %v2072 = vsel %vm2071, %v2063, %v2068
    %v2073 = vrsqrt.pop %v2032
    %v2074 = vmul.f32 %v2073, %v2032
    %v2075 = vmul.f32 %v2074, %v2073
    %v2076 = vmul.f32 0.5, %v2075
    %v2077 = vsub.f32 1.5, %v2076
    %v2078 = vmul.f32 %v2073, %v2077
    %vm2079 = vweird.f32 %v2032
    %vm2080 = vweird.f32 %v2073
    %vm2081 = vmor %vm2079, %vm2080
    %v2082 = vsel %vm2081, %v2073, %v2078
    %v2083 = vrsqrt.pop %v2033
    %v2084 = vmul.f32 %v2083, %v2033
    %v2085 = vmul.f32 %v2084, %v2083
    %v2086 = vmul.f32 0.5, %v2085
    %v2087 = vsub.f32 1.5, %v2086
    %v2088 = vmul.f32 %v2083, %v2087
    %vm2089 = vweird.f32 %v2033
    %vm2090 = vweird.f32 %v2083
    %vm2091 = vmor %vm2089, %vm2090
    %v2092 = vsel %vm2091, %v2083, %v2088
    %v2093 = vrsqrt.pop %v2034
    %v2094 = vmul.f32 %v2093, %v2034
    %v2095 = vmul.f32 %v2094, %v2093
    %v2096 = vmul.f32 0.5, %v2095
    %v2097 = vsub.f32 1.5, %v2096
    %v2098 = vmul.f32 %v2093, %v2097
    %vm2099 = vweird.f32 %v2034
    %vm2100 = vweird.f32 %v2093
    %vm2101 = vmor %vm2099, %vm2100
    %v2102 = vsel %vm2101, %v2093, %v2098
    %v2103 = vrsqrt.pop %v2035
    %v2104 = vmul.f32 %v2103, %v2035
    %v2105 = vmul.f32 %v2104, %v2103
    %v2106 = vmul.f32 0.5, %v2105
    %v2107 = vsub.f32 1.5, %v2106
    %v2108 = vmul.f32 %v2103, %v2107
    %vm2109 = vweird.f32 %v2035
    %vm2110 = vweird.f32 %v2103
    %vm2111 = vmor %vm2109, %vm2110
    %v2112 = vsel %vm2111, %v2103, %v2108
    %v2113 = vrsqrt.pop %v2036
    %v2114 = vmul.f32 %v2113, %v2036
    %v2115 = vmul.f32 %v2114, %v2113
    %v2116 = vmul.f32 0.5, %v2115
    %v2117 = vsub.f32 1.5, %v2116
    %v2118 = vmul.f32 %v2113, %v2117
    %vm2119 = vweird.f32 %v2036
    %vm2120 = vweird.f32 %v2113
    %vm2121 = vmor %vm2119, %vm2120
    %v2122 = vsel %vm2121, %v2113, %v2118
    %v2123 = vrsqrt.pop %v2037
    %v2124 = vmul.f32 %v2123, %v2037
    %v2125 = vmul.f32 %v2124, %v2123
    %v2126 = vmul.f32 0.5, %v2125
    %v2127 = vsub.f32 1.5, %v2126
    %v2128 = vmul.f32 %v2123, %v2127
    %vm2129 = vweird.f32 %v2037
    %vm2130 = vweird.f32 %v2123
    %vm2131 = vmor %vm2129, %vm2130
    %v2132 = vsel %vm2131, %v2123, %v2128
    %v2133 = vrsqrt.pop %v2038
    %v2134 = vmul.f32 %v2133, %v2038
    %v2135 = vmul.f32 %v2134, %v2133
    %v2136 = vmul.f32 0.5, %v2135
    %v2137 = vsub.f32 1.5, %v2136
    %v2138 = vmul.f32 %v2133, %v2137
    %vm2139 = vweird.f32 %v2038
    %vm2140 = vweird.f32 %v2133
    %vm2141 = vmor %vm2139, %vm2140
    %v2142 = vsel %vm2141, %v2133, %v2138
    %v2143 = vrsqrt.pop %v2039
    %v2144 = vmul.f32 %v2143, %v2039
    %v2145 = vmul.f32 %v2144, %v2143
    %v2146 = vmul.f32 0.5, %v2145
    %v2147 = vsub.f32 1.5, %v2146
    %v2148 = vmul.f32 %v2143, %v2147
    %vm2149 = vweird.f32 %v2039
    %vm2150 = vweird.f32 %v2143
    %vm2151 = vmor %vm2149, %vm2150
    %v2152 = vsel %vm2151, %v2143, %v2148
    %v2153 = vrsqrt.pop %v2040
    %v2154 = vmul.f32 %v2153, %v2040
    %v2155 = vmul.f32 %v2154, %v2153
    %v2156 = vmul.f32 0.5, %v2155
    %v2157 = vsub.f32 1.5, %v2156
    %v2158 = vmul.f32 %v2153, %v2157
    %vm2159 = vweird.f32 %v2040
    %vm2160 = vweird.f32 %v2153
    %vm2161 = vmor %vm2159, %vm2160
    %v2162 = vsel %vm2161, %v2153, %v2158
    %v2163 = vrsqrt.pop %v2041
    %v2164 = vmul.f32 %v2163, %v2041
    %v2165 = vmul.f32 %v2164, %v2163
    %v2166 = vmul.f32 0.5, %v2165
    %v2167 = vsub.f32 1.5, %v2166
    %v2168 = vmul.f32 %v2163, %v2167
    %vm2169 = vweird.f32 %v2041
    %vm2170 = vweird.f32 %v2163
    %vm2171 = vmor %vm2169, %vm2170
    %v2172 = vsel %vm2171, %v2163, %v2168
    %v2173 = vrsqrt.pop %v2042
    %v2174 = vmul.f32 %v2173, %v2042
    %v2175 = vmul.f32 %v2174, %v2173
    %v2176 = vmul.f32 0.5, %v2175
    %v2177 = vsub.f32 1.5, %v2176
    %v2178 = vmul.f32 %v2173, %v2177
    %vm2179 = vweird.f32 %v2042
    %vm2180 = vweird.f32 %v2173
    %vm2181 = vmor %vm2179, %vm2180
    %v2182 = vsel %vm2181, %v2173, %v2178
    %v2183 = vrsqrt.pop %v2043
    %v2184 = vmul.f32 %v2183, %v2043
    %v2185 = vmul.f32 %v2184, %v2183
    %v2186 = vmul.f32 0.5, %v2185
    %v2187 = vsub.f32 1.5, %v2186
    %v2188 = vmul.f32 %v2183, %v2187
    %vm2189 = vweird.f32 %v2043
    %vm2190 = vweird.f32 %v2183
    %vm2191 = vmor %vm2189, %vm2190
    %v2192 = vsel %vm2191, %v2183, %v2188
    %v2193 = vrsqrt.pop %v2044
    %v2194 = vmul.f32 %v2193, %v2044
    %v2195 = vmul.f32 %v2194, %v2193
    %v2196 = vmul.f32 0.5, %v2195
    %v2197 = vsub.f32 1.5, %v2196
    %v2198 = vmul.f32 %v2193, %v2197
    %vm2199 = vweird.f32 %v2044
    %vm2200 = vweird.f32 %v2193
    %vm2201 = vmor %vm2199, %vm2200
    %v2202 = vsel %vm2201, %v2193, %v2198
    %v2203 = vrsqrt.pop %v2045
    %v2204 = vmul.f32 %v2203, %v2045
    %v2205 = vmul.f32 %v2204, %v2203
    %v2206 = vmul.f32 0.5, %v2205
    %v2207 = vsub.f32 1.5, %v2206
    %v2208 = vmul.f32 %v2203, %v2207
    %vm2209 = vweird.f32 %v2045
    %vm2210 = vweird.f32 %v2203
    %vm2211 = vmor %vm2209, %vm2210
    %v2212 = vsel %vm2211, %v2203, %v2208
    %v2213 = vrsqrt.pop %v2046
    %v2214 = vmul.f32 %v2213, %v2046
    %v2215 = vmul.f32 %v2214, %v2213
    %v2216 = vmul.f32 0.5, %v2215
    %v2217 = vsub.f32 1.5, %v2216
    %v2218 = vmul.f32 %v2213, %v2217
    %vm2219 = vweird.f32 %v2046
    %vm2220 = vweird.f32 %v2213
    %vm2221 = vmor %vm2219, %vm2220
    %v2222 = vsel %vm2221, %v2213, %v2218
    %v2223 = vrsqrt.pop %v2047
    %v2224 = vmul.f32 %v2223, %v2047
    %v2225 = vmul.f32 %v2224, %v2223
    %v2226 = vmul.f32 0.5, %v2225
    %v2227 = vsub.f32 1.5, %v2226
    %v2228 = vmul.f32 %v2223, %v2227
    %vm2229 = vweird.f32 %v2047
    %vm2230 = vweird.f32 %v2223
    %vm2231 = vmor %vm2229, %vm2230
    %v2232 = vsel %vm2231, %v2223, %v2228
    %v2233 = vrsqrt.pop %v2048
    %v2234 = vmul.f32 %v2233, %v2048
    %v2235 = vmul.f32 %v2234, %v2233
    %v2236 = vmul.f32 0.5, %v2235
    %v2237 = vsub.f32 1.5, %v2236
    %v2238 = vmul.f32 %v2233, %v2237
    %vm2239 = vweird.f32 %v2048
    %vm2240 = vweird.f32 %v2233
    %vm2241 = vmor %vm2239, %vm2240
    %v2242 = vsel %vm2241, %v2233, %v2238
    %v2243 = vrsqrt.pop %v2049
    %v2244 = vmul.f32 %v2243, %v2049
    %v2245 = vmul.f32 %v2244, %v2243
    %v2246 = vmul.f32 0.5, %v2245
    %v2247 = vsub.f32 1.5, %v2246
    %v2248 = vmul.f32 %v2243, %v2247
    %vm2249 = vweird.f32 %v2049
    %vm2250 = vweird.f32 %v2243
    %vm2251 = vmor %vm2249, %vm2250
    %v2252 = vsel %vm2251, %v2243, %v2248
    %v2253 = vrsqrt.pop %v2050
    %v2254 = vmul.f32 %v2253, %v2050
    %v2255 = vmul.f32 %v2254, %v2253
    %v2256 = vmul.f32 0.5, %v2255
    %v2257 = vsub.f32 1.5, %v2256
    %v2258 = vmul.f32 %v2253, %v2257
    %vm2259 = vweird.f32 %v2050
    %vm2260 = vweird.f32 %v2253
    %vm2261 = vmor %vm2259, %vm2260
    %v2262 = vsel %vm2261, %v2253, %v2258
    %v2263 = vrsqrt.pop %v2051
    %v2264 = vmul.f32 %v2263, %v2051
    %v2265 = vmul.f32 %v2264, %v2263
    %v2266 = vmul.f32 0.5, %v2265
    %v2267 = vsub.f32 1.5, %v2266
    %v2268 = vmul.f32 %v2263, %v2267
    %vm2269 = vweird.f32 %v2051
    %vm2270 = vweird.f32 %v2263
    %vm2271 = vmor %vm2269, %vm2270
    %v2272 = vsel %vm2271, %v2263, %v2268
    %v2273 = vrsqrt.pop %v2052
    %v2274 = vmul.f32 %v2273, %v2052
    %v2275 = vmul.f32 %v2274, %v2273
    %v2276 = vmul.f32 0.5, %v2275
    %v2277 = vsub.f32 1.5, %v2276
    %v2278 = vmul.f32 %v2273, %v2277
    %vm2279 = vweird.f32 %v2052
    %vm2280 = vweird.f32 %v2273
    %vm2281 = vmor %vm2279, %vm2280
    %v2282 = vsel %vm2281, %v2273, %v2278
    %v2283 = vrsqrt.pop %v2053
    %v2284 = vmul.f32 %v2283, %v2053
    %v2285 = vmul.f32 %v2284, %v2283
    %v2286 = vmul.f32 0.5, %v2285
    %v2287 = vsub.f32 1.5, %v2286
    %v2288 = vmul.f32 %v2283, %v2287
    %vm2289 = vweird.f32 %v2053
    %vm2290 = vweird.f32 %v2283
    %vm2291 = vmor %vm2289, %vm2290
    %v2292 = vsel %vm2291, %v2283, %v2288
    %v2293 = vrsqrt.pop %v2054
    %v2294 = vmul.f32 %v2293, %v2054
    %v2295 = vmul.f32 %v2294, %v2293
    %v2296 = vmul.f32 0.5, %v2295
    %v2297 = vsub.f32 1.5, %v2296
    %v2298 = vmul.f32 %v2293, %v2297
    %vm2299 = vweird.f32 %v2054
    %vm2300 = vweird.f32 %v2293
    %vm2301 = vmor %vm2299, %vm2300
    %v2302 = vsel %vm2301, %v2293, %v2298
    %v2303 = vrsqrt.pop %v2055
    %v2304 = vmul.f32 %v2303, %v2055
    %v2305 = vmul.f32 %v2304, %v2303
    %v2306 = vmul.f32 0.5, %v2305
    %v2307 = vsub.f32 1.5, %v2306
    %v2308 = vmul.f32 %v2303, %v2307
    %vm2309 = vweird.f32 %v2055
    %vm2310 = vweird.f32 %v2303
    %vm2311 = vmor %vm2309, %vm2310
    %v2312 = vsel %vm2311, %v2303, %v2308
    %v2313 = vrsqrt.pop %v2056
    %v2314 = vmul.f32 %v2313, %v2056
    %v2315 = vmul.f32 %v2314, %v2313
    %v2316 = vmul.f32 0.5, %v2315
    %v2317 = vsub.f32 1.5, %v2316
    %v2318 = vmul.f32 %v2313, %v2317
    %vm2319 = vweird.f32 %v2056
    %vm2320 = vweird.f32 %v2313
    %vm2321 = vmor %vm2319, %vm2320
    %v2322 = vsel %vm2321, %v2313, %v2318
    %v2323 = vrsqrt.pop %v2057
    %v2324 = vmul.f32 %v2323, %v2057
    %v2325 = vmul.f32 %v2324, %v2323
    %v2326 = vmul.f32 0.5, %v2325
    %v2327 = vsub.f32 1.5, %v2326
    %v2328 = vmul.f32 %v2323, %v2327
    %vm2329 = vweird.f32 %v2057
    %vm2330 = vweird.f32 %v2323
    %vm2331 = vmor %vm2329, %vm2330
    %v2332 = vsel %vm2331, %v2323, %v2328
    %v2333 = vrsqrt.pop %v2058
    %v2334 = vmul.f32 %v2333, %v2058
    %v2335 = vmul.f32 %v2334, %v2333
    %v2336 = vmul.f32 0.5, %v2335
    %v2337 = vsub.f32 1.5, %v2336
    %v2338 = vmul.f32 %v2333, %v2337
    %vm2339 = vweird.f32 %v2058
    %vm2340 = vweird.f32 %v2333
    %vm2341 = vmor %vm2339, %vm2340
    %v2342 = vsel %vm2341, %v2333, %v2338
    %v2343 = vrsqrt.pop %v2059
    %v2344 = vmul.f32 %v2343, %v2059
    %v2345 = vmul.f32 %v2344, %v2343
    %v2346 = vmul.f32 0.5, %v2345
    %v2347 = vsub.f32 1.5, %v2346
    %v2348 = vmul.f32 %v2343, %v2347
    %vm2349 = vweird.f32 %v2059
    %vm2350 = vweird.f32 %v2343
    %vm2351 = vmor %vm2349, %vm2350
    %v2352 = vsel %vm2351, %v2343, %v2348
    %v2353 = vrsqrt.pop %v2060
    %v2354 = vmul.f32 %v2353, %v2060
    %v2355 = vmul.f32 %v2354, %v2353
    %v2356 = vmul.f32 0.5, %v2355
    %v2357 = vsub.f32 1.5, %v2356
    %v2358 = vmul.f32 %v2353, %v2357
    %vm2359 = vweird.f32 %v2060
    %vm2360 = vweird.f32 %v2353
    %vm2361 = vmor %vm2359, %vm2360
    %v2362 = vsel %vm2361, %v2353, %v2358
    %v2363 = vrsqrt.pop %v2061
    %v2364 = vmul.f32 %v2363, %v2061
    %v2365 = vmul.f32 %v2364, %v2363
    %v2366 = vmul.f32 0.5, %v2365
    %v2367 = vsub.f32 1.5, %v2366
    %v2368 = vmul.f32 %v2363, %v2367
    %vm2369 = vweird.f32 %v2061
    %vm2370 = vweird.f32 %v2363
    %vm2371 = vmor %vm2369, %vm2370
    %v2372 = vsel %vm2371, %v2363, %v2368
    %v2373 = vrsqrt.pop %v2062
    %v2374 = vmul.f32 %v2373, %v2062
    %v2375 = vmul.f32 %v2374, %v2373
    %v2376 = vmul.f32 0.5, %v2375
    %v2377 = vsub.f32 1.5, %v2376
    %v2378 = vmul.f32 %v2373, %v2377
    %vm2379 = vweird.f32 %v2062
    %vm2380 = vweird.f32 %v2373
    %vm2381 = vmor %vm2379, %vm2380
    %v2382 = vsel %vm2381, %v2373, %v2378
    %v2383 = vmul.f32 %v1839, %v2072
    %v2384 = vmul.f32 %v1840, %v2082
    %v2385 = vmul.f32 %v1841, %v2092
    %v2386 = vmul.f32 %v1842, %v2102
    %v2387 = vmul.f32 %v1843, %v2112
    %v2388 = vmul.f32 %v1844, %v2122
    %v2389 = vmul.f32 %v1845, %v2132
    %v2390 = vmul.f32 %v1846, %v2142
    %v2391 = vmul.f32 %v1847, %v2152
    %v2392 = vmul.f32 %v1848, %v2162
    %v2393 = vmul.f32 %v1849, %v2172
    %v2394 = vmul.f32 %v1850, %v2182
    %v2395 = vmul.f32 %v1851, %v2192
    %v2396 = vmul.f32 %v1852, %v2202
    %v2397 = vmul.f32 %v1853, %v2212
    %v2398 = vmul.f32 %v1854, %v2222
    %v2399 = vmul.f32 %v1855, %v2232
    %v2400 = vmul.f32 %v1856, %v2242
    %v2401 = vmul.f32 %v1857, %v2252
    %v2402 = vmul.f32 %v1858, %v2262
    %v2403 = vmul.f32 %v1859, %v2272
    %v2404 = vmul.f32 %v1860, %v2282
    %v2405 = vmul.f32 %v1861, %v2292
    %v2406 = vmul.f32 %v1862, %v2302
    %v2407 = vmul.f32 %v1863, %v2312
    %v2408 = vmul.f32 %v1864, %v2322
    %v2409 = vmul.f32 %v1865, %v2332
    %v2410 = vmul.f32 %v1866, %v2342
    %v2411 = vmul.f32 %v1867, %v2352
    %v2412 = vmul.f32 %v1868, %v2362
    %v2413 = vmul.f32 %v1869, %v2372
    %v2414 = vmul.f32 %v1870, %v2382
    %v2415 = vld [vmem:[%s4] sm:$0x1]
    %v2417 = vperm.slane %v2415, 0
    %v2419 = vmul.f32 %v2383, %v2417
    %v2420 = vmul.f32 %v2384, %v2417
    %v2421 = vmul.f32 %v2385, %v2417
    %v2422 = vmul.f32 %v2386, %v2417
    %v2423 = vmul.f32 %v2387, %v2417
    %v2424 = vmul.f32 %v2388, %v2417
    %v2425 = vmul.f32 %v2389, %v2417
    %v2426 = vmul.f32 %v2390, %v2417
    %v2427 = vmul.f32 %v2391, %v2417
    %v2428 = vmul.f32 %v2392, %v2417
    %v2429 = vmul.f32 %v2393, %v2417
    %v2430 = vmul.f32 %v2394, %v2417
    %v2431 = vmul.f32 %v2395, %v2417
    %v2432 = vmul.f32 %v2396, %v2417
    %v2433 = vmul.f32 %v2397, %v2417
    %v2434 = vmul.f32 %v2398, %v2417
    %v2435 = vmul.f32 %v2399, %v2417
    %v2436 = vmul.f32 %v2400, %v2417
    %v2437 = vmul.f32 %v2401, %v2417
    %v2438 = vmul.f32 %v2402, %v2417
    %v2439 = vmul.f32 %v2403, %v2417
    %v2440 = vmul.f32 %v2404, %v2417
    %v2441 = vmul.f32 %v2405, %v2417
    %v2442 = vmul.f32 %v2406, %v2417
    %v2443 = vmul.f32 %v2407, %v2417
    %v2444 = vmul.f32 %v2408, %v2417
    %v2445 = vmul.f32 %v2409, %v2417
    %v2446 = vmul.f32 %v2410, %v2417
    %v2447 = vmul.f32 %v2411, %v2417
    %v2448 = vmul.f32 %v2412, %v2417
    %v2449 = vmul.f32 %v2413, %v2417
    %v2450 = vmul.f32 %v2414, %v2417
    %v2451 = vld [vmem:[%s5] sm:$0x1]
    %v2453 = vperm.slane %v2451, 0
    %v2455 = vadd.f32 %v2419, %v2453
    %v2456 = vadd.f32 %v2420, %v2453
    %v2457 = vadd.f32 %v2421, %v2453
    %v2458 = vadd.f32 %v2422, %v2453
    %v2459 = vadd.f32 %v2423, %v2453
    %v2460 = vadd.f32 %v2424, %v2453
    %v2461 = vadd.f32 %v2425, %v2453
    %v2462 = vadd.f32 %v2426, %v2453
    %v2463 = vadd.f32 %v2427, %v2453
    %v2464 = vadd.f32 %v2428, %v2453
    %v2465 = vadd.f32 %v2429, %v2453
    %v2466 = vadd.f32 %v2430, %v2453
    %v2467 = vadd.f32 %v2431, %v2453
    %v2468 = vadd.f32 %v2432, %v2453
    %v2469 = vadd.f32 %v2433, %v2453
    %v2470 = vadd.f32 %v2434, %v2453
    %v2471 = vadd.f32 %v2435, %v2453
    %v2472 = vadd.f32 %v2436, %v2453
    %v2473 = vadd.f32 %v2437, %v2453
    %v2474 = vadd.f32 %v2438, %v2453
    %v2475 = vadd.f32 %v2439, %v2453
    %v2476 = vadd.f32 %v2440, %v2453
    %v2477 = vadd.f32 %v2441, %v2453
    %v2478 = vadd.f32 %v2442, %v2453
    %v2479 = vadd.f32 %v2443, %v2453
    %v2480 = vadd.f32 %v2444, %v2453
    %v2481 = vadd.f32 %v2445, %v2453
    %v2482 = vadd.f32 %v2446, %v2453
    %v2483 = vadd.f32 %v2447, %v2453
    %v2484 = vadd.f32 %v2448, %v2453
    %v2485 = vadd.f32 %v2449, %v2453
    %v2486 = vadd.f32 %v2450, %v2453
    %v2487 = vld [vmem:[%s6] sm:$0xff]
    %v2488 = vld [vmem:[%s6 + $0x8] sm:$0xff]
    %v2489 = vld [vmem:[%s6 + $0x10] sm:$0xff]
    %v2490 = vld [vmem:[%s6 + $0x18] sm:$0xff]
    %v2491 = vld [vmem:[%s7] sm:$0x1]
    %v2493 = vperm.slane %v2491, 0
    %v2496 = vsel %vm86, %v2455, 0
    %v2499 = vsel %vm86, %v2456, 0
    %v2502 = vsel %vm86, %v2457, 0
    %v2505 = vsel %vm86, %v2458, 0
    %v2508 = vsel %vm86, %v2459, 0
    %v2511 = vsel %vm86, %v2460, 0
    %v2514 = vsel %vm86, %v2461, 0
    %v2517 = vsel %vm86, %v2462, 0
    %v2520 = vsel %vm86, %v2463, 0
    %v2523 = vsel %vm86, %v2464, 0
    %v2526 = vsel %vm86, %v2465, 0
    %v2529 = vsel %vm86, %v2466, 0
    %v2532 = vsel %vm86, %v2467, 0
    %v2535 = vsel %vm86, %v2468, 0
    %v2538 = vsel %vm86, %v2469, 0
    %v2541 = vsel %vm86, %v2470, 0
    %v2544 = vsel %vm86, %v2471, 0
    %v2547 = vsel %vm86, %v2472, 0
    %v2550 = vsel %vm86, %v2473, 0
    %v2553 = vsel %vm86, %v2474, 0
    %v2556 = vsel %vm86, %v2475, 0
    %v2559 = vsel %vm86, %v2476, 0
    %v2562 = vsel %vm86, %v2477, 0
    %v2565 = vsel %vm86, %v2478, 0
    %v2568 = vsel %vm86, %v2479, 0
    %v2571 = vsel %vm86, %v2480, 0
    %v2574 = vsel %vm86, %v2481, 0
    %v2577 = vsel %vm86, %v2482, 0
    %v2580 = vsel %vm86, %v2483, 0
    %v2583 = vsel %vm86, %v2484, 0
    %v2586 = vsel %vm86, %v2485, 0
    %v2589 = vsel %vm86, %v2486, 0
    %2591 = vmatpush.msra.mxu0 0.0
    %2592 = vmatpush.msra.mxu0 0.0
    %2593 = vmatpush.msra.mxu0 0.0
    %2594 = vmatpush.msra.mxu0 0.0
    %2595 = vmatpush.msra.mxu0 0.0
    %2596 = vmatpush.msra.mxu0 0.0
    %2597 = vmatpush.msra.mxu0 0.0
    %2598 = vmatpush.msra.mxu0 0.0
    %2599 = vmatpush.msra.mxu0 0.0
    %2600 = vmatpush.msra.mxu0 0.0
    %2601 = vmatpush.msra.mxu0 0.0
    %2602 = vmatpush.msra.mxu0 0.0
    %2603 = vmatpush.msra.mxu0 %v2490
    %2604 = vmatpush.msra.mxu0 %v2489
    %2605 = vmatpush.msra.mxu0 %v2488
    %2606 = vmatpush.msra.mxu0 %v2487
    %2607 = vmatmul.f32.gmra.mxu0 %v2496
    %v2608 = vpop.f32.mrf.mxu0
    %v2609 = vadd.f32 %v2493, %v2608
    %2610 = vmatmul.f32.gmra.mxu0 %v2499
    %v2611 = vpop.f32.mrf.mxu0
    %v2612 = vadd.f32 %v2493, %v2611
    %2613 = vmatmul.f32.gmra.mxu0 %v2502
    %v2614 = vpop.f32.mrf.mxu0
    %v2615 = vadd.f32 %v2493, %v2614
    %2616 = vmatmul.f32.gmra.mxu0 %v2505
    %v2617 = vpop.f32.mrf.mxu0
    %v2618 = vadd.f32 %v2493, %v2617
    %2619 = vmatmul.f32.gmra.mxu0 %v2508
    %v2620 = vpop.f32.mrf.mxu0
    %v2621 = vadd.f32 %v2493, %v2620
    %2622 = vmatmul.f32.gmra.mxu0 %v2511
    %v2623 = vpop.f32.mrf.mxu0
    %v2624 = vadd.f32 %v2493, %v2623
    %2625 = vmatmul.f32.gmra.mxu0 %v2514
    %v2626 = vpop.f32.mrf.mxu0
    %v2627 = vadd.f32 %v2493, %v2626
    %2628 = vmatmul.f32.gmra.mxu0 %v2517
    %v2629 = vpop.f32.mrf.mxu0
    %v2630 = vadd.f32 %v2493, %v2629
    %2631 = vmatmul.f32.gmra.mxu0 %v2520
    %v2632 = vpop.f32.mrf.mxu0
    %v2633 = vadd.f32 %v2493, %v2632
    %2634 = vmatmul.f32.gmra.mxu0 %v2523
    %v2635 = vpop.f32.mrf.mxu0
    %v2636 = vadd.f32 %v2493, %v2635
    %2637 = vmatmul.f32.gmra.mxu0 %v2526
    %v2638 = vpop.f32.mrf.mxu0
    %v2639 = vadd.f32 %v2493, %v2638
    %2640 = vmatmul.f32.gmra.mxu0 %v2529
    %v2641 = vpop.f32.mrf.mxu0
    %v2642 = vadd.f32 %v2493, %v2641
    %2643 = vmatmul.f32.gmra.mxu0 %v2532
    %v2644 = vpop.f32.mrf.mxu0
    %v2645 = vadd.f32 %v2493, %v2644
    %2646 = vmatmul.f32.gmra.mxu0 %v2535
    %v2647 = vpop.f32.mrf.mxu0
    %v2648 = vadd.f32 %v2493, %v2647
    %2649 = vmatmul.f32.gmra.mxu0 %v2538
    %v2650 = vpop.f32.mrf.mxu0
    %v2651 = vadd.f32 %v2493, %v2650
    %2652 = vmatmul.f32.gmra.mxu0 %v2541
    %v2653 = vpop.f32.mrf.mxu0
    %v2654 = vadd.f32 %v2493, %v2653
    %2655 = vmatmul.f32.gmra.mxu0 %v2544
    %v2656 = vpop.f32.mrf.mxu0
    %v2657 = vadd.f32 %v2493, %v2656
    %2658 = vmatmul.f32.gmra.mxu0 %v2547
    %v2659 = vpop.f32.mrf.mxu0
    %v2660 = vadd.f32 %v2493, %v2659
    %2661 = vmatmul.f32.gmra.mxu0 %v2550
    %v2662 = vpop.f32.mrf.mxu0
    %v2663 = vadd.f32 %v2493, %v2662
    %2664 = vmatmul.f32.gmra.mxu0 %v2553
    %v2665 = vpop.f32.mrf.mxu0
    %v2666 = vadd.f32 %v2493, %v2665
    %2667 = vmatmul.f32.gmra.mxu0 %v2556
    %v2668 = vpop.f32.mrf.mxu0
    %v2669 = vadd.f32 %v2493, %v2668
    %2670 = vmatmul.f32.gmra.mxu0 %v2559
    %v2671 = vpop.f32.mrf.mxu0
    %v2672 = vadd.f32 %v2493, %v2671
    %2673 = vmatmul.f32.gmra.mxu0 %v2562
    %v2674 = vpop.f32.mrf.mxu0
    %v2675 = vadd.f32 %v2493, %v2674
    %2676 = vmatmul.f32.gmra.mxu0 %v2565
    %v2677 = vpop.f32.mrf.mxu0
    %v2678 = vadd.f32 %v2493, %v2677
    %2679 = vmatmul.f32.gmra.mxu0 %v2568
    %v2680 = vpop.f32.mrf.mxu0
    %v2681 = vadd.f32 %v2493, %v2680
    %2682 = vmatmul.f32.gmra.mxu0 %v2571
    %v2683 = vpop.f32.mrf.mxu0
    %v2684 = vadd.f32 %v2493, %v2683
    %2685 = vmatmul.f32.gmra.mxu0 %v2574
    %v2686 = vpop.f32.mrf.mxu0
    %v2687 = vadd.f32 %v2493, %v2686
    %2688 = vmatmul.f32.gmra.mxu0 %v2577
    %v2689 = vpop.f32.mrf.mxu0
    %v2690 = vadd.f32 %v2493, %v2689
    %2691 = vmatmul.f32.gmra.mxu0 %v2580
    %v2692 = vpop.f32.mrf.mxu0
    %v2693 = vadd.f32 %v2493, %v2692
    %2694 = vmatmul.f32.gmra.mxu0 %v2583
    %v2695 = vpop.f32.mrf.mxu0
    %v2696 = vadd.f32 %v2493, %v2695
    %2697 = vmatmul.f32.gmra.mxu0 %v2586
    %v2698 = vpop.f32.mrf.mxu0
    %v2699 = vadd.f32 %v2493, %v2698
    %2700 = vmatmul.f32.gmra.mxu0 %v2589
    %v2701 = vpop.f32.mrf.mxu0
    %v2702 = vadd.f32 %v2493, %v2701
    %2703 = vdwg.mxu0
    %2704 = vst [vmem:[#allocation5] sm:$0xff] %v2609
    %2705 = vst [vmem:[#allocation5 + $0x8] sm:$0xff] %v2612
    %2706 = vst [vmem:[#allocation5 + $0x10] sm:$0xff] %v2615
    %2707 = vst [vmem:[#allocation5 + $0x18] sm:$0xff] %v2618
    %2708 = vst [vmem:[#allocation5 + $0x20] sm:$0xff] %v2621
    %2709 = vst [vmem:[#allocation5 + $0x28] sm:$0xff] %v2624
    %2710 = vst [vmem:[#allocation5 + $0x30] sm:$0xff] %v2627
    %2711 = vst [vmem:[#allocation5 + $0x38] sm:$0xff] %v2630
    %2712 = vst [vmem:[#allocation5 + $0x40] sm:$0xff] %v2633
    %2713 = vst [vmem:[#allocation5 + $0x48] sm:$0xff] %v2636
    %2714 = vst [vmem:[#allocation5 + $0x50] sm:$0xff] %v2639
    %2715 = vst [vmem:[#allocation5 + $0x58] sm:$0xff] %v2642
    %2716 = vst [vmem:[#allocation5 + $0x60] sm:$0xff] %v2645
    %2717 = vst [vmem:[#allocation5 + $0x68] sm:$0xff] %v2648
    %2718 = vst [vmem:[#allocation5 + $0x70] sm:$0xff] %v2651
    %2719 = vst [vmem:[#allocation5 + $0x78] sm:$0xff] %v2654
    %2720 = vst [vmem:[#allocation5 + $0x80] sm:$0xff] %v2657
    %2721 = vst [vmem:[#allocation5 + $0x88] sm:$0xff] %v2660
    %2722 = vst [vmem:[#allocation5 + $0x90] sm:$0xff] %v2663
    %2723 = vst [vmem:[#allocation5 + $0x98] sm:$0xff] %v2666
    %2724 = vst [vmem:[#allocation5 + $0xa0] sm:$0xff] %v2669
    %2725 = vst [vmem:[#allocation5 + $0xa8] sm:$0xff] %v2672
    %2726 = vst [vmem:[#allocation5 + $0xb0] sm:$0xff] %v2675
    %2727 = vst [vmem:[#allocation5 + $0xb8] sm:$0xff] %v2678
    %2728 = vst [vmem:[#allocation5 + $0xc0] sm:$0xff] %v2681
    %2729 = vst [vmem:[#allocation5 + $0xc8] sm:$0xff] %v2684
    %2730 = vst [vmem:[#allocation5 + $0xd0] sm:$0xff] %v2687
    %2731 = vst [vmem:[#allocation5 + $0xd8] sm:$0xff] %v2690
    %2732 = vst [vmem:[#allocation5 + $0xe0] sm:$0xff] %v2693
    %2733 = vst [vmem:[#allocation5 + $0xe8] sm:$0xff] %v2696
    %2734 = vst [vmem:[#allocation5 + $0xf0] sm:$0xff] %v2699
    %2735 = vst [vmem:[#allocation5 + $0xf8] sm:$0xff] %v2702
    %v2736 = vld [vmem:[%s1] sm:$0xff]
    %v2737 = vld [vmem:[%s1 + $0x8] sm:$0xff]
    %v2738 = vld [vmem:[%s1 + $0x10] sm:$0xff]
    %v2739 = vld [vmem:[%s1 + $0x18] sm:$0xff]
    %v2740 = vld [vmem:[%s1 + $0x20] sm:$0xff]
    %v2741 = vld [vmem:[%s1 + $0x28] sm:$0xff]
    %v2742 = vld [vmem:[%s1 + $0x30] sm:$0xff]
    %v2743 = vld [vmem:[%s1 + $0x38] sm:$0xff]
    %v2744 = vld [vmem:[%s1 + $0x40] sm:$0xff]
    %v2745 = vld [vmem:[%s1 + $0x48] sm:$0xff]
    %v2746 = vld [vmem:[%s1 + $0x50] sm:$0xff]
    %v2747 = vld [vmem:[%s1 + $0x58] sm:$0xff]
    %v2748 = vld [vmem:[%s1 + $0x60] sm:$0xff]
    %v2749 = vld [vmem:[%s1 + $0x68] sm:$0xff]
    %v2750 = vld [vmem:[%s1 + $0x70] sm:$0xff]
    %v2751 = vld [vmem:[%s1 + $0x78] sm:$0xff]
    %v2752 = vld [vmem:[%s1 + $0x80] sm:$0xff]
    %v2753 = vld [vmem:[%s1 + $0x88] sm:$0xff]
    %v2754 = vld [vmem:[%s1 + $0x90] sm:$0xff]
    %v2755 = vld [vmem:[%s1 + $0x98] sm:$0xff]
    %v2756 = vld [vmem:[%s1 + $0xa0] sm:$0xff]
    %v2757 = vld [vmem:[%s1 + $0xa8] sm:$0xff]
    %v2758 = vld [vmem:[%s1 + $0xb0] sm:$0xff]
    %v2759 = vld [vmem:[%s1 + $0xb8] sm:$0xff]
    %v2760 = vld [vmem:[%s1 + $0xc0] sm:$0xff]
    %v2761 = vld [vmem:[%s1 + $0xc8] sm:$0xff]
    %v2762 = vld [vmem:[%s1 + $0xd0] sm:$0xff]
    %v2763 = vld [vmem:[%s1 + $0xd8] sm:$0xff]
    %v2764 = vld [vmem:[%s1 + $0xe0] sm:$0xff]
    %v2765 = vld [vmem:[%s1 + $0xe8] sm:$0xff]
    %v2766 = vld [vmem:[%s1 + $0xf0] sm:$0xff]
    %v2767 = vld [vmem:[%s1 + $0xf8] sm:$0xff]
    %v2768 = vsub.f32 %v2609, %v2736
    %v2769 = vsub.f32 %v2612, %v2737
    %v2770 = vsub.f32 %v2615, %v2738
    %v2771 = vsub.f32 %v2618, %v2739
    %v2772 = vsub.f32 %v2621, %v2740
    %v2773 = vsub.f32 %v2624, %v2741
    %v2774 = vsub.f32 %v2627, %v2742
    %v2775 = vsub.f32 %v2630, %v2743
    %v2776 = vsub.f32 %v2633, %v2744
    %v2777 = vsub.f32 %v2636, %v2745
    %v2778 = vsub.f32 %v2639, %v2746
    %v2779 = vsub.f32 %v2642, %v2747
    %v2780 = vsub.f32 %v2645, %v2748
    %v2781 = vsub.f32 %v2648, %v2749
    %v2782 = vsub.f32 %v2651, %v2750
    %v2783 = vsub.f32 %v2654, %v2751
    %v2784 = vsub.f32 %v2657, %v2752
    %v2785 = vsub.f32 %v2660, %v2753
    %v2786 = vsub.f32 %v2663, %v2754
    %v2787 = vsub.f32 %v2666, %v2755
    %v2788 = vsub.f32 %v2669, %v2756
    %v2789 = vsub.f32 %v2672, %v2757
    %v2790 = vsub.f32 %v2675, %v2758
    %v2791 = vsub.f32 %v2678, %v2759
    %v2792 = vsub.f32 %v2681, %v2760
    %v2793 = vsub.f32 %v2684, %v2761
    %v2794 = vsub.f32 %v2687, %v2762
    %v2795 = vsub.f32 %v2690, %v2763
    %v2796 = vsub.f32 %v2693, %v2764
    %v2797 = vsub.f32 %v2696, %v2765
    %v2798 = vsub.f32 %v2699, %v2766
    %v2799 = vsub.f32 %v2702, %v2767
    %v2800 = vand.u32 2147483647, %v2768
    %v2801 = vand.u32 2147483647, %v2769
    %v2802 = vand.u32 2147483647, %v2770
    %v2803 = vand.u32 2147483647, %v2771
    %v2804 = vand.u32 2147483647, %v2772
    %v2805 = vand.u32 2147483647, %v2773
    %v2806 = vand.u32 2147483647, %v2774
    %v2807 = vand.u32 2147483647, %v2775
    %v2808 = vand.u32 2147483647, %v2776
    %v2809 = vand.u32 2147483647, %v2777
    %v2810 = vand.u32 2147483647, %v2778
    %v2811 = vand.u32 2147483647, %v2779
    %v2812 = vand.u32 2147483647, %v2780
    %v2813 = vand.u32 2147483647, %v2781
    %v2814 = vand.u32 2147483647, %v2782
    %v2815 = vand.u32 2147483647, %v2783
    %v2816 = vand.u32 2147483647, %v2784
    %v2817 = vand.u32 2147483647, %v2785
    %v2818 = vand.u32 2147483647, %v2786
    %v2819 = vand.u32 2147483647, %v2787
    %v2820 = vand.u32 2147483647, %v2788
    %v2821 = vand.u32 2147483647, %v2789
    %v2822 = vand.u32 2147483647, %v2790
    %v2823 = vand.u32 2147483647, %v2791
    %v2824 = vand.u32 2147483647, %v2792
    %v2825 = vand.u32 2147483647, %v2793
    %v2826 = vand.u32 2147483647, %v2794
    %v2827 = vand.u32 2147483647, %v2795
    %v2828 = vand.u32 2147483647, %v2796
    %v2829 = vand.u32 2147483647, %v2797
    %v2830 = vand.u32 2147483647, %v2798
    %v2831 = vand.u32 2147483647, %v2799
    %vm2832 = vcmp.lt.f32.partialorder %v2800, 0.005
    %vm2833 = vcmp.lt.f32.partialorder %v2801, 0.005
    %vm2834 = vcmp.lt.f32.partialorder %v2802, 0.005
    %vm2835 = vcmp.lt.f32.partialorder %v2803, 0.005
    %vm2836 = vcmp.lt.f32.partialorder %v2804, 0.005
    %vm2837 = vcmp.lt.f32.partialorder %v2805, 0.005
    %vm2838 = vcmp.lt.f32.partialorder %v2806, 0.005
    %vm2839 = vcmp.lt.f32.partialorder %v2807, 0.005
    %vm2840 = vcmp.lt.f32.partialorder %v2808, 0.005
    %vm2841 = vcmp.lt.f32.partialorder %v2809, 0.005
    %vm2842 = vcmp.lt.f32.partialorder %v2810, 0.005
    %vm2843 = vcmp.lt.f32.partialorder %v2811, 0.005
    %vm2844 = vcmp.lt.f32.partialorder %v2812, 0.005
    %vm2845 = vcmp.lt.f32.partialorder %v2813, 0.005
    %vm2846 = vcmp.lt.f32.partialorder %v2814, 0.005
    %vm2847 = vcmp.lt.f32.partialorder %v2815, 0.005
    %vm2848 = vcmp.lt.f32.partialorder %v2816, 0.005
    %vm2849 = vcmp.lt.f32.partialorder %v2817, 0.005
    %vm2850 = vcmp.lt.f32.partialorder %v2818, 0.005
    %vm2851 = vcmp.lt.f32.partialorder %v2819, 0.005
    %vm2852 = vcmp.lt.f32.partialorder %v2820, 0.005
    %vm2853 = vcmp.lt.f32.partialorder %v2821, 0.005
    %vm2854 = vcmp.lt.f32.partialorder %v2822, 0.005
    %vm2855 = vcmp.lt.f32.partialorder %v2823, 0.005
    %vm2856 = vcmp.lt.f32.partialorder %v2824, 0.005
    %vm2857 = vcmp.lt.f32.partialorder %v2825, 0.005
    %vm2858 = vcmp.lt.f32.partialorder %v2826, 0.005
    %vm2859 = vcmp.lt.f32.partialorder %v2827, 0.005
    %vm2860 = vcmp.lt.f32.partialorder %v2828, 0.005
    %vm2861 = vcmp.lt.f32.partialorder %v2829, 0.005
    %vm2862 = vcmp.lt.f32.partialorder %v2830, 0.005
    %vm2863 = vcmp.lt.f32.partialorder %v2831, 0.005
    %v2864 = vmul.f32 %v2768, 0.5
    %v2865 = vmul.f32 %v2769, 0.5
    %v2866 = vmul.f32 %v2770, 0.5
    %v2867 = vmul.f32 %v2771, 0.5
    %v2868 = vmul.f32 %v2772, 0.5
    %v2869 = vmul.f32 %v2773, 0.5
    %v2870 = vmul.f32 %v2774, 0.5
    %v2871 = vmul.f32 %v2775, 0.5
    %v2872 = vmul.f32 %v2776, 0.5
    %v2873 = vmul.f32 %v2777, 0.5
    %v2874 = vmul.f32 %v2778, 0.5
    %v2875 = vmul.f32 %v2779, 0.5
    %v2876 = vmul.f32 %v2780, 0.5
    %v2877 = vmul.f32 %v2781, 0.5
    %v2878 = vmul.f32 %v2782, 0.5
    %v2879 = vmul.f32 %v2783, 0.5
    %v2880 = vmul.f32 %v2784, 0.5
    %v2881 = vmul.f32 %v2785, 0.5
    %v2882 = vmul.f32 %v2786, 0.5
    %v2883 = vmul.f32 %v2787, 0.5
    %v2884 = vmul.f32 %v2788, 0.5
    %v2885 = vmul.f32 %v2789, 0.5
    %v2886 = vmul.f32 %v2790, 0.5
    %v2887 = vmul.f32 %v2791, 0.5
    %v2888 = vmul.f32 %v2792, 0.5
    %v2889 = vmul.f32 %v2793, 0.5
    %v2890 = vmul.f32 %v2794, 0.5
    %v2891 = vmul.f32 %v2795, 0.5
    %v2892 = vmul.f32 %v2796, 0.5
    %v2893 = vmul.f32 %v2797, 0.5
    %v2894 = vmul.f32 %v2798, 0.5
    %v2895 = vmul.f32 %v2799, 0.5
    %v2896 = vmul.f32 %v2864, %v2768
    %v2897 = vmul.f32 %v2865, %v2769
    %v2898 = vmul.f32 %v2866, %v2770
    %v2899 = vmul.f32 %v2867, %v2771
    %v2900 = vmul.f32 %v2868, %v2772
    %v2901 = vmul.f32 %v2869, %v2773
    %v2902 = vmul.f32 %v2870, %v2774
    %v2903 = vmul.f32 %v2871, %v2775
    %v2904 = vmul.f32 %v2872, %v2776
    %v2905 = vmul.f32 %v2873, %v2777
    %v2906 = vmul.f32 %v2874, %v2778
    %v2907 = vmul.f32 %v2875, %v2779
    %v2908 = vmul.f32 %v2876, %v2780
    %v2909 = vmul.f32 %v2877, %v2781
    %v2910 = vmul.f32 %v2878, %v2782
    %v2911 = vmul.f32 %v2879, %v2783
    %v2912 = vmul.f32 %v2880, %v2784
    %v2913 = vmul.f32 %v2881, %v2785
    %v2914 = vmul.f32 %v2882, %v2786
    %v2915 = vmul.f32 %v2883, %v2787
    %v2916 = vmul.f32 %v2884, %v2788
    %v2917 = vmul.f32 %v2885, %v2789
    %v2918 = vmul.f32 %v2886, %v2790
    %v2919 = vmul.f32 %v2887, %v2791
    %v2920 = vmul.f32 %v2888, %v2792
    %v2921 = vmul.f32 %v2889, %v2793
    %v2922 = vmul.f32 %v2890, %v2794
    %v2923 = vmul.f32 %v2891, %v2795
    %v2924 = vmul.f32 %v2892, %v2796
    %v2925 = vmul.f32 %v2893, %v2797
    %v2926 = vmul.f32 %v2894, %v2798
    %v2927 = vmul.f32 %v2895, %v2799
    %v2928 = vrcp.pop 0.005
    %v2929 = vmul.f32 0.005, %v2928
    %v2930 = vsub.f32 1.0, %v2929
    %v2931 = vmul.f32 %v2928, %v2930
    %v2932 = vadd.f32 %v2928, %v2931
    %vm2933 = vweird.f32 %v2928
    %v2934 = vsel %vm2933, %v2928, %v2932
    %v2935 = vmul.f32 %v2896, %v2934
    %v2936 = vmul.f32 %v2897, %v2934
    %v2937 = vmul.f32 %v2898, %v2934
    %v2938 = vmul.f32 %v2899, %v2934
    %v2939 = vmul.f32 %v2900, %v2934
    %v2940 = vmul.f32 %v2901, %v2934
    %v2941 = vmul.f32 %v2902, %v2934
    %v2942 = vmul.f32 %v2903, %v2934
    %v2943 = vmul.f32 %v2904, %v2934
    %v2944 = vmul.f32 %v2905, %v2934
    %v2945 = vmul.f32 %v2906, %v2934
    %v2946 = vmul.f32 %v2907, %v2934
    %v2947 = vmul.f32 %v2908, %v2934
    %v2948 = vmul.f32 %v2909, %v2934
    %v2949 = vmul.f32 %v2910, %v2934
    %v2950 = vmul.f32 %v2911, %v2934
    %v2951 = vmul.f32 %v2912, %v2934
    %v2952 = vmul.f32 %v2913, %v2934
    %v2953 = vmul.f32 %v2914, %v2934
    %v2954 = vmul.f32 %v2915, %v2934
    %v2955 = vmul.f32 %v2916, %v2934
    %v2956 = vmul.f32 %v2917, %v2934
    %v2957 = vmul.f32 %v2918, %v2934
    %v2958 = vmul.f32 %v2919, %v2934
    %v2959 = vmul.f32 %v2920, %v2934
    %v2960 = vmul.f32 %v2921, %v2934
    %v2961 = vmul.f32 %v2922, %v2934
    %v2962 = vmul.f32 %v2923, %v2934
    %v2963 = vmul.f32 %v2924, %v2934
    %v2964 = vmul.f32 %v2925, %v2934
    %v2965 = vmul.f32 %v2926, %v2934
    %v2966 = vmul.f32 %v2927, %v2934
    %v2967 = vsub.f32 %v2800, 0.0025
    %v2968 = vsub.f32 %v2801, 0.0025
    %v2969 = vsub.f32 %v2802, 0.0025
    %v2970 = vsub.f32 %v2803, 0.0025
    %v2971 = vsub.f32 %v2804, 0.0025
    %v2972 = vsub.f32 %v2805, 0.0025
    %v2973 = vsub.f32 %v2806, 0.0025
    %v2974 = vsub.f32 %v2807, 0.0025
    %v2975 = vsub.f32 %v2808, 0.0025
    %v2976 = vsub.f32 %v2809, 0.0025
    %v2977 = vsub.f32 %v2810, 0.0025
    %v2978 = vsub.f32 %v2811, 0.0025
    %v2979 = vsub.f32 %v2812, 0.0025
    %v2980 = vsub.f32 %v2813, 0.0025
    %v2981 = vsub.f32 %v2814, 0.0025
    %v2982 = vsub.f32 %v2815, 0.0025
    %v2983 = vsub.f32 %v2816, 0.0025
    %v2984 = vsub.f32 %v2817, 0.0025
    %v2985 = vsub.f32 %v2818, 0.0025
    %v2986 = vsub.f32 %v2819, 0.0025
    %v2987 = vsub.f32 %v2820, 0.0025
    %v2988 = vsub.f32 %v2821, 0.0025
    %v2989 = vsub.f32 %v2822, 0.0025
    %v2990 = vsub.f32 %v2823, 0.0025
    %v2991 = vsub.f32 %v2824, 0.0025
    %v2992 = vsub.f32 %v2825, 0.0025
    %v2993 = vsub.f32 %v2826, 0.0025
    %v2994 = vsub.f32 %v2827, 0.0025
    %v2995 = vsub.f32 %v2828, 0.0025
    %v2996 = vsub.f32 %v2829, 0.0025
    %v2997 = vsub.f32 %v2830, 0.0025
    %v2998 = vsub.f32 %v2831, 0.0025
    %v2999 = vsel %vm2832, %v2935, %v2967
    %v3000 = vsel %vm2833, %v2936, %v2968
    %v3001 = vsel %vm2834, %v2937, %v2969
    %v3002 = vsel %vm2835, %v2938, %v2970
    %v3003 = vsel %vm2836, %v2939, %v2971
    %v3004 = vsel %vm2837, %v2940, %v2972
    %v3005 = vsel %vm2838, %v2941, %v2973
    %v3006 = vsel %vm2839, %v2942, %v2974
    %v3007 = vsel %vm2840, %v2943, %v2975
    %v3008 = vsel %vm2841, %v2944, %v2976
    %v3009 = vsel %vm2842, %v2945, %v2977
    %v3010 = vsel %vm2843, %v2946, %v2978
    %v3011 = vsel %vm2844, %v2947, %v2979
    %v3012 = vsel %vm2845, %v2948, %v2980
    %v3013 = vsel %vm2846, %v2949, %v2981
    %v3014 = vsel %vm2847, %v2950, %v2982
    %v3015 = vsel %vm2848, %v2951, %v2983
    %v3016 = vsel %vm2849, %v2952, %v2984
    %v3017 = vsel %vm2850, %v2953, %v2985
    %v3018 = vsel %vm2851, %v2954, %v2986
    %v3019 = vsel %vm2852, %v2955, %v2987
    %v3020 = vsel %vm2853, %v2956, %v2988
    %v3021 = vsel %vm2854, %v2957, %v2989
    %v3022 = vsel %vm2855, %v2958, %v2990
    %v3023 = vsel %vm2856, %v2959, %v2991
    %v3024 = vsel %vm2857, %v2960, %v2992
    %v3025 = vsel %vm2858, %v2961, %v2993
    %v3026 = vsel %vm2859, %v2962, %v2994
    %v3027 = vsel %vm2860, %v2963, %v2995
    %v3028 = vsel %vm2861, %v2964, %v2996
    %v3029 = vsel %vm2862, %v2965, %v2997
    %v3030 = vsel %vm2863, %v2966, %v2998
    %3031 = vadd.xlane.f32.xlu0 %v2999
    %v3032 = vpop.xlane.xlu0 %3031
    %3033 = vadd.xlane.f32.xlu0 %v3000
    %v3034 = vpop.xlane.xlu0 %3033
    %3035 = vadd.xlane.f32.xlu0 %v3001
    %v3036 = vpop.xlane.xlu0 %3035
    %3037 = vadd.xlane.f32.xlu0 %v3002
    %v3038 = vpop.xlane.xlu0 %3037
    %3039 = vadd.xlane.f32.xlu0 %v3003
    %v3040 = vpop.xlane.xlu0 %3039
    %3041 = vadd.xlane.f32.xlu0 %v3004
    %v3042 = vpop.xlane.xlu0 %3041
    %3043 = vadd.xlane.f32.xlu0 %v3005
    %v3044 = vpop.xlane.xlu0 %3043
    %3045 = vadd.xlane.f32.xlu0 %v3006
    %v3046 = vpop.xlane.xlu0 %3045
    %3047 = vadd.xlane.f32.xlu0 %v3007
    %v3048 = vpop.xlane.xlu0 %3047
    %3049 = vadd.xlane.f32.xlu0 %v3008
    %v3050 = vpop.xlane.xlu0 %3049
    %3051 = vadd.xlane.f32.xlu0 %v3009
    %v3052 = vpop.xlane.xlu0 %3051
    %3053 = vadd.xlane.f32.xlu0 %v3010
    %v3054 = vpop.xlane.xlu0 %3053
    %3055 = vadd.xlane.f32.xlu0 %v3011
    %v3056 = vpop.xlane.xlu0 %3055
    %3057 = vadd.xlane.f32.xlu0 %v3012
    %v3058 = vpop.xlane.xlu0 %3057
    %3059 = vadd.xlane.f32.xlu0 %v3013
    %v3060 = vpop.xlane.xlu0 %3059
    %3061 = vadd.xlane.f32.xlu0 %v3014
    %v3062 = vpop.xlane.xlu0 %3061
    %3063 = vadd.xlane.f32.xlu0 %v3015
    %v3064 = vpop.xlane.xlu0 %3063
    %3065 = vadd.xlane.f32.xlu0 %v3016
    %v3066 = vpop.xlane.xlu0 %3065
    %3067 = vadd.xlane.f32.xlu0 %v3017
    %v3068 = vpop.xlane.xlu0 %3067
    %3069 = vadd.xlane.f32.xlu0 %v3018
    %v3070 = vpop.xlane.xlu0 %3069
    %3071 = vadd.xlane.f32.xlu0 %v3019
    %v3072 = vpop.xlane.xlu0 %3071
    %3073 = vadd.xlane.f32.xlu0 %v3020
    %v3074 = vpop.xlane.xlu0 %3073
    %3075 = vadd.xlane.f32.xlu0 %v3021
    %v3076 = vpop.xlane.xlu0 %3075
    %3077 = vadd.xlane.f32.xlu0 %v3022
    %v3078 = vpop.xlane.xlu0 %3077
    %3079 = vadd.xlane.f32.xlu0 %v3023
    %v3080 = vpop.xlane.xlu0 %3079
    %3081 = vadd.xlane.f32.xlu0 %v3024
    %v3082 = vpop.xlane.xlu0 %3081
    %3083 = vadd.xlane.f32.xlu0 %v3025
    %v3084 = vpop.xlane.xlu0 %3083
    %3085 = vadd.xlane.f32.xlu0 %v3026
    %v3086 = vpop.xlane.xlu0 %3085
    %3087 = vadd.xlane.f32.xlu0 %v3027
    %v3088 = vpop.xlane.xlu0 %3087
    %3089 = vadd.xlane.f32.xlu0 %v3028
    %v3090 = vpop.xlane.xlu0 %3089
    %3091 = vadd.xlane.f32.xlu0 %v3029
    %v3092 = vpop.xlane.xlu0 %3091
    %3093 = vadd.xlane.f32.xlu0 %v3030
    %v3094 = vpop.xlane.xlu0 %3093
    %v3095 = vmul.f32 %v3032, 0.25
    %v3096 = vmul.f32 %v3034, 0.25
    %v3097 = vmul.f32 %v3036, 0.25
    %v3098 = vmul.f32 %v3038, 0.25
    %v3099 = vmul.f32 %v3040, 0.25
    %v3100 = vmul.f32 %v3042, 0.25
    %v3101 = vmul.f32 %v3044, 0.25
    %v3102 = vmul.f32 %v3046, 0.25
    %v3103 = vmul.f32 %v3048, 0.25
    %v3104 = vmul.f32 %v3050, 0.25
    %v3105 = vmul.f32 %v3052, 0.25
    %v3106 = vmul.f32 %v3054, 0.25
    %v3107 = vmul.f32 %v3056, 0.25
    %v3108 = vmul.f32 %v3058, 0.25
    %v3109 = vmul.f32 %v3060, 0.25
    %v3110 = vmul.f32 %v3062, 0.25
    %v3111 = vmul.f32 %v3064, 0.25
    %v3112 = vmul.f32 %v3066, 0.25
    %v3113 = vmul.f32 %v3068, 0.25
    %v3114 = vmul.f32 %v3070, 0.25
    %v3115 = vmul.f32 %v3072, 0.25
    %v3116 = vmul.f32 %v3074, 0.25
    %v3117 = vmul.f32 %v3076, 0.25
    %v3118 = vmul.f32 %v3078, 0.25
    %v3119 = vmul.f32 %v3080, 0.25
    %v3120 = vmul.f32 %v3082, 0.25
    %v3121 = vmul.f32 %v3084, 0.25
    %v3122 = vmul.f32 %v3086, 0.25
    %v3123 = vmul.f32 %v3088, 0.25
    %v3124 = vmul.f32 %v3090, 0.25
    %v3125 = vmul.f32 %v3092, 0.25
    %v3126 = vmul.f32 %v3094, 0.25
    %vm3127 = vcmask 7168
    %3128 = vst.msk [vmem:[%s9] sm:$0xff] %vm3127, %v3095
    %3129 = vst.msk [vmem:[%s9 + $0x8] sm:$0xff] %vm3127, %v3096
    %3130 = vst.msk [vmem:[%s9 + $0x10] sm:$0xff] %vm3127, %v3097
    %3131 = vst.msk [vmem:[%s9 + $0x18] sm:$0xff] %vm3127, %v3098
    %3132 = vst.msk [vmem:[%s9 + $0x20] sm:$0xff] %vm3127, %v3099
    %3133 = vst.msk [vmem:[%s9 + $0x28] sm:$0xff] %vm3127, %v3100
    %3134 = vst.msk [vmem:[%s9 + $0x30] sm:$0xff] %vm3127, %v3101
    %3135 = vst.msk [vmem:[%s9 + $0x38] sm:$0xff] %vm3127, %v3102
    %3136 = vst.msk [vmem:[%s9 + $0x40] sm:$0xff] %vm3127, %v3103
    %3137 = vst.msk [vmem:[%s9 + $0x48] sm:$0xff] %vm3127, %v3104
    %3138 = vst.msk [vmem:[%s9 + $0x50] sm:$0xff] %vm3127, %v3105
    %3139 = vst.msk [vmem:[%s9 + $0x58] sm:$0xff] %vm3127, %v3106
    %3140 = vst.msk [vmem:[%s9 + $0x60] sm:$0xff] %vm3127, %v3107
    %3141 = vst.msk [vmem:[%s9 + $0x68] sm:$0xff] %vm3127, %v3108
    %3142 = vst.msk [vmem:[%s9 + $0x70] sm:$0xff] %vm3127, %v3109
    %3143 = vst.msk [vmem:[%s9 + $0x78] sm:$0xff] %vm3127, %v3110
    %3144 = vst.msk [vmem:[%s9 + $0x80] sm:$0xff] %vm3127, %v3111
    %3145 = vst.msk [vmem:[%s9 + $0x88] sm:$0xff] %vm3127, %v3112
    %3146 = vst.msk [vmem:[%s9 + $0x90] sm:$0xff] %vm3127, %v3113
    %3147 = vst.msk [vmem:[%s9 + $0x98] sm:$0xff] %vm3127, %v3114
    %3148 = vst.msk [vmem:[%s9 + $0xa0] sm:$0xff] %vm3127, %v3115
    %3149 = vst.msk [vmem:[%s9 + $0xa8] sm:$0xff] %vm3127, %v3116
    %3150 = vst.msk [vmem:[%s9 + $0xb0] sm:$0xff] %vm3127, %v3117
    %3151 = vst.msk [vmem:[%s9 + $0xb8] sm:$0xff] %vm3127, %v3118
    %3152 = vst.msk [vmem:[%s9 + $0xc0] sm:$0xff] %vm3127, %v3119
    %3153 = vst.msk [vmem:[%s9 + $0xc8] sm:$0xff] %vm3127, %v3120
    %3154 = vst.msk [vmem:[%s9 + $0xd0] sm:$0xff] %vm3127, %v3121
    %3155 = vst.msk [vmem:[%s9 + $0xd8] sm:$0xff] %vm3127, %v3122
    %3156 = vst.msk [vmem:[%s9 + $0xe0] sm:$0xff] %vm3127, %v3123
    %3157 = vst.msk [vmem:[%s9 + $0xe8] sm:$0xff] %vm3127, %v3124
    %3158 = vst.msk [vmem:[%s9 + $0xf0] sm:$0xff] %vm3127, %v3125
    %3159 = vst.msk [vmem:[%s9 + $0xf8] sm:$0xff] %vm3127, %v3126
    // Predicated region
    $region38: #{tpu_custom_call.1} parent=1 // pred_check
      _
    $region39: #{tpu_custom_call.1} parent=1 // pred_check_branch
      %3161 = sbr.rel (0) target = $region41
    $region40: #{tpu_custom_call.1} parent=1 // pred_region
      %3163 = vsyncadd [#allocation4], 0
      %s3164 = sshll.u32 [#allocation5], 4
      %s3165 = int_to_ptr.vmem [resolvable:$true] %s3164
      %s3166 = sshll.u32 %s8, 4
      %s3167 = int_to_ptr.hbm [resolvable:$true] %s3166
      %3172 = dma.vmem_to_hbm [thread:$0]  %s3165, 4096, %s3167, [#allocation4], 128, 128, 8
    $region41: #{tpu_custom_call.1} parent=1 // pred_fallthru
      _
    // Predicated region
    $region42: #{tpu_custom_call.1} parent=1 // pred_check
      _
    $region43: #{tpu_custom_call.1} parent=1 // pred_check_branch
      %3174 = sbr.rel (0) target = $region45
    $region44: #{tpu_custom_call.1} parent=1 // pred_region
      _
    $region45: #{tpu_custom_call.1} parent=1 // pred_fallthru
      _
    // Predicated region
    $region46: #{tpu_custom_call.1} parent=1 // pred_check
      _
    $region47: #{tpu_custom_call.1} parent=1 // pred_check_branch
      %3176 = sbr.rel (0) target = $region49
    $region48: #{tpu_custom_call.1} parent=1 // pred_region
      %3178 = dma.done [#allocation4], 4096
    $region49: #{tpu_custom_call.1} parent=1 // pred_fallthru
      _
    // Predicated region
    $region50: #{tpu_custom_call.1} parent=1 // pred_check
      _
    $region51: #{tpu_custom_call.1} parent=1 // pred_check_branch
      %3180 = sbr.rel (0) target = $region53
    $region52: #{tpu_custom_call.1} parent=1 // pred_region
      _
    $region53: #{tpu_custom_call.1} parent=1 // pred_fallthru
      _
    %3181 = vsyncpa [#allocation3], 1
    %3182 = vsyncpa [#allocation4], 1

</llo_original>
